<compile_context>
chip_gen: v7x
topology: tpu7x:2x2x1
jax: 0.10.0
libtpu: 0.0.40
codegen_flags: <defaults>
</compile_context>

<pallas_src>
import jax
import jax.numpy as jnp
from jax import lax
from jax.experimental import pallas as pl
from jax.experimental.pallas import tpu as pltpu

IN_DIM = 1760   # 13*128 + 96
H_DIM = 128
Z_DIM = 64

_SUB_M = 256    # in-kernel row sub-tile (keeps intermediates near vreg-resident)


def _autoencoder_kernel(x_ref,
                        w1_ref, b1_ref,
                        w2_ref, b2_ref,
                        w3_ref, b3_ref,
                        w4_ref, b4_ref,
                        enc_ref, dec_ref):
    # Cast weights to bf16 once per grid step (hoisted out of the row loop).
    # bf16 operands keep the MXU single-pass; accumulation stays f32.
    w1 = w1_ref[...].astype(jnp.bfloat16)
    w2 = w2_ref[...].astype(jnp.bfloat16)
    w3 = w3_ref[...].astype(jnp.bfloat16)
    w4 = w4_ref[...].astype(jnp.bfloat16)
    b1 = b1_ref[...]
    b2 = b2_ref[...]
    b3 = b3_ref[...]
    b4 = b4_ref[...]

    def run_rows(x):
        # ----- encoder -----
        h1 = jnp.tanh(jnp.dot(x.astype(jnp.bfloat16), w1,
                              preferred_element_type=jnp.float32) + b1)   # (m, 128)
        enc = jnp.tanh(jnp.dot(h1.astype(jnp.bfloat16), w2,
                               preferred_element_type=jnp.float32) + b2)  # (m, 64)
        # ----- decoder -----
        h2 = jnp.tanh(jnp.dot(enc.astype(jnp.bfloat16), w3,
                              preferred_element_type=jnp.float32) + b3)   # (m, 128)
        dec = jnp.tanh(jnp.dot(h2.astype(jnp.bfloat16), w4,
                               preferred_element_type=jnp.float32) + b4)  # (m, 1760)
        return enc, dec

    bm = x_ref.shape[0]
    if bm > _SUB_M and bm % _SUB_M == 0:
        # Large batch tile: run the 4-layer chain over 256-row sub-tiles so
        # the f32 intermediates don't spill, and the LLO scheduler can overlap
        # sub-tile i's MXU with sub-tile i-1's tanh/stores.
        def body(s, carry):
            r = pl.multiple_of(s * _SUB_M, _SUB_M)
            enc, dec = run_rows(x_ref[pl.ds(r, _SUB_M), :])
            enc_ref[pl.ds(r, _SUB_M), :] = enc.astype(enc_ref.dtype)
            dec_ref[pl.ds(r, _SUB_M), :] = dec.astype(dec_ref.dtype)
            return carry

        lax.fori_loop(0, bm // _SUB_M, body, 0, unroll=True)
    else:
        enc, dec = run_rows(x_ref[...])
        enc_ref[...] = enc.astype(enc_ref.dtype)
        dec_ref[...] = dec.astype(dec_ref.dtype)


def _device_defaults():
    """Returns (default block_m, scoped-VMEM cap bytes, min grid steps)."""
    try:
        kind = jax.devices()[0].device_kind.lower()
    except Exception:  # pragma: no cover - defensive
        kind = ""
    if "v5" in kind or "v6" in kind:
        # 128 MiB physical VMEM, single TensorCore: big tiles amortize the
        # ~0.35 us/step overhead and push DMA toward HBM roofline.
        return 1024, 96 << 20, 1
    # v7x (64 MiB physical VMEM, 2 TensorCores) and unknown devices:
    # smaller tiles, and keep >= ~4 grid steps so both cores get work.
    return 512, 48 << 20, 4


def autoencoder2_forward(x, params, *, block_m=None, out_dtype=jnp.float32):
    """x: (B, 1760). Returns (x, encoded (B,64), decoded (B,1760)).

    block_m: batch tile per grid step (None -> per-generation default).
    out_dtype: dtype of encoded/decoded outputs (bf16 halves the dominant
               write stream on this bandwidth-bound kernel, at reduced
               precision vs the f32 reference).
    """
    B = x.shape[0]
    (w1, b1, w2, b2, w3, b3, w4, b4) = params

    default_bm, vmem_cap, min_steps = _device_defaults()
    if block_m is None:
        block_m = default_bm

    bm = min(block_m, B)
    if min_steps > 1 and B > 2 * _SUB_M:
        # Cap the tile so large batches produce >= min_steps grid steps
        # (megacore sharding on v7x); round the cap to the sub-tile size.
        cap = max(_SUB_M, ((pl.cdiv(B, min_steps) + _SUB_M - 1) // _SUB_M) * _SUB_M)
        bm = min(bm, cap)
    grid = (pl.cdiv(B, bm),)

    # Scoped-VMEM budget: double-buffered x + enc + dec streams, 2x resident
    # weights, plus headroom for intermediates; clamped per generation.
    in_item = jnp.dtype(x.dtype).itemsize
    out_item = jnp.dtype(out_dtype).itemsize
    weight_bytes = sum(int(p.size) * jnp.dtype(p.dtype).itemsize for p in params)
    stream_bytes = 2 * bm * (IN_DIM * in_item + (IN_DIM + Z_DIM) * out_item)
    vmem_limit = int(min(max(stream_bytes + 2 * weight_bytes + (12 << 20),
                             32 << 20),
                         vmem_cap))

    # Weights/biases: full-array block pinned at (0, ..., 0) -> DMA'd once and
    # resident in VMEM across all batch-grid steps.
    def pinned(arr):
        nd = arr.ndim
        return pl.BlockSpec(arr.shape, lambda i, _nd=nd: (0,) * _nd)

    enc, dec = pl.pallas_call(
        _autoencoder_kernel,
        grid=grid,
        out_shape=(
            jax.ShapeDtypeStruct((B, Z_DIM), out_dtype),
            jax.ShapeDtypeStruct((B, IN_DIM), out_dtype),
        ),
        in_specs=[
            pl.BlockSpec((bm, IN_DIM), lambda i: (i, 0)),   # x: batch-tiled
            pinned(w1), pinned(b1),
            pinned(w2), pinned(b2),
            pinned(w3), pinned(b3),
            pinned(w4), pinned(b4),
        ],
        out_specs=(
            pl.BlockSpec((bm, Z_DIM), lambda i: (i, 0)),    # encoded
            pl.BlockSpec((bm, IN_DIM), lambda i: (i, 0)),   # decoded
        ),
        compiler_params=pltpu.CompilerParams(
            dimension_semantics=("parallel",),   # batch axis -> megacore-shardable
            vmem_limit_bytes=vmem_limit,
        ),
    )(x, w1, b1, w2, b2, w3, b3, w4, b4)

    return x, enc, dec


def init_params(key):
    """Deterministic PyTorch-style init: U(-1/sqrt(fan_in), +1/sqrt(fan_in))."""
    def linear(key, fan_in, fan_out):
        kw, kb = jax.random.split(key)
        bound = 1.0 / jnp.sqrt(fan_in)
        w = jax.random.uniform(kw, (fan_in, fan_out), jnp.float32, -bound, bound)
        b = jax.random.uniform(kb, (1, fan_out), jnp.float32, -bound, bound)
        return w, b

    k1, k2, k3, k4 = jax.random.split(key, 4)
    w1, b1 = linear(k1, IN_DIM, H_DIM)   # encoder layer 1
    w2, b2 = linear(k2, H_DIM, Z_DIM)    # encoder layer 2
    w3, b3 = linear(k3, Z_DIM, H_DIM)    # decoder layer 1
    w4, b4 = linear(k4, H_DIM, IN_DIM)   # decoder layer 2
    return (w1, b1, w2, b2, w3, b3, w4, b4)


def _reference(x, params, mm_dtype):
    """Pure-JAX reference; mm_dtype lets us match the in-kernel bf16 operands."""
    w1, b1, w2, b2, w3, b3, w4, b4 = params

    def lin(h, w, b):
        return jnp.tanh(jnp.dot(h.astype(mm_dtype), w.astype(mm_dtype),
                                preferred_element_type=jnp.float32) + b)

    h1 = lin(x, w1, b1)
    enc = lin(h1, w2, b2)
    h2 = lin(enc, w3, b3)
    dec = lin(h2, w4, b4)
    return enc, dec


if __name__ == "__main__":
    key = jax.random.PRNGKey(0)
    kx, kp = jax.random.split(key)

    # Small demo batch that still exercises the batch grid (2 steps of 128).
    B = 256
    x = jax.random.normal(kx, (B, IN_DIM), dtype=jnp.float32)
    params = init_params(kp)

    x_out, encoded, decoded = autoencoder2_forward(x, params, block_m=128)
    jax.block_until_ready((x_out, encoded, decoded))

    # Sanity checks: tight vs a reference using the same bf16-operand /
    # f32-accumulation numerics, loose vs the pure-f32 reference.
    enc_bf, dec_bf = _reference(x, params, jnp.bfloat16)
    enc_f32, dec_f32 = _reference(x, params, jnp.float32)

    assert x_out.shape == (B, IN_DIM)
    assert encoded.shape == (B, Z_DIM) and decoded.shape == (B, IN_DIM)
    assert jnp.allclose(encoded, enc_bf, atol=5e-3), "encoder mismatch (bf16 ref)"
    assert jnp.allclose(decoded, dec_bf, atol=5e-3), "decoder mismatch (bf16 ref)"
    assert jnp.allclose(encoded, enc_f32, atol=5e-2), "encoder drift vs f32 ref"
    assert jnp.allclose(decoded, dec_f32, atol=5e-2), "decoder drift vs f32 ref"

    print("KERNEL_OK")
</pallas_src>

<mosaic_0001>
module attributes {stable_mosaic.version = 11 : i64} {
  func.func @_autoencoder_kernel(%arg0: i32, %arg1: memref<128x1760xf32, #tpu.memory_space<vmem>>, %arg2: memref<1760x128xf32, #tpu.memory_space<vmem>>, %arg3: memref<1x128xf32, #tpu.memory_space<vmem>>, %arg4: memref<128x64xf32, #tpu.memory_space<vmem>>, %arg5: memref<1x64xf32, #tpu.memory_space<vmem>>, %arg6: memref<64x128xf32, #tpu.memory_space<vmem>>, %arg7: memref<1x128xf32, #tpu.memory_space<vmem>>, %arg8: memref<128x1760xf32, #tpu.memory_space<vmem>>, %arg9: memref<1x1760xf32, #tpu.memory_space<vmem>>, %arg10: memref<128x64xf32, #tpu.memory_space<vmem>>, %arg11: memref<128x1760xf32, #tpu.memory_space<vmem>>) attributes {dimension_semantics = [#tpu.dimension_semantics<parallel>], iteration_bounds = array<i64: 2>, scalar_prefetch = 0 : i64, scratch_operands = 0 : i64, tpu.core_type = #tpu.core_type<tc>, window_params = [{transform_indices = @transform_0, window_bounds = array<i64: 128, 1760>}, {pipeline_mode = #tpu.pipeline_mode<synchronous>, transform_indices = @transform_1, window_bounds = array<i64: 1760, 128>}, {pipeline_mode = #tpu.pipeline_mode<synchronous>, transform_indices = @transform_2, window_bounds = array<i64: 1, 128>}, {pipeline_mode = #tpu.pipeline_mode<synchronous>, transform_indices = @transform_3, window_bounds = array<i64: 128, 64>}, {pipeline_mode = #tpu.pipeline_mode<synchronous>, transform_indices = @transform_4, window_bounds = array<i64: 1, 64>}, {pipeline_mode = #tpu.pipeline_mode<synchronous>, transform_indices = @transform_5, window_bounds = array<i64: 64, 128>}, {pipeline_mode = #tpu.pipeline_mode<synchronous>, transform_indices = @transform_6, window_bounds = array<i64: 1, 128>}, {pipeline_mode = #tpu.pipeline_mode<synchronous>, transform_indices = @transform_7, window_bounds = array<i64: 128, 1760>}, {pipeline_mode = #tpu.pipeline_mode<synchronous>, transform_indices = @transform_8, window_bounds = array<i64: 1, 1760>}, {transform_indices = @transform_9, window_bounds = array<i64: 128, 64>}, {transform_indices = @transform_10, window_bounds = array<i64: 128, 1760>}]} {
    %c0 = arith.constant 0 : index
    %c0_0 = arith.constant 0 : index
    %0 = vector.load %arg2[%c0, %c0_0] : memref<1760x128xf32, #tpu.memory_space<vmem>>, vector<1760x128xf32>
    %1 = arith.truncf %0 : vector<1760x128xf32> to vector<1760x128xbf16>
    %c0_1 = arith.constant 0 : index
    %c0_2 = arith.constant 0 : index
    %2 = vector.load %arg4[%c0_1, %c0_2] : memref<128x64xf32, #tpu.memory_space<vmem>>, vector<128x64xf32>
    %3 = arith.truncf %2 : vector<128x64xf32> to vector<128x64xbf16>
    %c0_3 = arith.constant 0 : index
    %c0_4 = arith.constant 0 : index
    %4 = vector.load %arg6[%c0_3, %c0_4] : memref<64x128xf32, #tpu.memory_space<vmem>>, vector<64x128xf32>
    %5 = arith.truncf %4 : vector<64x128xf32> to vector<64x128xbf16>
    %c0_5 = arith.constant 0 : index
    %c0_6 = arith.constant 0 : index
    %6 = vector.load %arg8[%c0_5, %c0_6] : memref<128x1760xf32, #tpu.memory_space<vmem>>, vector<128x1760xf32>
    %7 = arith.truncf %6 : vector<128x1760xf32> to vector<128x1760xbf16>
    %c0_7 = arith.constant 0 : index
    %c0_8 = arith.constant 0 : index
    %8 = vector.load %arg3[%c0_7, %c0_8] : memref<1x128xf32, #tpu.memory_space<vmem>>, vector<1x128xf32>
    %c0_9 = arith.constant 0 : index
    %c0_10 = arith.constant 0 : index
    %9 = vector.load %arg5[%c0_9, %c0_10] : memref<1x64xf32, #tpu.memory_space<vmem>>, vector<1x64xf32>
    %c0_11 = arith.constant 0 : index
    %c0_12 = arith.constant 0 : index
    %10 = vector.load %arg7[%c0_11, %c0_12] : memref<1x128xf32, #tpu.memory_space<vmem>>, vector<1x128xf32>
    %c0_13 = arith.constant 0 : index
    %c0_14 = arith.constant 0 : index
    %11 = vector.load %arg9[%c0_13, %c0_14] : memref<1x1760xf32, #tpu.memory_space<vmem>>, vector<1x1760xf32>
    %c0_15 = arith.constant 0 : index
    %c0_16 = arith.constant 0 : index
    %12 = vector.load %arg1[%c0_15, %c0_16] : memref<128x1760xf32, #tpu.memory_space<vmem>>, vector<128x1760xf32>
    %13 = arith.truncf %12 : vector<128x1760xf32> to vector<128x1760xbf16>
    %cst = arith.constant dense<0.000000e+00> : vector<128x128xf32>
    %14 = tpu.matmul %13, %1, %cst {dimension_numbers = #tpu.dot_dimension_numbers<[1], [0], [0], [1], [0, 0, 1, 1], [], []>} : vector<128x1760xbf16>, vector<1760x128xbf16>, vector<128x128xf32> -> vector<128x128xf32>
    %15 = vector.broadcast %8 : vector<1x128xf32> to vector<128x128xf32>
    %16 = arith.addf %14, %15 : vector<128x128xf32>
    %17 = math.tanh %16 : vector<128x128xf32>
    %18 = arith.truncf %17 : vector<128x128xf32> to vector<128x128xbf16>
    %cst_17 = arith.constant dense<0.000000e+00> : vector<128x64xf32>
    %19 = tpu.matmul %18, %3, %cst_17 {dimension_numbers = #tpu.dot_dimension_numbers<[1], [0], [0], [1], [0, 0, 1, 1], [], []>} : vector<128x128xbf16>, vector<128x64xbf16>, vector<128x64xf32> -> vector<128x64xf32>
    %20 = vector.broadcast %9 : vector<1x64xf32> to vector<128x64xf32>
    %21 = arith.addf %19, %20 : vector<128x64xf32>
    %22 = math.tanh %21 : vector<128x64xf32>
    %23 = arith.truncf %22 : vector<128x64xf32> to vector<128x64xbf16>
    %cst_18 = arith.constant dense<0.000000e+00> : vector<128x128xf32>
    %24 = tpu.matmul %23, %5, %cst_18 {dimension_numbers = #tpu.dot_dimension_numbers<[1], [0], [0], [1], [0, 0, 1, 1], [], []>} : vector<128x64xbf16>, vector<64x128xbf16>, vector<128x128xf32> -> vector<128x128xf32>
    %25 = vector.broadcast %10 : vector<1x128xf32> to vector<128x128xf32>
    %26 = arith.addf %24, %25 : vector<128x128xf32>
    %27 = math.tanh %26 : vector<128x128xf32>
    %28 = arith.truncf %27 : vector<128x128xf32> to vector<128x128xbf16>
    %cst_19 = arith.constant dense<0.000000e+00> : vector<128x1760xf32>
    %29 = tpu.matmul %28, %7, %cst_19 {dimension_numbers = #tpu.dot_dimension_numbers<[1], [0], [0], [1], [0, 0, 1, 1], [], []>} : vector<128x128xbf16>, vector<128x1760xbf16>, vector<128x1760xf32> -> vector<128x1760xf32>
    %30 = vector.broadcast %11 : vector<1x1760xf32> to vector<128x1760xf32>
    %31 = arith.addf %29, %30 : vector<128x1760xf32>
    %32 = math.tanh %31 : vector<128x1760xf32>
    %c0_20 = arith.constant 0 : index
    %c0_21 = arith.constant 0 : index
    %33 = vector.load %arg10[%c0_20, %c0_21] : memref<128x64xf32, #tpu.memory_space<vmem>>, vector<128x64xf32>
    tpu.vector_store %arg10[%c0_20, %c0_21], %22 {strides = array<i32>} : memref<128x64xf32, #tpu.memory_space<vmem>>, vector<128x64xf32>,
    %c0_22 = arith.constant 0 : index
    %c0_23 = arith.constant 0 : index
    %34 = vector.load %arg11[%c0_22, %c0_23] : memref<128x1760xf32, #tpu.memory_space<vmem>>, vector<128x1760xf32>
    tpu.vector_store %arg11[%c0_22, %c0_23], %32 {strides = array<i32>} : memref<128x1760xf32, #tpu.memory_space<vmem>>, vector<128x1760xf32>,
    return
  }
  func.func @transform_0(%arg0: i32) -> (i32, i32) {
    %c0_i32 = arith.constant 0 : i32
    %c0_i32_0 = arith.constant 0 : i32
    return %arg0, %c0_i32 : i32, i32
  }
  func.func @transform_1(%arg0: i32) -> (i32, i32) {
    %c0_i32 = arith.constant 0 : i32
    %c0_i32_0 = arith.constant 0 : i32
    %c0_i32_1 = arith.constant 0 : i32
    return %c0_i32, %c0_i32_0 : i32, i32
  }
  func.func @transform_2(%arg0: i32) -> (i32, i32) {
    %c0_i32 = arith.constant 0 : i32
    %c0_i32_0 = arith.constant 0 : i32
    %c0_i32_1 = arith.constant 0 : i32
    return %c0_i32, %c0_i32_0 : i32, i32
  }
  func.func @transform_3(%arg0: i32) -> (i32, i32) {
    %c0_i32 = arith.constant 0 : i32
    %c0_i32_0 = arith.constant 0 : i32
    %c0_i32_1 = arith.constant 0 : i32
    return %c0_i32, %c0_i32_0 : i32, i32
  }
  func.func @transform_4(%arg0: i32) -> (i32, i32) {
    %c0_i32 = arith.constant 0 : i32
    %c0_i32_0 = arith.constant 0 : i32
    %c0_i32_1 = arith.constant 0 : i32
    return %c0_i32, %c0_i32_0 : i32, i32
  }
  func.func @transform_5(%arg0: i32) -> (i32, i32) {
    %c0_i32 = arith.constant 0 : i32
    %c0_i32_0 = arith.constant 0 : i32
    %c0_i32_1 = arith.constant 0 : i32
    return %c0_i32, %c0_i32_0 : i32, i32
  }
  func.func @transform_6(%arg0: i32) -> (i32, i32) {
    %c0_i32 = arith.constant 0 : i32
    %c0_i32_0 = arith.constant 0 : i32
    %c0_i32_1 = arith.constant 0 : i32
    return %c0_i32, %c0_i32_0 : i32, i32
  }
  func.func @transform_7(%arg0: i32) -> (i32, i32) {
    %c0_i32 = arith.constant 0 : i32
    %c0_i32_0 = arith.constant 0 : i32
    %c0_i32_1 = arith.constant 0 : i32
    return %c0_i32, %c0_i32_0 : i32, i32
  }
  func.func @transform_8(%arg0: i32) -> (i32, i32) {
    %c0_i32 = arith.constant 0 : i32
    %c0_i32_0 = arith.constant 0 : i32
    %c0_i32_1 = arith.constant 0 : i32
    return %c0_i32, %c0_i32_0 : i32, i32
  }
  func.func @transform_9(%arg0: i32) -> (i32, i32) {
    %c0_i32 = arith.constant 0 : i32
    %c0_i32_0 = arith.constant 0 : i32
    return %arg0, %c0_i32 : i32, i32
  }
  func.func @transform_10(%arg0: i32) -> (i32, i32) {
    %c0_i32 = arith.constant 0 : i32
    %c0_i32_0 = arith.constant 0 : i32
    return %arg0, %c0_i32 : i32, i32
  }
}

</mosaic_0001>

<llo_original>
// kernel: tpu_custom_call.1
$region0: #{tpu_custom_call.1}
  #allocation0 [shape = 'u32[]', space=smem, size = 0x4, offset = 0x4, fixed_abs, tag = 'smem constant byte address 0x4 - core index']
  #allocation1 [shape = 'u32[144,128]{1,0:T(1,128)}', space=vmem, size = 0x12000, scoped, tag = 'internal scratch']
  %s0 = inlined_call_operand.vmem [shape: f32[256,1760], index: 0, kind: input, shape index: {}]
  %s1 = inlined_call_operand.vmem [shape: f32[1760,128], index: 1, kind: input, shape index: {}]
  %s2 = inlined_call_operand.vmem [shape: f32[1,128], index: 2, kind: input, shape index: {}]
  %s3 = inlined_call_operand.vmem [shape: f32[128,64], index: 3, kind: input, shape index: {}]
  %s4 = inlined_call_operand.vmem [shape: f32[1,64], index: 4, kind: input, shape index: {}]
  %s5 = inlined_call_operand.vmem [shape: f32[64,128], index: 5, kind: input, shape index: {}]
  %s6 = inlined_call_operand.vmem [shape: f32[1,128], index: 6, kind: input, shape index: {}]
  %s7 = inlined_call_operand.vmem [shape: f32[128,1760], index: 7, kind: input, shape index: {}]
  %s8 = inlined_call_operand.vmem [shape: f32[1,1760], index: 8, kind: input, shape index: {}]
  %s9 = inlined_call_operand.vmem [shape: f32[256,64], index: 9, kind: output, shape index: {0}]
  %s10 = inlined_call_operand.vmem [shape: f32[256,1760], index: 10, kind: output, shape index: {1}]
  %11 = xla_tuple %s9, %s10
  %s12 = sld [smem:[#allocation0]]
  $region77: #{tpu_custom_call.1} parent=0
    _
  %s14 = ssub.s32 1, %s12
  %s15 = scalar_select 0, %s14, %s12
  loop: start=0, step=1, limit=4
  $region2: #{tpu_custom_call.1} parent=0 // loop_pre_header
    _
  $region3: #{tpu_custom_call.1} parent=0 // loop_header
    %s17 = sphi 0, %s21
    %p18 = scmp.ge.s32.totalorder %s17, 4
    %s27 = sphi 0, %s29
    %s30 = sphi 0, %s27
    %s31 = sphi 0, %s30
    %s47 = sphi 0, %s31
    %s51 = sphi 0, %s51
    %s53 = sphi 0, %s51
    %s54 = sphi 0, %s53
    %s68 = sphi 0, %s54
    %s72 = sphi 0, %s72
    %s74 = sphi 0, %s72
    %s75 = sphi 0, %s74
    %s89 = sphi 0, %s75
    %s93 = sphi 0, %s93
    %s95 = sphi 0, %s93
    %s96 = sphi 0, %s95
    %s110 = sphi 0, %s96
    %s114 = sphi 0, %s114
    %s116 = sphi 0, %s114
    %s117 = sphi 0, %s116
    %s131 = sphi 0, %s117
    %s135 = sphi 0, %s135
    %s137 = sphi 0, %s135
    %s138 = sphi 0, %s137
    %s152 = sphi 0, %s138
    %s156 = sphi 0, %s156
    %s158 = sphi 0, %s156
    %s159 = sphi 0, %s158
    %s173 = sphi 0, %s159
    %s177 = sphi 0, %s177
    %s179 = sphi 0, %s177
    %s180 = sphi 0, %s179
    %s194 = sphi 0, %s180
    %s198 = sphi 0, %s198
    %s200 = sphi 0, %s198
    %s201 = sphi 0, %s200
    %s215 = sphi 0, %s201
    %s221 = sphi 0, %s223
    %s224 = sphi 0, %s221
    %s225 = sphi 0, %s224
    %s241 = sphi 0, %s225
    %s247 = sphi 0, %s249
    %s250 = sphi 0, %s247
    %s251 = sphi 0, %s250
    %s267 = sphi 0, %s251
  $region4: #{tpu_custom_call.1} parent=0 // loop_header_branch
    %20 = sbr.rel (%p18) target = $region8
  $region5: #{tpu_custom_call.1} parent=0 // loop_body
    %s22 = ssub.s32 %s17, 1
    %s23 = ssub.s32 %s17, 2
    %s24 = sadd.s32 %s17, 1
    %s25 = ssub.s32 %s17, %s24
    %p26 = scmp.eq.s32.totalorder %s25, 0
    %s28 = sadd.s32 %s27, 1
    %s29 = scalar_select %p26, %s27, %s28
    %p32 = pneg %p26
    %p33 = scmp.eq.s32.totalorder %s17, 1
    %p34 = por %p32, %p33
    %p35 = scmp.ne.s32.totalorder %s27, %s30
    %p36 = scmp.eq.s32.totalorder %s17, 0
    %p37 = por %p35, %p36
    %p38 = scmp.ne.s32.totalorder %s27, %s30
    %p39 = scmp.eq.s32.totalorder %s22, 1
    %p40 = por %p38, %p39
    %p41 = scmp.ne.s32.totalorder %s30, %s31
    %p42 = scmp.eq.s32.totalorder %s22, 0
    %p43 = por %p41, %p42
    %p44 = scmp.ne.s32.totalorder %s30, %s31
    %p45 = scmp.eq.s32.totalorder %s23, 1
    %p46 = por %p44, %p45
    %p48 = scmp.ne.s32.totalorder %s31, %s47
    %p49 = scmp.eq.s32.totalorder %s23, 0
    %p50 = por %p48, %p49
    %s52 = sadd.s32 %s51, 1
    %p55 = scmp.eq.s32.totalorder %s17, 1
    %p56 = scmp.ne.s32.totalorder %s51, %s53
    %p57 = scmp.eq.s32.totalorder %s17, 0
    %p58 = por %p56, %p57
    %p59 = scmp.ne.s32.totalorder %s51, %s53
    %p60 = scmp.eq.s32.totalorder %s22, 1
    %p61 = por %p59, %p60
    %p62 = scmp.ne.s32.totalorder %s53, %s54
    %p63 = scmp.eq.s32.totalorder %s22, 0
    %p64 = por %p62, %p63
    %p65 = scmp.ne.s32.totalorder %s53, %s54
    %p66 = scmp.eq.s32.totalorder %s23, 1
    %p67 = por %p65, %p66
    %p69 = scmp.ne.s32.totalorder %s54, %s68
    %p70 = scmp.eq.s32.totalorder %s23, 0
    %p71 = por %p69, %p70
    %s73 = sadd.s32 %s72, 1
    %p76 = scmp.eq.s32.totalorder %s17, 1
    %p77 = scmp.ne.s32.totalorder %s72, %s74
    %p78 = scmp.eq.s32.totalorder %s17, 0
    %p79 = por %p77, %p78
    %p80 = scmp.ne.s32.totalorder %s72, %s74
    %p81 = scmp.eq.s32.totalorder %s22, 1
    %p82 = por %p80, %p81
    %p83 = scmp.ne.s32.totalorder %s74, %s75
    %p84 = scmp.eq.s32.totalorder %s22, 0
    %p85 = por %p83, %p84
    %p86 = scmp.ne.s32.totalorder %s74, %s75
    %p87 = scmp.eq.s32.totalorder %s23, 1
    %p88 = por %p86, %p87
    %p90 = scmp.ne.s32.totalorder %s75, %s89
    %p91 = scmp.eq.s32.totalorder %s23, 0
    %p92 = por %p90, %p91
    %s94 = sadd.s32 %s93, 1
    %p97 = scmp.eq.s32.totalorder %s17, 1
    %p98 = scmp.ne.s32.totalorder %s93, %s95
    %p99 = scmp.eq.s32.totalorder %s17, 0
    %p100 = por %p98, %p99
    %p101 = scmp.ne.s32.totalorder %s93, %s95
    %p102 = scmp.eq.s32.totalorder %s22, 1
    %p103 = por %p101, %p102
    %p104 = scmp.ne.s32.totalorder %s95, %s96
    %p105 = scmp.eq.s32.totalorder %s22, 0
    %p106 = por %p104, %p105
    %p107 = scmp.ne.s32.totalorder %s95, %s96
    %p108 = scmp.eq.s32.totalorder %s23, 1
    %p109 = por %p107, %p108
    %p111 = scmp.ne.s32.totalorder %s96, %s110
    %p112 = scmp.eq.s32.totalorder %s23, 0
    %p113 = por %p111, %p112
    %s115 = sadd.s32 %s114, 1
    %p118 = scmp.eq.s32.totalorder %s17, 1
    %p119 = scmp.ne.s32.totalorder %s114, %s116
    %p120 = scmp.eq.s32.totalorder %s17, 0
    %p121 = por %p119, %p120
    %p122 = scmp.ne.s32.totalorder %s114, %s116
    %p123 = scmp.eq.s32.totalorder %s22, 1
    %p124 = por %p122, %p123
    %p125 = scmp.ne.s32.totalorder %s116, %s117
    %p126 = scmp.eq.s32.totalorder %s22, 0
    %p127 = por %p125, %p126
    %p128 = scmp.ne.s32.totalorder %s116, %s117
    %p129 = scmp.eq.s32.totalorder %s23, 1
    %p130 = por %p128, %p129
    %p132 = scmp.ne.s32.totalorder %s117, %s131
    %p133 = scmp.eq.s32.totalorder %s23, 0
    %p134 = por %p132, %p133
    %s136 = sadd.s32 %s135, 1
    %p139 = scmp.eq.s32.totalorder %s17, 1
    %p140 = scmp.ne.s32.totalorder %s135, %s137
    %p141 = scmp.eq.s32.totalorder %s17, 0
    %p142 = por %p140, %p141
    %p143 = scmp.ne.s32.totalorder %s135, %s137
    %p144 = scmp.eq.s32.totalorder %s22, 1
    %p145 = por %p143, %p144
    %p146 = scmp.ne.s32.totalorder %s137, %s138
    %p147 = scmp.eq.s32.totalorder %s22, 0
    %p148 = por %p146, %p147
    %p149 = scmp.ne.s32.totalorder %s137, %s138
    %p150 = scmp.eq.s32.totalorder %s23, 1
    %p151 = por %p149, %p150
    %p153 = scmp.ne.s32.totalorder %s138, %s152
    %p154 = scmp.eq.s32.totalorder %s23, 0
    %p155 = por %p153, %p154
    %s157 = sadd.s32 %s156, 1
    %p160 = scmp.eq.s32.totalorder %s17, 1
    %p161 = scmp.ne.s32.totalorder %s156, %s158
    %p162 = scmp.eq.s32.totalorder %s17, 0
    %p163 = por %p161, %p162
    %p164 = scmp.ne.s32.totalorder %s156, %s158
    %p165 = scmp.eq.s32.totalorder %s22, 1
    %p166 = por %p164, %p165
    %p167 = scmp.ne.s32.totalorder %s158, %s159
    %p168 = scmp.eq.s32.totalorder %s22, 0
    %p169 = por %p167, %p168
    %p170 = scmp.ne.s32.totalorder %s158, %s159
    %p171 = scmp.eq.s32.totalorder %s23, 1
    %p172 = por %p170, %p171
    %p174 = scmp.ne.s32.totalorder %s159, %s173
    %p175 = scmp.eq.s32.totalorder %s23, 0
    %p176 = por %p174, %p175
    %s178 = sadd.s32 %s177, 1
    %p181 = scmp.eq.s32.totalorder %s17, 1
    %p182 = scmp.ne.s32.totalorder %s177, %s179
    %p183 = scmp.eq.s32.totalorder %s17, 0
    %p184 = por %p182, %p183
    %p185 = scmp.ne.s32.totalorder %s177, %s179
    %p186 = scmp.eq.s32.totalorder %s22, 1
    %p187 = por %p185, %p186
    %p188 = scmp.ne.s32.totalorder %s179, %s180
    %p189 = scmp.eq.s32.totalorder %s22, 0
    %p190 = por %p188, %p189
    %p191 = scmp.ne.s32.totalorder %s179, %s180
    %p192 = scmp.eq.s32.totalorder %s23, 1
    %p193 = por %p191, %p192
    %p195 = scmp.ne.s32.totalorder %s180, %s194
    %p196 = scmp.eq.s32.totalorder %s23, 0
    %p197 = por %p195, %p196
    %s199 = sadd.s32 %s198, 1
    %p202 = scmp.eq.s32.totalorder %s17, 1
    %p203 = scmp.ne.s32.totalorder %s198, %s200
    %p204 = scmp.eq.s32.totalorder %s17, 0
    %p205 = por %p203, %p204
    %p206 = scmp.ne.s32.totalorder %s198, %s200
    %p207 = scmp.eq.s32.totalorder %s22, 1
    %p208 = por %p206, %p207
    %p209 = scmp.ne.s32.totalorder %s200, %s201
    %p210 = scmp.eq.s32.totalorder %s22, 0
    %p211 = por %p209, %p210
    %p212 = scmp.ne.s32.totalorder %s200, %s201
    %p213 = scmp.eq.s32.totalorder %s23, 1
    %p214 = por %p212, %p213
    %p216 = scmp.ne.s32.totalorder %s201, %s215
    %p217 = scmp.eq.s32.totalorder %s23, 0
    %p218 = por %p216, %p217
    %s219 = ssub.s32 %s17, %s24
    %p220 = scmp.eq.s32.totalorder %s219, 0
    %s222 = sadd.s32 %s221, 1
    %s223 = scalar_select %p220, %s221, %s222
    %p226 = pneg %p220
    %p227 = scmp.eq.s32.totalorder %s17, 1
    %p228 = por %p226, %p227
    %p229 = scmp.ne.s32.totalorder %s221, %s224
    %p230 = scmp.eq.s32.totalorder %s17, 0
    %p231 = por %p229, %p230
    %p232 = scmp.ne.s32.totalorder %s221, %s224
    %p233 = scmp.eq.s32.totalorder %s22, 1
    %p234 = por %p232, %p233
    %p235 = scmp.ne.s32.totalorder %s224, %s225
    %p236 = scmp.eq.s32.totalorder %s22, 0
    %p237 = por %p235, %p236
    %p238 = scmp.ne.s32.totalorder %s224, %s225
    %p239 = scmp.eq.s32.totalorder %s23, 1
    %p240 = por %p238, %p239
    %p242 = scmp.ne.s32.totalorder %s225, %s241
    %p243 = scmp.eq.s32.totalorder %s23, 0
    %p244 = por %p242, %p243
    %s245 = ssub.s32 %s17, %s24
    %p246 = scmp.eq.s32.totalorder %s245, 0
    %s248 = sadd.s32 %s247, 1
    %s249 = scalar_select %p246, %s247, %s248
    %p252 = pneg %p246
    %p253 = scmp.eq.s32.totalorder %s17, 1
    %p254 = por %p252, %p253
    %p255 = scmp.ne.s32.totalorder %s247, %s250
    %p256 = scmp.eq.s32.totalorder %s17, 0
    %p257 = por %p255, %p256
    %p258 = scmp.ne.s32.totalorder %s247, %s250
    %p259 = scmp.eq.s32.totalorder %s22, 1
    %p260 = por %p258, %p259
    %p261 = scmp.ne.s32.totalorder %s250, %s251
    %p262 = scmp.eq.s32.totalorder %s22, 0
    %p263 = por %p261, %p262
    %p264 = scmp.ne.s32.totalorder %s250, %s251
    %p265 = scmp.eq.s32.totalorder %s23, 1
    %p266 = por %p264, %p265
    %p268 = scmp.ne.s32.totalorder %s251, %s267
    %p269 = scmp.eq.s32.totalorder %s23, 0
    %p270 = por %p268, %p269
    %p271 = scmp.le.s32.totalorder 1, %s17
    %p272 = scmp.lt.s32.totalorder %s17, 3
    %p273 = pnand %p271, %p272
    %p274 = pneg %p273
    // Predicated region
    $region9: #{tpu_custom_call.1} parent=5 // pred_check
      _
    $region10: #{tpu_custom_call.1} parent=5 // pred_check_branch
      %276 = sbr.rel (%p273) target = $region12
    $region11: #{tpu_custom_call.1} parent=5 // pred_region
      %s277 = ssub.s32 %s17, 1
      // Predicated region
      $region13: #{tpu_custom_call.1} parent=11 // pred_check
        %p278 = pneg %p64
      $region14: #{tpu_custom_call.1} parent=11 // pred_check_branch
        %280 = sbr.rel (%p278) target = $region16
      $region15: #{tpu_custom_call.1} parent=11 // pred_region
        _
      $region16: #{tpu_custom_call.1} parent=11 // pred_fallthru
        _
      // Predicated region
      $region17: #{tpu_custom_call.1} parent=11 // pred_check
        %p281 = pneg %p85
      $region18: #{tpu_custom_call.1} parent=11 // pred_check_branch
        %283 = sbr.rel (%p281) target = $region20
      $region19: #{tpu_custom_call.1} parent=11 // pred_region
        _
      $region20: #{tpu_custom_call.1} parent=11 // pred_fallthru
        _
      // Predicated region
      $region21: #{tpu_custom_call.1} parent=11 // pred_check
        %p284 = pneg %p106
      $region22: #{tpu_custom_call.1} parent=11 // pred_check_branch
        %286 = sbr.rel (%p284) target = $region24
      $region23: #{tpu_custom_call.1} parent=11 // pred_region
        _
      $region24: #{tpu_custom_call.1} parent=11 // pred_fallthru
        _
      // Predicated region
      $region25: #{tpu_custom_call.1} parent=11 // pred_check
        %p287 = pneg %p127
      $region26: #{tpu_custom_call.1} parent=11 // pred_check_branch
        %289 = sbr.rel (%p287) target = $region28
      $region27: #{tpu_custom_call.1} parent=11 // pred_region
        _
      $region28: #{tpu_custom_call.1} parent=11 // pred_fallthru
        _
      // Predicated region
      $region29: #{tpu_custom_call.1} parent=11 // pred_check
        %p290 = pneg %p148
      $region30: #{tpu_custom_call.1} parent=11 // pred_check_branch
        %292 = sbr.rel (%p290) target = $region32
      $region31: #{tpu_custom_call.1} parent=11 // pred_region
        _
      $region32: #{tpu_custom_call.1} parent=11 // pred_fallthru
        _
      // Predicated region
      $region33: #{tpu_custom_call.1} parent=11 // pred_check
        %p293 = pneg %p169
      $region34: #{tpu_custom_call.1} parent=11 // pred_check_branch
        %295 = sbr.rel (%p293) target = $region36
      $region35: #{tpu_custom_call.1} parent=11 // pred_region
        _
      $region36: #{tpu_custom_call.1} parent=11 // pred_fallthru
        _
      // Predicated region
      $region37: #{tpu_custom_call.1} parent=11 // pred_check
        %p296 = pneg %p190
      $region38: #{tpu_custom_call.1} parent=11 // pred_check_branch
        %298 = sbr.rel (%p296) target = $region40
      $region39: #{tpu_custom_call.1} parent=11 // pred_region
        _
      $region40: #{tpu_custom_call.1} parent=11 // pred_fallthru
        _
      // Predicated region
      $region41: #{tpu_custom_call.1} parent=11 // pred_check
        %p299 = pneg %p211
      $region42: #{tpu_custom_call.1} parent=11 // pred_check_branch
        %301 = sbr.rel (%p299) target = $region44
      $region43: #{tpu_custom_call.1} parent=11 // pred_region
        _
      $region44: #{tpu_custom_call.1} parent=11 // pred_fallthru
        _
    $region12: #{tpu_custom_call.1} parent=5 // pred_fallthru
      _
    %p302 = scmp.lt.s32.totalorder %s17, 2
    // Predicated region
    $region45: #{tpu_custom_call.1} parent=5 // pred_check
      %p303 = pneg %p302
    $region46: #{tpu_custom_call.1} parent=5 // pred_check_branch
      %305 = sbr.rel (%p303) target = $region48
    $region47: #{tpu_custom_call.1} parent=5 // pred_region
      // Predicated region
      $region49: #{tpu_custom_call.1} parent=47 // pred_check
        %p306 = pneg %p37
      $region50: #{tpu_custom_call.1} parent=47 // pred_check_branch
        %308 = sbr.rel (%p306) target = $region52
      $region51: #{tpu_custom_call.1} parent=47 // pred_region
        %s309 = smul.u32 16, %s17
        %p310 = scmp.lt.s32.totalorder %s309, 31
        %s311 = scalar_select %p310, %s309, 31
        %s312 = smul.addr %s311, 14
        %s313 = smul.addr %s312, 8
        %s314 = scalar_lea.vmem %s0, %s313
        %s315 = smul.u32 16, %s17
      $region52: #{tpu_custom_call.1} parent=47 // pred_fallthru
        _
    $region48: #{tpu_custom_call.1} parent=5 // pred_fallthru
      _
    %p316 = scmp.le.s32.totalorder 1, %s17
    %p317 = scmp.lt.s32.totalorder %s17, 3
    %p318 = pnand %p316, %p317
    %p319 = pneg %p318
    // Predicated region
    $region53: #{tpu_custom_call.1} parent=5 // pred_check
      _
    $region54: #{tpu_custom_call.1} parent=5 // pred_check_branch
      %321 = sbr.rel (%p318) target = $region56
    $region55: #{tpu_custom_call.1} parent=5 // pred_region
      %s322 = ssub.s32 %s17, 1
      %s323 = smul.u32 16, %s22
      %p324 = scmp.lt.s32.totalorder %s323, 31
      %s325 = scalar_select %p324, %s323, 31
      %s326 = smul.addr %s325, 14
      %s327 = smul.addr %s326, 8
      %s328 = scalar_lea.vmem %s0, %s327
      %p329 = pneg %p43
      %p330 = pneg %p40
      %p331 = pneg %p64
      %p332 = pneg %p61
      %p333 = pneg %p85
      %p334 = pneg %p82
      %p335 = pneg %p106
      %p336 = pneg %p103
      %p337 = pneg %p127
      %p338 = pneg %p124
      %p339 = pneg %p148
      %p340 = pneg %p145
      %p341 = pneg %p169
      %p342 = pneg %p166
      %p343 = pneg %p190
      %p344 = pneg %p187
      %p345 = pneg %p211
      %p346 = pneg %p208
      %p347 = pneg %p237
      %p348 = pneg %p234
      %s349 = smul.u32 16, %s22
      %p350 = scmp.lt.s32.totalorder %s349, 31
      %s351 = scalar_select %p350, %s349, 31
      %s352 = smul.addr %s351, 8
      %s353 = scalar_lea.vmem %s9, %s352
      %p354 = pneg %p263
      %p355 = pneg %p260
      %s356 = smul.u32 16, %s22
      %p357 = scmp.lt.s32.totalorder %s356, 31
      %s358 = scalar_select %p357, %s356, 31
      %s359 = smul.addr %s358, 14
      %s360 = smul.addr %s359, 8
      %s361 = scalar_lea.vmem %s10, %s360
      %s362 = smul.u32 16, %s22
      %p363 = scmp.lt.s32.totalorder %s362, 31
      %s364 = scalar_select %p363, %s362, 31
      %s365 = smul.addr %s364, 14
      %s366 = smul.addr %s365, 8
      %s367 = scalar_lea.vmem %s0, %s366
      %s368 = smul.u32 16, %s22
      %s369 = smul.u32 16, %s22
      %p370 = scmp.lt.s32.totalorder %s369, 31
      %s371 = scalar_select %p370, %s369, 31
      %s372 = smul.addr %s371, 8
      %s373 = scalar_lea.vmem %s9, %s372
      %s374 = smul.u32 16, %s22
      %s375 = smul.u32 16, %s22
      %p376 = scmp.lt.s32.totalorder %s375, 31
      %s377 = scalar_select %p376, %s375, 31
      %s378 = smul.addr %s377, 14
      %s379 = smul.addr %s378, 8
      %s380 = scalar_lea.vmem %s10, %s379
      %s381 = smul.u32 16, %s22
      %v383 = vld [vmem:[%s1] sm:$0xff]
      %v384 = vld [vmem:[%s1 + $0x8] sm:$0xff]
      %v385 = vld [vmem:[%s1 + $0x10] sm:$0xff]
      %v386 = vld [vmem:[%s1 + $0x18] sm:$0xff]
      %v387 = vld [vmem:[%s1 + $0x20] sm:$0xff]
      %v388 = vld [vmem:[%s1 + $0x28] sm:$0xff]
      %v389 = vld [vmem:[%s1 + $0x30] sm:$0xff]
      %v390 = vld [vmem:[%s1 + $0x38] sm:$0xff]
      %v391 = vld [vmem:[%s1 + $0x40] sm:$0xff]
      %v392 = vld [vmem:[%s1 + $0x48] sm:$0xff]
      %v393 = vld [vmem:[%s1 + $0x50] sm:$0xff]
      %v394 = vld [vmem:[%s1 + $0x58] sm:$0xff]
      %v395 = vld [vmem:[%s1 + $0x60] sm:$0xff]
      %v396 = vld [vmem:[%s1 + $0x68] sm:$0xff]
      %v397 = vld [vmem:[%s1 + $0x70] sm:$0xff]
      %v398 = vld [vmem:[%s1 + $0x78] sm:$0xff]
      %v399 = vld [vmem:[%s1 + $0x80] sm:$0xff]
      %v400 = vld [vmem:[%s1 + $0x88] sm:$0xff]
      %v401 = vld [vmem:[%s1 + $0x90] sm:$0xff]
      %v402 = vld [vmem:[%s1 + $0x98] sm:$0xff]
      %v403 = vld [vmem:[%s1 + $0xa0] sm:$0xff]
      %v404 = vld [vmem:[%s1 + $0xa8] sm:$0xff]
      %v405 = vld [vmem:[%s1 + $0xb0] sm:$0xff]
      %v406 = vld [vmem:[%s1 + $0xb8] sm:$0xff]
      %v407 = vld [vmem:[%s1 + $0xc0] sm:$0xff]
      %v408 = vld [vmem:[%s1 + $0xc8] sm:$0xff]
      %v409 = vld [vmem:[%s1 + $0xd0] sm:$0xff]
      %v410 = vld [vmem:[%s1 + $0xd8] sm:$0xff]
      %v411 = vld [vmem:[%s1 + $0xe0] sm:$0xff]
      %v412 = vld [vmem:[%s1 + $0xe8] sm:$0xff]
      %v413 = vld [vmem:[%s1 + $0xf0] sm:$0xff]
      %v414 = vld [vmem:[%s1 + $0xf8] sm:$0xff]
      %v415 = vld [vmem:[%s1 + $0x100] sm:$0xff]
      %v416 = vld [vmem:[%s1 + $0x108] sm:$0xff]
      %v417 = vld [vmem:[%s1 + $0x110] sm:$0xff]
      %v418 = vld [vmem:[%s1 + $0x118] sm:$0xff]
      %v419 = vld [vmem:[%s1 + $0x120] sm:$0xff]
      %v420 = vld [vmem:[%s1 + $0x128] sm:$0xff]
      %v421 = vld [vmem:[%s1 + $0x130] sm:$0xff]
      %v422 = vld [vmem:[%s1 + $0x138] sm:$0xff]
      %v423 = vld [vmem:[%s1 + $0x140] sm:$0xff]
      %v424 = vld [vmem:[%s1 + $0x148] sm:$0xff]
      %v425 = vld [vmem:[%s1 + $0x150] sm:$0xff]
      %v426 = vld [vmem:[%s1 + $0x158] sm:$0xff]
      %v427 = vld [vmem:[%s1 + $0x160] sm:$0xff]
      %v428 = vld [vmem:[%s1 + $0x168] sm:$0xff]
      %v429 = vld [vmem:[%s1 + $0x170] sm:$0xff]
      %v430 = vld [vmem:[%s1 + $0x178] sm:$0xff]
      %v431 = vld [vmem:[%s1 + $0x180] sm:$0xff]
      %v432 = vld [vmem:[%s1 + $0x188] sm:$0xff]
      %v433 = vld [vmem:[%s1 + $0x190] sm:$0xff]
      %v434 = vld [vmem:[%s1 + $0x198] sm:$0xff]
      %v435 = vld [vmem:[%s1 + $0x1a0] sm:$0xff]
      %v436 = vld [vmem:[%s1 + $0x1a8] sm:$0xff]
      %v437 = vld [vmem:[%s1 + $0x1b0] sm:$0xff]
      %v438 = vld [vmem:[%s1 + $0x1b8] sm:$0xff]
      %v439 = vld [vmem:[%s1 + $0x1c0] sm:$0xff]
      %v440 = vld [vmem:[%s1 + $0x1c8] sm:$0xff]
      %v441 = vld [vmem:[%s1 + $0x1d0] sm:$0xff]
      %v442 = vld [vmem:[%s1 + $0x1d8] sm:$0xff]
      %v443 = vld [vmem:[%s1 + $0x1e0] sm:$0xff]
      %v444 = vld [vmem:[%s1 + $0x1e8] sm:$0xff]
      %v445 = vld [vmem:[%s1 + $0x1f0] sm:$0xff]
      %v446 = vld [vmem:[%s1 + $0x1f8] sm:$0xff]
      %v447 = vld [vmem:[%s1 + $0x200] sm:$0xff]
      %v448 = vld [vmem:[%s1 + $0x208] sm:$0xff]
      %v449 = vld [vmem:[%s1 + $0x210] sm:$0xff]
      %v450 = vld [vmem:[%s1 + $0x218] sm:$0xff]
      %v451 = vld [vmem:[%s1 + $0x220] sm:$0xff]
      %v452 = vld [vmem:[%s1 + $0x228] sm:$0xff]
      %v453 = vld [vmem:[%s1 + $0x230] sm:$0xff]
      %v454 = vld [vmem:[%s1 + $0x238] sm:$0xff]
      %v455 = vld [vmem:[%s1 + $0x240] sm:$0xff]
      %v456 = vld [vmem:[%s1 + $0x248] sm:$0xff]
      %v457 = vld [vmem:[%s1 + $0x250] sm:$0xff]
      %v458 = vld [vmem:[%s1 + $0x258] sm:$0xff]
      %v459 = vld [vmem:[%s1 + $0x260] sm:$0xff]
      %v460 = vld [vmem:[%s1 + $0x268] sm:$0xff]
      %v461 = vld [vmem:[%s1 + $0x270] sm:$0xff]
      %v462 = vld [vmem:[%s1 + $0x278] sm:$0xff]
      %v463 = vld [vmem:[%s1 + $0x280] sm:$0xff]
      %v464 = vld [vmem:[%s1 + $0x288] sm:$0xff]
      %v465 = vld [vmem:[%s1 + $0x290] sm:$0xff]
      %v466 = vld [vmem:[%s1 + $0x298] sm:$0xff]
      %v467 = vld [vmem:[%s1 + $0x2a0] sm:$0xff]
      %v468 = vld [vmem:[%s1 + $0x2a8] sm:$0xff]
      %v469 = vld [vmem:[%s1 + $0x2b0] sm:$0xff]
      %v470 = vld [vmem:[%s1 + $0x2b8] sm:$0xff]
      %v471 = vld [vmem:[%s1 + $0x2c0] sm:$0xff]
      %v472 = vld [vmem:[%s1 + $0x2c8] sm:$0xff]
      %v473 = vld [vmem:[%s1 + $0x2d0] sm:$0xff]
      %v474 = vld [vmem:[%s1 + $0x2d8] sm:$0xff]
      %v475 = vld [vmem:[%s1 + $0x2e0] sm:$0xff]
      %v476 = vld [vmem:[%s1 + $0x2e8] sm:$0xff]
      %v477 = vld [vmem:[%s1 + $0x2f0] sm:$0xff]
      %v478 = vld [vmem:[%s1 + $0x2f8] sm:$0xff]
      %v479 = vld [vmem:[%s1 + $0x300] sm:$0xff]
      %v480 = vld [vmem:[%s1 + $0x308] sm:$0xff]
      %v481 = vld [vmem:[%s1 + $0x310] sm:$0xff]
      %v482 = vld [vmem:[%s1 + $0x318] sm:$0xff]
      %v483 = vld [vmem:[%s1 + $0x320] sm:$0xff]
      %v484 = vld [vmem:[%s1 + $0x328] sm:$0xff]
      %v485 = vld [vmem:[%s1 + $0x330] sm:$0xff]
      %v486 = vld [vmem:[%s1 + $0x338] sm:$0xff]
      %v487 = vld [vmem:[%s1 + $0x340] sm:$0xff]
      %v488 = vld [vmem:[%s1 + $0x348] sm:$0xff]
      %v489 = vld [vmem:[%s1 + $0x350] sm:$0xff]
      %v490 = vld [vmem:[%s1 + $0x358] sm:$0xff]
      %v491 = vld [vmem:[%s1 + $0x360] sm:$0xff]
      %v492 = vld [vmem:[%s1 + $0x368] sm:$0xff]
      %v493 = vld [vmem:[%s1 + $0x370] sm:$0xff]
      %v494 = vld [vmem:[%s1 + $0x378] sm:$0xff]
      %v495 = vld [vmem:[%s1 + $0x380] sm:$0xff]
      %v496 = vld [vmem:[%s1 + $0x388] sm:$0xff]
      %v497 = vld [vmem:[%s1 + $0x390] sm:$0xff]
      %v498 = vld [vmem:[%s1 + $0x398] sm:$0xff]
      %v499 = vld [vmem:[%s1 + $0x3a0] sm:$0xff]
      %v500 = vld [vmem:[%s1 + $0x3a8] sm:$0xff]
      %v501 = vld [vmem:[%s1 + $0x3b0] sm:$0xff]
      %v502 = vld [vmem:[%s1 + $0x3b8] sm:$0xff]
      %v503 = vld [vmem:[%s1 + $0x3c0] sm:$0xff]
      %v504 = vld [vmem:[%s1 + $0x3c8] sm:$0xff]
      %v505 = vld [vmem:[%s1 + $0x3d0] sm:$0xff]
      %v506 = vld [vmem:[%s1 + $0x3d8] sm:$0xff]
      %v507 = vld [vmem:[%s1 + $0x3e0] sm:$0xff]
      %v508 = vld [vmem:[%s1 + $0x3e8] sm:$0xff]
      %v509 = vld [vmem:[%s1 + $0x3f0] sm:$0xff]
      %v510 = vld [vmem:[%s1 + $0x3f8] sm:$0xff]
      %v511 = vld [vmem:[%s1 + $0x400] sm:$0xff]
      %v512 = vld [vmem:[%s1 + $0x408] sm:$0xff]
      %v513 = vld [vmem:[%s1 + $0x410] sm:$0xff]
      %v514 = vld [vmem:[%s1 + $0x418] sm:$0xff]
      %v515 = vld [vmem:[%s1 + $0x420] sm:$0xff]
      %v516 = vld [vmem:[%s1 + $0x428] sm:$0xff]
      %v517 = vld [vmem:[%s1 + $0x430] sm:$0xff]
      %v518 = vld [vmem:[%s1 + $0x438] sm:$0xff]
      %v519 = vld [vmem:[%s1 + $0x440] sm:$0xff]
      %v520 = vld [vmem:[%s1 + $0x448] sm:$0xff]
      %v521 = vld [vmem:[%s1 + $0x450] sm:$0xff]
      %v522 = vld [vmem:[%s1 + $0x458] sm:$0xff]
      %v523 = vld [vmem:[%s1 + $0x460] sm:$0xff]
      %v524 = vld [vmem:[%s1 + $0x468] sm:$0xff]
      %v525 = vld [vmem:[%s1 + $0x470] sm:$0xff]
      %v526 = vld [vmem:[%s1 + $0x478] sm:$0xff]
      %v527 = vld [vmem:[%s1 + $0x480] sm:$0xff]
      %v528 = vld [vmem:[%s1 + $0x488] sm:$0xff]
      %v529 = vld [vmem:[%s1 + $0x490] sm:$0xff]
      %v530 = vld [vmem:[%s1 + $0x498] sm:$0xff]
      %v531 = vld [vmem:[%s1 + $0x4a0] sm:$0xff]
      %v532 = vld [vmem:[%s1 + $0x4a8] sm:$0xff]
      %v533 = vld [vmem:[%s1 + $0x4b0] sm:$0xff]
      %v534 = vld [vmem:[%s1 + $0x4b8] sm:$0xff]
      %v535 = vld [vmem:[%s1 + $0x4c0] sm:$0xff]
      %v536 = vld [vmem:[%s1 + $0x4c8] sm:$0xff]
      %v537 = vld [vmem:[%s1 + $0x4d0] sm:$0xff]
      %v538 = vld [vmem:[%s1 + $0x4d8] sm:$0xff]
      %v539 = vld [vmem:[%s1 + $0x4e0] sm:$0xff]
      %v540 = vld [vmem:[%s1 + $0x4e8] sm:$0xff]
      %v541 = vld [vmem:[%s1 + $0x4f0] sm:$0xff]
      %v542 = vld [vmem:[%s1 + $0x4f8] sm:$0xff]
      %v543 = vld [vmem:[%s1 + $0x500] sm:$0xff]
      %v544 = vld [vmem:[%s1 + $0x508] sm:$0xff]
      %v545 = vld [vmem:[%s1 + $0x510] sm:$0xff]
      %v546 = vld [vmem:[%s1 + $0x518] sm:$0xff]
      %v547 = vld [vmem:[%s1 + $0x520] sm:$0xff]
      %v548 = vld [vmem:[%s1 + $0x528] sm:$0xff]
      %v549 = vld [vmem:[%s1 + $0x530] sm:$0xff]
      %v550 = vld [vmem:[%s1 + $0x538] sm:$0xff]
      %v551 = vld [vmem:[%s1 + $0x540] sm:$0xff]
      %v552 = vld [vmem:[%s1 + $0x548] sm:$0xff]
      %v553 = vld [vmem:[%s1 + $0x550] sm:$0xff]
      %v554 = vld [vmem:[%s1 + $0x558] sm:$0xff]
      %v555 = vld [vmem:[%s1 + $0x560] sm:$0xff]
      %v556 = vld [vmem:[%s1 + $0x568] sm:$0xff]
      %v557 = vld [vmem:[%s1 + $0x570] sm:$0xff]
      %v558 = vld [vmem:[%s1 + $0x578] sm:$0xff]
      %v559 = vld [vmem:[%s1 + $0x580] sm:$0xff]
      %v560 = vld [vmem:[%s1 + $0x588] sm:$0xff]
      %v561 = vld [vmem:[%s1 + $0x590] sm:$0xff]
      %v562 = vld [vmem:[%s1 + $0x598] sm:$0xff]
      %v563 = vld [vmem:[%s1 + $0x5a0] sm:$0xff]
      %v564 = vld [vmem:[%s1 + $0x5a8] sm:$0xff]
      %v565 = vld [vmem:[%s1 + $0x5b0] sm:$0xff]
      %v566 = vld [vmem:[%s1 + $0x5b8] sm:$0xff]
      %v567 = vld [vmem:[%s1 + $0x5c0] sm:$0xff]
      %v568 = vld [vmem:[%s1 + $0x5c8] sm:$0xff]
      %v569 = vld [vmem:[%s1 + $0x5d0] sm:$0xff]
      %v570 = vld [vmem:[%s1 + $0x5d8] sm:$0xff]
      %v571 = vld [vmem:[%s1 + $0x5e0] sm:$0xff]
      %v572 = vld [vmem:[%s1 + $0x5e8] sm:$0xff]
      %v573 = vld [vmem:[%s1 + $0x5f0] sm:$0xff]
      %v574 = vld [vmem:[%s1 + $0x5f8] sm:$0xff]
      %v575 = vld [vmem:[%s1 + $0x600] sm:$0xff]
      %v576 = vld [vmem:[%s1 + $0x608] sm:$0xff]
      %v577 = vld [vmem:[%s1 + $0x610] sm:$0xff]
      %v578 = vld [vmem:[%s1 + $0x618] sm:$0xff]
      %v579 = vld [vmem:[%s1 + $0x620] sm:$0xff]
      %v580 = vld [vmem:[%s1 + $0x628] sm:$0xff]
      %v581 = vld [vmem:[%s1 + $0x630] sm:$0xff]
      %v582 = vld [vmem:[%s1 + $0x638] sm:$0xff]
      %v583 = vld [vmem:[%s1 + $0x640] sm:$0xff]
      %v584 = vld [vmem:[%s1 + $0x648] sm:$0xff]
      %v585 = vld [vmem:[%s1 + $0x650] sm:$0xff]
      %v586 = vld [vmem:[%s1 + $0x658] sm:$0xff]
      %v587 = vld [vmem:[%s1 + $0x660] sm:$0xff]
      %v588 = vld [vmem:[%s1 + $0x668] sm:$0xff]
      %v589 = vld [vmem:[%s1 + $0x670] sm:$0xff]
      %v590 = vld [vmem:[%s1 + $0x678] sm:$0xff]
      %v591 = vld [vmem:[%s1 + $0x680] sm:$0xff]
      %v592 = vld [vmem:[%s1 + $0x688] sm:$0xff]
      %v593 = vld [vmem:[%s1 + $0x690] sm:$0xff]
      %v594 = vld [vmem:[%s1 + $0x698] sm:$0xff]
      %v595 = vld [vmem:[%s1 + $0x6a0] sm:$0xff]
      %v596 = vld [vmem:[%s1 + $0x6a8] sm:$0xff]
      %v597 = vld [vmem:[%s1 + $0x6b0] sm:$0xff]
      %v598 = vld [vmem:[%s1 + $0x6b8] sm:$0xff]
      %v599 = vld [vmem:[%s1 + $0x6c0] sm:$0xff]
      %v600 = vld [vmem:[%s1 + $0x6c8] sm:$0xff]
      %v601 = vld [vmem:[%s1 + $0x6d0] sm:$0xff]
      %v602 = vld [vmem:[%s1 + $0x6d8] sm:$0xff]
      %v603 = vpack.c.bf16 %v384, %v383
      %v604 = vpack.c.bf16 %v386, %v385
      %v605 = vpack.c.bf16 %v388, %v387
      %v606 = vpack.c.bf16 %v390, %v389
      %v607 = vpack.c.bf16 %v392, %v391
      %v608 = vpack.c.bf16 %v394, %v393
      %v609 = vpack.c.bf16 %v396, %v395
      %v610 = vpack.c.bf16 %v398, %v397
      %v611 = vpack.c.bf16 %v400, %v399
      %v612 = vpack.c.bf16 %v402, %v401
      %v613 = vpack.c.bf16 %v404, %v403
      %v614 = vpack.c.bf16 %v406, %v405
      %v615 = vpack.c.bf16 %v408, %v407
      %v616 = vpack.c.bf16 %v410, %v409
      %v617 = vpack.c.bf16 %v412, %v411
      %v618 = vpack.c.bf16 %v414, %v413
      %v619 = vpack.c.bf16 %v416, %v415
      %v620 = vpack.c.bf16 %v418, %v417
      %v621 = vpack.c.bf16 %v420, %v419
      %v622 = vpack.c.bf16 %v422, %v421
      %v623 = vpack.c.bf16 %v424, %v423
      %v624 = vpack.c.bf16 %v426, %v425
      %v625 = vpack.c.bf16 %v428, %v427
      %v626 = vpack.c.bf16 %v430, %v429
      %v627 = vpack.c.bf16 %v432, %v431
      %v628 = vpack.c.bf16 %v434, %v433
      %v629 = vpack.c.bf16 %v436, %v435
      %v630 = vpack.c.bf16 %v438, %v437
      %v631 = vpack.c.bf16 %v440, %v439
      %v632 = vpack.c.bf16 %v442, %v441
      %v633 = vpack.c.bf16 %v444, %v443
      %v634 = vpack.c.bf16 %v446, %v445
      %v635 = vpack.c.bf16 %v448, %v447
      %v636 = vpack.c.bf16 %v450, %v449
      %v637 = vpack.c.bf16 %v452, %v451
      %v638 = vpack.c.bf16 %v454, %v453
      %v639 = vpack.c.bf16 %v456, %v455
      %v640 = vpack.c.bf16 %v458, %v457
      %v641 = vpack.c.bf16 %v460, %v459
      %v642 = vpack.c.bf16 %v462, %v461
      %v643 = vpack.c.bf16 %v464, %v463
      %v644 = vpack.c.bf16 %v466, %v465
      %v645 = vpack.c.bf16 %v468, %v467
      %v646 = vpack.c.bf16 %v470, %v469
      %v647 = vpack.c.bf16 %v472, %v471
      %v648 = vpack.c.bf16 %v474, %v473
      %v649 = vpack.c.bf16 %v476, %v475
      %v650 = vpack.c.bf16 %v478, %v477
      %v651 = vpack.c.bf16 %v480, %v479
      %v652 = vpack.c.bf16 %v482, %v481
      %v653 = vpack.c.bf16 %v484, %v483
      %v654 = vpack.c.bf16 %v486, %v485
      %v655 = vpack.c.bf16 %v488, %v487
      %v656 = vpack.c.bf16 %v490, %v489
      %v657 = vpack.c.bf16 %v492, %v491
      %v658 = vpack.c.bf16 %v494, %v493
      %v659 = vpack.c.bf16 %v496, %v495
      %v660 = vpack.c.bf16 %v498, %v497
      %v661 = vpack.c.bf16 %v500, %v499
      %v662 = vpack.c.bf16 %v502, %v501
      %v663 = vpack.c.bf16 %v504, %v503
      %v664 = vpack.c.bf16 %v506, %v505
      %v665 = vpack.c.bf16 %v508, %v507
      %v666 = vpack.c.bf16 %v510, %v509
      %v667 = vpack.c.bf16 %v512, %v511
      %v668 = vpack.c.bf16 %v514, %v513
      %v669 = vpack.c.bf16 %v516, %v515
      %v670 = vpack.c.bf16 %v518, %v517
      %v671 = vpack.c.bf16 %v520, %v519
      %v672 = vpack.c.bf16 %v522, %v521
      %v673 = vpack.c.bf16 %v524, %v523
      %v674 = vpack.c.bf16 %v526, %v525
      %v675 = vpack.c.bf16 %v528, %v527
      %v676 = vpack.c.bf16 %v530, %v529
      %v677 = vpack.c.bf16 %v532, %v531
      %v678 = vpack.c.bf16 %v534, %v533
      %v679 = vpack.c.bf16 %v536, %v535
      %v680 = vpack.c.bf16 %v538, %v537
      %v681 = vpack.c.bf16 %v540, %v539
      %v682 = vpack.c.bf16 %v542, %v541
      %v683 = vpack.c.bf16 %v544, %v543
      %v684 = vpack.c.bf16 %v546, %v545
      %v685 = vpack.c.bf16 %v548, %v547
      %v686 = vpack.c.bf16 %v550, %v549
      %v687 = vpack.c.bf16 %v552, %v551
      %v688 = vpack.c.bf16 %v554, %v553
      %v689 = vpack.c.bf16 %v556, %v555
      %v690 = vpack.c.bf16 %v558, %v557
      %v691 = vpack.c.bf16 %v560, %v559
      %v692 = vpack.c.bf16 %v562, %v561
      %v693 = vpack.c.bf16 %v564, %v563
      %v694 = vpack.c.bf16 %v566, %v565
      %v695 = vpack.c.bf16 %v568, %v567
      %v696 = vpack.c.bf16 %v570, %v569
      %v697 = vpack.c.bf16 %v572, %v571
      %v698 = vpack.c.bf16 %v574, %v573
      %v699 = vpack.c.bf16 %v576, %v575
      %v700 = vpack.c.bf16 %v578, %v577
      %v701 = vpack.c.bf16 %v580, %v579
      %v702 = vpack.c.bf16 %v582, %v581
      %v703 = vpack.c.bf16 %v584, %v583
      %v704 = vpack.c.bf16 %v586, %v585
      %v705 = vpack.c.bf16 %v588, %v587
      %v706 = vpack.c.bf16 %v590, %v589
      %v707 = vpack.c.bf16 %v592, %v591
      %v708 = vpack.c.bf16 %v594, %v593
      %v709 = vpack.c.bf16 %v596, %v595
      %v710 = vpack.c.bf16 %v598, %v597
      %v711 = vpack.c.bf16 %v600, %v599
      %v712 = vpack.c.bf16 %v602, %v601
      %v713 = vld [vmem:[%s3] sm:$0xff]
      %v714 = vld [vmem:[%s3 + $0x8] sm:$0xff]
      %v715 = vld [vmem:[%s3 + $0x10] sm:$0xff]
      %v716 = vld [vmem:[%s3 + $0x18] sm:$0xff]
      %v717 = vld [vmem:[%s3 + $0x20] sm:$0xff]
      %v718 = vld [vmem:[%s3 + $0x28] sm:$0xff]
      %v719 = vld [vmem:[%s3 + $0x30] sm:$0xff]
      %v720 = vld [vmem:[%s3 + $0x38] sm:$0xff]
      %v721 = vld [vmem:[%s3 + $0x40] sm:$0xff]
      %v722 = vld [vmem:[%s3 + $0x48] sm:$0xff]
      %v723 = vld [vmem:[%s3 + $0x50] sm:$0xff]
      %v724 = vld [vmem:[%s3 + $0x58] sm:$0xff]
      %v725 = vld [vmem:[%s3 + $0x60] sm:$0xff]
      %v726 = vld [vmem:[%s3 + $0x68] sm:$0xff]
      %v727 = vld [vmem:[%s3 + $0x70] sm:$0xff]
      %v728 = vld [vmem:[%s3 + $0x78] sm:$0xff]
      %v729 = vpack.c.bf16 %v714, %v713
      %v730 = vpack.c.bf16 %v716, %v715
      %v731 = vpack.c.bf16 %v718, %v717
      %v732 = vpack.c.bf16 %v720, %v719
      %v733 = vpack.c.bf16 %v722, %v721
      %v734 = vpack.c.bf16 %v724, %v723
      %v735 = vpack.c.bf16 %v726, %v725
      %v736 = vpack.c.bf16 %v728, %v727
      %v737 = vld [vmem:[%s5] sm:$0xff]
      %v738 = vld [vmem:[%s5 + $0x8] sm:$0xff]
      %v739 = vld [vmem:[%s5 + $0x10] sm:$0xff]
      %v740 = vld [vmem:[%s5 + $0x18] sm:$0xff]
      %v741 = vld [vmem:[%s5 + $0x20] sm:$0xff]
      %v742 = vld [vmem:[%s5 + $0x28] sm:$0xff]
      %v743 = vld [vmem:[%s5 + $0x30] sm:$0xff]
      %v744 = vld [vmem:[%s5 + $0x38] sm:$0xff]
      %v745 = vpack.c.bf16 %v738, %v737
      %v746 = vpack.c.bf16 %v740, %v739
      %v747 = vpack.c.bf16 %v742, %v741
      %v748 = vpack.c.bf16 %v744, %v743
      %v749 = vld [vmem:[%s7] sm:$0xff]
      %v750 = vld [vmem:[%s7 + $0x8] sm:$0xff]
      %v751 = vld [vmem:[%s7 + $0x10] sm:$0xff]
      %v752 = vld [vmem:[%s7 + $0x18] sm:$0xff]
      %v753 = vld [vmem:[%s7 + $0x20] sm:$0xff]
      %v754 = vld [vmem:[%s7 + $0x28] sm:$0xff]
      %v755 = vld [vmem:[%s7 + $0x30] sm:$0xff]
      %v756 = vld [vmem:[%s7 + $0x38] sm:$0xff]
      %v757 = vld [vmem:[%s7 + $0x40] sm:$0xff]
      %v758 = vld [vmem:[%s7 + $0x48] sm:$0xff]
      %v759 = vld [vmem:[%s7 + $0x50] sm:$0xff]
      %v760 = vld [vmem:[%s7 + $0x58] sm:$0xff]
      %v761 = vld [vmem:[%s7 + $0x60] sm:$0xff]
      %v762 = vld [vmem:[%s7 + $0x68] sm:$0xff]
      %v763 = vld [vmem:[%s7 + $0x70] sm:$0xff]
      %v764 = vld [vmem:[%s7 + $0x78] sm:$0xff]
      %v765 = vld [vmem:[%s7 + $0x80] sm:$0xff]
      %v766 = vld [vmem:[%s7 + $0x88] sm:$0xff]
      %v767 = vld [vmem:[%s7 + $0x90] sm:$0xff]
      %v768 = vld [vmem:[%s7 + $0x98] sm:$0xff]
      %v769 = vld [vmem:[%s7 + $0xa0] sm:$0xff]
      %v770 = vld [vmem:[%s7 + $0xa8] sm:$0xff]
      %v771 = vld [vmem:[%s7 + $0xb0] sm:$0xff]
      %v772 = vld [vmem:[%s7 + $0xb8] sm:$0xff]
      %v773 = vld [vmem:[%s7 + $0xc0] sm:$0xff]
      %v774 = vld [vmem:[%s7 + $0xc8] sm:$0xff]
      %v775 = vld [vmem:[%s7 + $0xd0] sm:$0xff]
      %v776 = vld [vmem:[%s7 + $0xd8] sm:$0xff]
      %v777 = vld [vmem:[%s7 + $0xe0] sm:$0xff]
      %v778 = vld [vmem:[%s7 + $0xe8] sm:$0xff]
      %v779 = vld [vmem:[%s7 + $0xf0] sm:$0xff]
      %v780 = vld [vmem:[%s7 + $0xf8] sm:$0xff]
      %v781 = vld [vmem:[%s7 + $0x100] sm:$0xff]
      %v782 = vld [vmem:[%s7 + $0x108] sm:$0xff]
      %v783 = vld [vmem:[%s7 + $0x110] sm:$0xff]
      %v784 = vld [vmem:[%s7 + $0x118] sm:$0xff]
      %v785 = vld [vmem:[%s7 + $0x120] sm:$0xff]
      %v786 = vld [vmem:[%s7 + $0x128] sm:$0xff]
      %v787 = vld [vmem:[%s7 + $0x130] sm:$0xff]
      %v788 = vld [vmem:[%s7 + $0x138] sm:$0xff]
      %v789 = vld [vmem:[%s7 + $0x140] sm:$0xff]
      %v790 = vld [vmem:[%s7 + $0x148] sm:$0xff]
      %v791 = vld [vmem:[%s7 + $0x150] sm:$0xff]
      %v792 = vld [vmem:[%s7 + $0x158] sm:$0xff]
      %v793 = vld [vmem:[%s7 + $0x160] sm:$0xff]
      %v794 = vld [vmem:[%s7 + $0x168] sm:$0xff]
      %v795 = vld [vmem:[%s7 + $0x170] sm:$0xff]
      %v796 = vld [vmem:[%s7 + $0x178] sm:$0xff]
      %v797 = vld [vmem:[%s7 + $0x180] sm:$0xff]
      %v798 = vld [vmem:[%s7 + $0x188] sm:$0xff]
      %v799 = vld [vmem:[%s7 + $0x190] sm:$0xff]
      %v800 = vld [vmem:[%s7 + $0x198] sm:$0xff]
      %v801 = vld [vmem:[%s7 + $0x1a0] sm:$0xff]
      %v802 = vld [vmem:[%s7 + $0x1a8] sm:$0xff]
      %v803 = vld [vmem:[%s7 + $0x1b0] sm:$0xff]
      %v804 = vld [vmem:[%s7 + $0x1b8] sm:$0xff]
      %v805 = vld [vmem:[%s7 + $0x1c0] sm:$0xff]
      %v806 = vld [vmem:[%s7 + $0x1c8] sm:$0xff]
      %v807 = vld [vmem:[%s7 + $0x1d0] sm:$0xff]
      %v808 = vld [vmem:[%s7 + $0x1d8] sm:$0xff]
      %v809 = vld [vmem:[%s7 + $0x1e0] sm:$0xff]
      %v810 = vld [vmem:[%s7 + $0x1e8] sm:$0xff]
      %v811 = vld [vmem:[%s7 + $0x1f0] sm:$0xff]
      %v812 = vld [vmem:[%s7 + $0x1f8] sm:$0xff]
      %v813 = vld [vmem:[%s7 + $0x200] sm:$0xff]
      %v814 = vld [vmem:[%s7 + $0x208] sm:$0xff]
      %v815 = vld [vmem:[%s7 + $0x210] sm:$0xff]
      %v816 = vld [vmem:[%s7 + $0x218] sm:$0xff]
      %v817 = vld [vmem:[%s7 + $0x220] sm:$0xff]
      %v818 = vld [vmem:[%s7 + $0x228] sm:$0xff]
      %v819 = vld [vmem:[%s7 + $0x230] sm:$0xff]
      %v820 = vld [vmem:[%s7 + $0x238] sm:$0xff]
      %v821 = vld [vmem:[%s7 + $0x240] sm:$0xff]
      %v822 = vld [vmem:[%s7 + $0x248] sm:$0xff]
      %v823 = vld [vmem:[%s7 + $0x250] sm:$0xff]
      %v824 = vld [vmem:[%s7 + $0x258] sm:$0xff]
      %v825 = vld [vmem:[%s7 + $0x260] sm:$0xff]
      %v826 = vld [vmem:[%s7 + $0x268] sm:$0xff]
      %v827 = vld [vmem:[%s7 + $0x270] sm:$0xff]
      %v828 = vld [vmem:[%s7 + $0x278] sm:$0xff]
      %v829 = vld [vmem:[%s7 + $0x280] sm:$0xff]
      %v830 = vld [vmem:[%s7 + $0x288] sm:$0xff]
      %v831 = vld [vmem:[%s7 + $0x290] sm:$0xff]
      %v832 = vld [vmem:[%s7 + $0x298] sm:$0xff]
      %v833 = vld [vmem:[%s7 + $0x2a0] sm:$0xff]
      %v834 = vld [vmem:[%s7 + $0x2a8] sm:$0xff]
      %v835 = vld [vmem:[%s7 + $0x2b0] sm:$0xff]
      %v836 = vld [vmem:[%s7 + $0x2b8] sm:$0xff]
      %v837 = vld [vmem:[%s7 + $0x2c0] sm:$0xff]
      %v838 = vld [vmem:[%s7 + $0x2c8] sm:$0xff]
      %v839 = vld [vmem:[%s7 + $0x2d0] sm:$0xff]
      %v840 = vld [vmem:[%s7 + $0x2d8] sm:$0xff]
      %v841 = vld [vmem:[%s7 + $0x2e0] sm:$0xff]
      %v842 = vld [vmem:[%s7 + $0x2e8] sm:$0xff]
      %v843 = vld [vmem:[%s7 + $0x2f0] sm:$0xff]
      %v844 = vld [vmem:[%s7 + $0x2f8] sm:$0xff]
      %v845 = vld [vmem:[%s7 + $0x300] sm:$0xff]
      %v846 = vld [vmem:[%s7 + $0x308] sm:$0xff]
      %v847 = vld [vmem:[%s7 + $0x310] sm:$0xff]
      %v848 = vld [vmem:[%s7 + $0x318] sm:$0xff]
      %v849 = vld [vmem:[%s7 + $0x320] sm:$0xff]
      %v850 = vld [vmem:[%s7 + $0x328] sm:$0xff]
      %v851 = vld [vmem:[%s7 + $0x330] sm:$0xff]
      %v852 = vld [vmem:[%s7 + $0x338] sm:$0xff]
      %v853 = vld [vmem:[%s7 + $0x340] sm:$0xff]
      %v854 = vld [vmem:[%s7 + $0x348] sm:$0xff]
      %v855 = vld [vmem:[%s7 + $0x350] sm:$0xff]
      %v856 = vld [vmem:[%s7 + $0x358] sm:$0xff]
      %v857 = vld [vmem:[%s7 + $0x360] sm:$0xff]
      %v858 = vld [vmem:[%s7 + $0x368] sm:$0xff]
      %v859 = vld [vmem:[%s7 + $0x370] sm:$0xff]
      %v860 = vld [vmem:[%s7 + $0x378] sm:$0xff]
      %v861 = vld [vmem:[%s7 + $0x380] sm:$0xff]
      %v862 = vld [vmem:[%s7 + $0x388] sm:$0xff]
      %v863 = vld [vmem:[%s7 + $0x390] sm:$0xff]
      %v864 = vld [vmem:[%s7 + $0x398] sm:$0xff]
      %v865 = vld [vmem:[%s7 + $0x3a0] sm:$0xff]
      %v866 = vld [vmem:[%s7 + $0x3a8] sm:$0xff]
      %v867 = vld [vmem:[%s7 + $0x3b0] sm:$0xff]
      %v868 = vld [vmem:[%s7 + $0x3b8] sm:$0xff]
      %v869 = vld [vmem:[%s7 + $0x3c0] sm:$0xff]
      %v870 = vld [vmem:[%s7 + $0x3c8] sm:$0xff]
      %v871 = vld [vmem:[%s7 + $0x3d0] sm:$0xff]
      %v872 = vld [vmem:[%s7 + $0x3d8] sm:$0xff]
      %v873 = vld [vmem:[%s7 + $0x3e0] sm:$0xff]
      %v874 = vld [vmem:[%s7 + $0x3e8] sm:$0xff]
      %v875 = vld [vmem:[%s7 + $0x3f0] sm:$0xff]
      %v876 = vld [vmem:[%s7 + $0x3f8] sm:$0xff]
      %v877 = vld [vmem:[%s7 + $0x400] sm:$0xff]
      %v878 = vld [vmem:[%s7 + $0x408] sm:$0xff]
      %v879 = vld [vmem:[%s7 + $0x410] sm:$0xff]
      %v880 = vld [vmem:[%s7 + $0x418] sm:$0xff]
      %v881 = vld [vmem:[%s7 + $0x420] sm:$0xff]
      %v882 = vld [vmem:[%s7 + $0x428] sm:$0xff]
      %v883 = vld [vmem:[%s7 + $0x430] sm:$0xff]
      %v884 = vld [vmem:[%s7 + $0x438] sm:$0xff]
      %v885 = vld [vmem:[%s7 + $0x440] sm:$0xff]
      %v886 = vld [vmem:[%s7 + $0x448] sm:$0xff]
      %v887 = vld [vmem:[%s7 + $0x450] sm:$0xff]
      %v888 = vld [vmem:[%s7 + $0x458] sm:$0xff]
      %v889 = vld [vmem:[%s7 + $0x460] sm:$0xff]
      %v890 = vld [vmem:[%s7 + $0x468] sm:$0xff]
      %v891 = vld [vmem:[%s7 + $0x470] sm:$0xff]
      %v892 = vld [vmem:[%s7 + $0x478] sm:$0xff]
      %v893 = vld [vmem:[%s7 + $0x480] sm:$0xff]
      %v894 = vld [vmem:[%s7 + $0x488] sm:$0xff]
      %v895 = vld [vmem:[%s7 + $0x490] sm:$0xff]
      %v896 = vld [vmem:[%s7 + $0x498] sm:$0xff]
      %v897 = vld [vmem:[%s7 + $0x4a0] sm:$0xff]
      %v898 = vld [vmem:[%s7 + $0x4a8] sm:$0xff]
      %v899 = vld [vmem:[%s7 + $0x4b0] sm:$0xff]
      %v900 = vld [vmem:[%s7 + $0x4b8] sm:$0xff]
      %v901 = vld [vmem:[%s7 + $0x4c0] sm:$0xff]
      %v902 = vld [vmem:[%s7 + $0x4c8] sm:$0xff]
      %v903 = vld [vmem:[%s7 + $0x4d0] sm:$0xff]
      %v904 = vld [vmem:[%s7 + $0x4d8] sm:$0xff]
      %v905 = vld [vmem:[%s7 + $0x4e0] sm:$0xff]
      %v906 = vld [vmem:[%s7 + $0x4e8] sm:$0xff]
      %v907 = vld [vmem:[%s7 + $0x4f0] sm:$0xff]
      %v908 = vld [vmem:[%s7 + $0x4f8] sm:$0xff]
      %v909 = vld [vmem:[%s7 + $0x500] sm:$0xff]
      %v910 = vld [vmem:[%s7 + $0x508] sm:$0xff]
      %v911 = vld [vmem:[%s7 + $0x510] sm:$0xff]
      %v912 = vld [vmem:[%s7 + $0x518] sm:$0xff]
      %v913 = vld [vmem:[%s7 + $0x520] sm:$0xff]
      %v914 = vld [vmem:[%s7 + $0x528] sm:$0xff]
      %v915 = vld [vmem:[%s7 + $0x530] sm:$0xff]
      %v916 = vld [vmem:[%s7 + $0x538] sm:$0xff]
      %v917 = vld [vmem:[%s7 + $0x540] sm:$0xff]
      %v918 = vld [vmem:[%s7 + $0x548] sm:$0xff]
      %v919 = vld [vmem:[%s7 + $0x550] sm:$0xff]
      %v920 = vld [vmem:[%s7 + $0x558] sm:$0xff]
      %v921 = vld [vmem:[%s7 + $0x560] sm:$0xff]
      %v922 = vld [vmem:[%s7 + $0x568] sm:$0xff]
      %v923 = vld [vmem:[%s7 + $0x570] sm:$0xff]
      %v924 = vld [vmem:[%s7 + $0x578] sm:$0xff]
      %v925 = vld [vmem:[%s7 + $0x580] sm:$0xff]
      %v926 = vld [vmem:[%s7 + $0x588] sm:$0xff]
      %v927 = vld [vmem:[%s7 + $0x590] sm:$0xff]
      %v928 = vld [vmem:[%s7 + $0x598] sm:$0xff]
      %v929 = vld [vmem:[%s7 + $0x5a0] sm:$0xff]
      %v930 = vld [vmem:[%s7 + $0x5a8] sm:$0xff]
      %v931 = vld [vmem:[%s7 + $0x5b0] sm:$0xff]
      %v932 = vld [vmem:[%s7 + $0x5b8] sm:$0xff]
      %v933 = vld [vmem:[%s7 + $0x5c0] sm:$0xff]
      %v934 = vld [vmem:[%s7 + $0x5c8] sm:$0xff]
      %v935 = vld [vmem:[%s7 + $0x5d0] sm:$0xff]
      %v936 = vld [vmem:[%s7 + $0x5d8] sm:$0xff]
      %v937 = vld [vmem:[%s7 + $0x5e0] sm:$0xff]
      %v938 = vld [vmem:[%s7 + $0x5e8] sm:$0xff]
      %v939 = vld [vmem:[%s7 + $0x5f0] sm:$0xff]
      %v940 = vld [vmem:[%s7 + $0x5f8] sm:$0xff]
      %v941 = vld [vmem:[%s7 + $0x600] sm:$0xff]
      %v942 = vld [vmem:[%s7 + $0x608] sm:$0xff]
      %v943 = vld [vmem:[%s7 + $0x610] sm:$0xff]
      %v944 = vld [vmem:[%s7 + $0x618] sm:$0xff]
      %v945 = vld [vmem:[%s7 + $0x620] sm:$0xff]
      %v946 = vld [vmem:[%s7 + $0x628] sm:$0xff]
      %v947 = vld [vmem:[%s7 + $0x630] sm:$0xff]
      %v948 = vld [vmem:[%s7 + $0x638] sm:$0xff]
      %v949 = vld [vmem:[%s7 + $0x640] sm:$0xff]
      %v950 = vld [vmem:[%s7 + $0x648] sm:$0xff]
      %v951 = vld [vmem:[%s7 + $0x650] sm:$0xff]
      %v952 = vld [vmem:[%s7 + $0x658] sm:$0xff]
      %v953 = vld [vmem:[%s7 + $0x660] sm:$0xff]
      %v954 = vld [vmem:[%s7 + $0x668] sm:$0xff]
      %v955 = vld [vmem:[%s7 + $0x670] sm:$0xff]
      %v956 = vld [vmem:[%s7 + $0x678] sm:$0xff]
      %v957 = vld [vmem:[%s7 + $0x680] sm:$0xff]
      %v958 = vld [vmem:[%s7 + $0x688] sm:$0xff]
      %v959 = vld [vmem:[%s7 + $0x690] sm:$0xff]
      %v960 = vld [vmem:[%s7 + $0x698] sm:$0xff]
      %v961 = vld [vmem:[%s7 + $0x6a0] sm:$0xff]
      %v962 = vld [vmem:[%s7 + $0x6a8] sm:$0xff]
      %v963 = vld [vmem:[%s7 + $0x6b0] sm:$0xff]
      %v964 = vld [vmem:[%s7 + $0x6b8] sm:$0xff]
      %v965 = vld [vmem:[%s7 + $0x6c0] sm:$0xff]
      %v966 = vld [vmem:[%s7 + $0x6c8] sm:$0xff]
      %v967 = vld [vmem:[%s7 + $0x6d0] sm:$0xff]
      %v968 = vld [vmem:[%s7 + $0x6d8] sm:$0xff]
      %v969 = vld [vmem:[%s7 + $0x6e0] sm:$0xff]
      %v970 = vld [vmem:[%s7 + $0x6e8] sm:$0xff]
      %v971 = vld [vmem:[%s7 + $0x6f0] sm:$0xff]
      %v972 = vld [vmem:[%s7 + $0x6f8] sm:$0xff]
      %v973 = vpack.c.bf16 %v763, %v749
      %v974 = vpack.c.bf16 %v764, %v750
      %v975 = vpack.c.bf16 %v765, %v751
      %v976 = vpack.c.bf16 %v766, %v752
      %v977 = vpack.c.bf16 %v767, %v753
      %v978 = vpack.c.bf16 %v768, %v754
      %v979 = vpack.c.bf16 %v769, %v755
      %v980 = vpack.c.bf16 %v770, %v756
      %v981 = vpack.c.bf16 %v771, %v757
      %v982 = vpack.c.bf16 %v772, %v758
      %v983 = vpack.c.bf16 %v773, %v759
      %v984 = vpack.c.bf16 %v774, %v760
      %v985 = vpack.c.bf16 %v775, %v761
      %v986 = vpack.c.bf16 %v776, %v762
      %v987 = vpack.c.bf16 %v791, %v777
      %v988 = vpack.c.bf16 %v792, %v778
      %v989 = vpack.c.bf16 %v793, %v779
      %v990 = vpack.c.bf16 %v794, %v780
      %v991 = vpack.c.bf16 %v795, %v781
      %v992 = vpack.c.bf16 %v796, %v782
      %v993 = vpack.c.bf16 %v797, %v783
      %v994 = vpack.c.bf16 %v798, %v784
      %v995 = vpack.c.bf16 %v799, %v785
      %v996 = vpack.c.bf16 %v800, %v786
      %v997 = vpack.c.bf16 %v801, %v787
      %v998 = vpack.c.bf16 %v802, %v788
      %v999 = vpack.c.bf16 %v803, %v789
      %v1000 = vpack.c.bf16 %v804, %v790
      %v1001 = vpack.c.bf16 %v819, %v805
      %v1002 = vpack.c.bf16 %v820, %v806
      %v1003 = vpack.c.bf16 %v821, %v807
      %v1004 = vpack.c.bf16 %v822, %v808
      %v1005 = vpack.c.bf16 %v823, %v809
      %v1006 = vpack.c.bf16 %v824, %v810
      %v1007 = vpack.c.bf16 %v825, %v811
      %v1008 = vpack.c.bf16 %v826, %v812
      %v1009 = vpack.c.bf16 %v827, %v813
      %v1010 = vpack.c.bf16 %v828, %v814
      %v1011 = vpack.c.bf16 %v829, %v815
      %v1012 = vpack.c.bf16 %v830, %v816
      %v1013 = vpack.c.bf16 %v831, %v817
      %v1014 = vpack.c.bf16 %v832, %v818
      %v1015 = vpack.c.bf16 %v847, %v833
      %v1016 = vpack.c.bf16 %v848, %v834
      %v1017 = vpack.c.bf16 %v849, %v835
      %v1018 = vpack.c.bf16 %v850, %v836
      %v1019 = vpack.c.bf16 %v851, %v837
      %v1020 = vpack.c.bf16 %v852, %v838
      %v1021 = vpack.c.bf16 %v853, %v839
      %v1022 = vpack.c.bf16 %v854, %v840
      %v1023 = vpack.c.bf16 %v855, %v841
      %v1024 = vpack.c.bf16 %v856, %v842
      %v1025 = vpack.c.bf16 %v857, %v843
      %v1026 = vpack.c.bf16 %v858, %v844
      %v1027 = vpack.c.bf16 %v859, %v845
      %v1028 = vpack.c.bf16 %v860, %v846
      %v1029 = vpack.c.bf16 %v875, %v861
      %v1030 = vpack.c.bf16 %v876, %v862
      %v1031 = vpack.c.bf16 %v877, %v863
      %v1032 = vpack.c.bf16 %v878, %v864
      %v1033 = vpack.c.bf16 %v879, %v865
      %v1034 = vpack.c.bf16 %v880, %v866
      %v1035 = vpack.c.bf16 %v881, %v867
      %v1036 = vpack.c.bf16 %v882, %v868
      %v1037 = vpack.c.bf16 %v883, %v869
      %v1038 = vpack.c.bf16 %v884, %v870
      %v1039 = vpack.c.bf16 %v885, %v871
      %v1040 = vpack.c.bf16 %v886, %v872
      %v1041 = vpack.c.bf16 %v887, %v873
      %v1042 = vpack.c.bf16 %v888, %v874
      %v1043 = vpack.c.bf16 %v903, %v889
      %v1044 = vpack.c.bf16 %v904, %v890
      %v1045 = vpack.c.bf16 %v905, %v891
      %v1046 = vpack.c.bf16 %v906, %v892
      %v1047 = vpack.c.bf16 %v907, %v893
      %v1048 = vpack.c.bf16 %v908, %v894
      %v1049 = vpack.c.bf16 %v909, %v895
      %v1050 = vpack.c.bf16 %v910, %v896
      %v1051 = vpack.c.bf16 %v911, %v897
      %v1052 = vpack.c.bf16 %v912, %v898
      %v1053 = vpack.c.bf16 %v913, %v899
      %v1054 = vpack.c.bf16 %v914, %v900
      %v1055 = vpack.c.bf16 %v915, %v901
      %v1056 = vpack.c.bf16 %v916, %v902
      %v1057 = vpack.c.bf16 %v931, %v917
      %v1058 = vpack.c.bf16 %v932, %v918
      %v1059 = vpack.c.bf16 %v933, %v919
      %v1060 = vpack.c.bf16 %v934, %v920
      %v1061 = vpack.c.bf16 %v935, %v921
      %v1062 = vpack.c.bf16 %v936, %v922
      %v1063 = vpack.c.bf16 %v937, %v923
      %v1064 = vpack.c.bf16 %v938, %v924
      %v1065 = vpack.c.bf16 %v939, %v925
      %v1066 = vpack.c.bf16 %v940, %v926
      %v1067 = vpack.c.bf16 %v941, %v927
      %v1068 = vpack.c.bf16 %v942, %v928
      %v1069 = vpack.c.bf16 %v943, %v929
      %v1070 = vpack.c.bf16 %v944, %v930
      %v1071 = vpack.c.bf16 %v959, %v945
      %v1072 = vpack.c.bf16 %v960, %v946
      %v1073 = vpack.c.bf16 %v961, %v947
      %v1074 = vpack.c.bf16 %v962, %v948
      %v1075 = vpack.c.bf16 %v963, %v949
      %v1076 = vpack.c.bf16 %v964, %v950
      %v1077 = vpack.c.bf16 %v965, %v951
      %v1078 = vpack.c.bf16 %v966, %v952
      %v1079 = vpack.c.bf16 %v967, %v953
      %v1080 = vpack.c.bf16 %v968, %v954
      %v1081 = vpack.c.bf16 %v969, %v955
      %v1082 = vpack.c.bf16 %v970, %v956
      %v1083 = vpack.c.bf16 %v971, %v957
      %v1084 = vpack.c.bf16 %v972, %v958
      %v1085 = vld [vmem:[%s2] sm:$0x1]
      %v1086 = vld [vmem:[%s4] sm:$0x1]
      %v1087 = vld [vmem:[%s6] sm:$0x1]
      %v1088 = vld [vmem:[%s8] sm:$0xff]
      %v1089 = vld [vmem:[%s8 + $0x8] sm:$0x3f]
      %v1090 = vld [vmem:[%s367] sm:$0xff]
      %v1091 = vld [vmem:[%s367 + $0x8] sm:$0xff]
      %v1092 = vld [vmem:[%s367 + $0x10] sm:$0xff]
      %v1093 = vld [vmem:[%s367 + $0x18] sm:$0xff]
      %v1094 = vld [vmem:[%s367 + $0x20] sm:$0xff]
      %v1095 = vld [vmem:[%s367 + $0x28] sm:$0xff]
      %v1096 = vld [vmem:[%s367 + $0x30] sm:$0xff]
      %v1097 = vld [vmem:[%s367 + $0x38] sm:$0xff]
      %v1098 = vld [vmem:[%s367 + $0x40] sm:$0xff]
      %v1099 = vld [vmem:[%s367 + $0x48] sm:$0xff]
      %v1100 = vld [vmem:[%s367 + $0x50] sm:$0xff]
      %v1101 = vld [vmem:[%s367 + $0x58] sm:$0xff]
      %v1102 = vld [vmem:[%s367 + $0x60] sm:$0xff]
      %v1103 = vld [vmem:[%s367 + $0x68] sm:$0xff]
      %v1104 = vld [vmem:[%s367 + $0x70] sm:$0xff]
      %v1105 = vld [vmem:[%s367 + $0x78] sm:$0xff]
      %v1106 = vld [vmem:[%s367 + $0x80] sm:$0xff]
      %v1107 = vld [vmem:[%s367 + $0x88] sm:$0xff]
      %v1108 = vld [vmem:[%s367 + $0x90] sm:$0xff]
      %v1109 = vld [vmem:[%s367 + $0x98] sm:$0xff]
      %v1110 = vld [vmem:[%s367 + $0xa0] sm:$0xff]
      %v1111 = vld [vmem:[%s367 + $0xa8] sm:$0xff]
      %v1112 = vld [vmem:[%s367 + $0xb0] sm:$0xff]
      %v1113 = vld [vmem:[%s367 + $0xb8] sm:$0xff]
      %v1114 = vld [vmem:[%s367 + $0xc0] sm:$0xff]
      %v1115 = vld [vmem:[%s367 + $0xc8] sm:$0xff]
      %v1116 = vld [vmem:[%s367 + $0xd0] sm:$0xff]
      %v1117 = vld [vmem:[%s367 + $0xd8] sm:$0xff]
      %v1118 = vld [vmem:[%s367 + $0xe0] sm:$0xff]
      %v1119 = vld [vmem:[%s367 + $0xe8] sm:$0xff]
      %v1120 = vld [vmem:[%s367 + $0xf0] sm:$0xff]
      %v1121 = vld [vmem:[%s367 + $0xf8] sm:$0xff]
      %v1122 = vld [vmem:[%s367 + $0x100] sm:$0xff]
      %v1123 = vld [vmem:[%s367 + $0x108] sm:$0xff]
      %v1124 = vld [vmem:[%s367 + $0x110] sm:$0xff]
      %v1125 = vld [vmem:[%s367 + $0x118] sm:$0xff]
      %v1126 = vld [vmem:[%s367 + $0x120] sm:$0xff]
      %v1127 = vld [vmem:[%s367 + $0x128] sm:$0xff]
      %v1128 = vld [vmem:[%s367 + $0x130] sm:$0xff]
      %v1129 = vld [vmem:[%s367 + $0x138] sm:$0xff]
      %v1130 = vld [vmem:[%s367 + $0x140] sm:$0xff]
      %v1131 = vld [vmem:[%s367 + $0x148] sm:$0xff]
      %v1132 = vld [vmem:[%s367 + $0x150] sm:$0xff]
      %v1133 = vld [vmem:[%s367 + $0x158] sm:$0xff]
      %v1134 = vld [vmem:[%s367 + $0x160] sm:$0xff]
      %v1135 = vld [vmem:[%s367 + $0x168] sm:$0xff]
      %v1136 = vld [vmem:[%s367 + $0x170] sm:$0xff]
      %v1137 = vld [vmem:[%s367 + $0x178] sm:$0xff]
      %v1138 = vld [vmem:[%s367 + $0x180] sm:$0xff]
      %v1139 = vld [vmem:[%s367 + $0x188] sm:$0xff]
      %v1140 = vld [vmem:[%s367 + $0x190] sm:$0xff]
      %v1141 = vld [vmem:[%s367 + $0x198] sm:$0xff]
      %v1142 = vld [vmem:[%s367 + $0x1a0] sm:$0xff]
      %v1143 = vld [vmem:[%s367 + $0x1a8] sm:$0xff]
      %v1144 = vld [vmem:[%s367 + $0x1b0] sm:$0xff]
      %v1145 = vld [vmem:[%s367 + $0x1b8] sm:$0xff]
      %v1146 = vld [vmem:[%s367 + $0x1c0] sm:$0xff]
      %v1147 = vld [vmem:[%s367 + $0x1c8] sm:$0xff]
      %v1148 = vld [vmem:[%s367 + $0x1d0] sm:$0xff]
      %v1149 = vld [vmem:[%s367 + $0x1d8] sm:$0xff]
      %v1150 = vld [vmem:[%s367 + $0x1e0] sm:$0xff]
      %v1151 = vld [vmem:[%s367 + $0x1e8] sm:$0xff]
      %v1152 = vld [vmem:[%s367 + $0x1f0] sm:$0xff]
      %v1153 = vld [vmem:[%s367 + $0x1f8] sm:$0xff]
      %v1154 = vld [vmem:[%s367 + $0x200] sm:$0xff]
      %v1155 = vld [vmem:[%s367 + $0x208] sm:$0xff]
      %v1156 = vld [vmem:[%s367 + $0x210] sm:$0xff]
      %v1157 = vld [vmem:[%s367 + $0x218] sm:$0xff]
      %v1158 = vld [vmem:[%s367 + $0x220] sm:$0xff]
      %v1159 = vld [vmem:[%s367 + $0x228] sm:$0xff]
      %v1160 = vld [vmem:[%s367 + $0x230] sm:$0xff]
      %v1161 = vld [vmem:[%s367 + $0x238] sm:$0xff]
      %v1162 = vld [vmem:[%s367 + $0x240] sm:$0xff]
      %v1163 = vld [vmem:[%s367 + $0x248] sm:$0xff]
      %v1164 = vld [vmem:[%s367 + $0x250] sm:$0xff]
      %v1165 = vld [vmem:[%s367 + $0x258] sm:$0xff]
      %v1166 = vld [vmem:[%s367 + $0x260] sm:$0xff]
      %v1167 = vld [vmem:[%s367 + $0x268] sm:$0xff]
      %v1168 = vld [vmem:[%s367 + $0x270] sm:$0xff]
      %v1169 = vld [vmem:[%s367 + $0x278] sm:$0xff]
      %v1170 = vld [vmem:[%s367 + $0x280] sm:$0xff]
      %v1171 = vld [vmem:[%s367 + $0x288] sm:$0xff]
      %v1172 = vld [vmem:[%s367 + $0x290] sm:$0xff]
      %v1173 = vld [vmem:[%s367 + $0x298] sm:$0xff]
      %v1174 = vld [vmem:[%s367 + $0x2a0] sm:$0xff]
      %v1175 = vld [vmem:[%s367 + $0x2a8] sm:$0xff]
      %v1176 = vld [vmem:[%s367 + $0x2b0] sm:$0xff]
      %v1177 = vld [vmem:[%s367 + $0x2b8] sm:$0xff]
      %v1178 = vld [vmem:[%s367 + $0x2c0] sm:$0xff]
      %v1179 = vld [vmem:[%s367 + $0x2c8] sm:$0xff]
      %v1180 = vld [vmem:[%s367 + $0x2d0] sm:$0xff]
      %v1181 = vld [vmem:[%s367 + $0x2d8] sm:$0xff]
      %v1182 = vld [vmem:[%s367 + $0x2e0] sm:$0xff]
      %v1183 = vld [vmem:[%s367 + $0x2e8] sm:$0xff]
      %v1184 = vld [vmem:[%s367 + $0x2f0] sm:$0xff]
      %v1185 = vld [vmem:[%s367 + $0x2f8] sm:$0xff]
      %v1186 = vld [vmem:[%s367 + $0x300] sm:$0xff]
      %v1187 = vld [vmem:[%s367 + $0x308] sm:$0xff]
      %v1188 = vld [vmem:[%s367 + $0x310] sm:$0xff]
      %v1189 = vld [vmem:[%s367 + $0x318] sm:$0xff]
      %v1190 = vld [vmem:[%s367 + $0x320] sm:$0xff]
      %v1191 = vld [vmem:[%s367 + $0x328] sm:$0xff]
      %v1192 = vld [vmem:[%s367 + $0x330] sm:$0xff]
      %v1193 = vld [vmem:[%s367 + $0x338] sm:$0xff]
      %v1194 = vld [vmem:[%s367 + $0x340] sm:$0xff]
      %v1195 = vld [vmem:[%s367 + $0x348] sm:$0xff]
      %v1196 = vld [vmem:[%s367 + $0x350] sm:$0xff]
      %v1197 = vld [vmem:[%s367 + $0x358] sm:$0xff]
      %v1198 = vld [vmem:[%s367 + $0x360] sm:$0xff]
      %v1199 = vld [vmem:[%s367 + $0x368] sm:$0xff]
      %v1200 = vld [vmem:[%s367 + $0x370] sm:$0xff]
      %v1201 = vld [vmem:[%s367 + $0x378] sm:$0xff]
      %v1202 = vld [vmem:[%s367 + $0x380] sm:$0xff]
      %v1203 = vld [vmem:[%s367 + $0x388] sm:$0xff]
      %v1204 = vld [vmem:[%s367 + $0x390] sm:$0xff]
      %v1205 = vld [vmem:[%s367 + $0x398] sm:$0xff]
      %v1206 = vld [vmem:[%s367 + $0x3a0] sm:$0xff]
      %v1207 = vld [vmem:[%s367 + $0x3a8] sm:$0xff]
      %v1208 = vld [vmem:[%s367 + $0x3b0] sm:$0xff]
      %v1209 = vld [vmem:[%s367 + $0x3b8] sm:$0xff]
      %v1210 = vld [vmem:[%s367 + $0x3c0] sm:$0xff]
      %v1211 = vld [vmem:[%s367 + $0x3c8] sm:$0xff]
      %v1212 = vld [vmem:[%s367 + $0x3d0] sm:$0xff]
      %v1213 = vld [vmem:[%s367 + $0x3d8] sm:$0xff]
      %v1214 = vld [vmem:[%s367 + $0x3e0] sm:$0xff]
      %v1215 = vld [vmem:[%s367 + $0x3e8] sm:$0xff]
      %v1216 = vld [vmem:[%s367 + $0x3f0] sm:$0xff]
      %v1217 = vld [vmem:[%s367 + $0x3f8] sm:$0xff]
      %v1218 = vld [vmem:[%s367 + $0x400] sm:$0xff]
      %v1219 = vld [vmem:[%s367 + $0x408] sm:$0xff]
      %v1220 = vld [vmem:[%s367 + $0x410] sm:$0xff]
      %v1221 = vld [vmem:[%s367 + $0x418] sm:$0xff]
      %v1222 = vld [vmem:[%s367 + $0x420] sm:$0xff]
      %v1223 = vld [vmem:[%s367 + $0x428] sm:$0xff]
      %v1224 = vld [vmem:[%s367 + $0x430] sm:$0xff]
      %v1225 = vld [vmem:[%s367 + $0x438] sm:$0xff]
      %v1226 = vld [vmem:[%s367 + $0x440] sm:$0xff]
      %v1227 = vld [vmem:[%s367 + $0x448] sm:$0xff]
      %v1228 = vld [vmem:[%s367 + $0x450] sm:$0xff]
      %v1229 = vld [vmem:[%s367 + $0x458] sm:$0xff]
      %v1230 = vld [vmem:[%s367 + $0x460] sm:$0xff]
      %v1231 = vld [vmem:[%s367 + $0x468] sm:$0xff]
      %v1232 = vld [vmem:[%s367 + $0x470] sm:$0xff]
      %v1233 = vld [vmem:[%s367 + $0x478] sm:$0xff]
      %v1234 = vld [vmem:[%s367 + $0x480] sm:$0xff]
      %v1235 = vld [vmem:[%s367 + $0x488] sm:$0xff]
      %v1236 = vld [vmem:[%s367 + $0x490] sm:$0xff]
      %v1237 = vld [vmem:[%s367 + $0x498] sm:$0xff]
      %v1238 = vld [vmem:[%s367 + $0x4a0] sm:$0xff]
      %v1239 = vld [vmem:[%s367 + $0x4a8] sm:$0xff]
      %v1240 = vld [vmem:[%s367 + $0x4b0] sm:$0xff]
      %v1241 = vld [vmem:[%s367 + $0x4b8] sm:$0xff]
      %v1242 = vld [vmem:[%s367 + $0x4c0] sm:$0xff]
      %v1243 = vld [vmem:[%s367 + $0x4c8] sm:$0xff]
      %v1244 = vld [vmem:[%s367 + $0x4d0] sm:$0xff]
      %v1245 = vld [vmem:[%s367 + $0x4d8] sm:$0xff]
      %v1246 = vld [vmem:[%s367 + $0x4e0] sm:$0xff]
      %v1247 = vld [vmem:[%s367 + $0x4e8] sm:$0xff]
      %v1248 = vld [vmem:[%s367 + $0x4f0] sm:$0xff]
      %v1249 = vld [vmem:[%s367 + $0x4f8] sm:$0xff]
      %v1250 = vld [vmem:[%s367 + $0x500] sm:$0xff]
      %v1251 = vld [vmem:[%s367 + $0x508] sm:$0xff]
      %v1252 = vld [vmem:[%s367 + $0x510] sm:$0xff]
      %v1253 = vld [vmem:[%s367 + $0x518] sm:$0xff]
      %v1254 = vld [vmem:[%s367 + $0x520] sm:$0xff]
      %v1255 = vld [vmem:[%s367 + $0x528] sm:$0xff]
      %v1256 = vld [vmem:[%s367 + $0x530] sm:$0xff]
      %v1257 = vld [vmem:[%s367 + $0x538] sm:$0xff]
      %v1258 = vld [vmem:[%s367 + $0x540] sm:$0xff]
      %v1259 = vld [vmem:[%s367 + $0x548] sm:$0xff]
      %v1260 = vld [vmem:[%s367 + $0x550] sm:$0xff]
      %v1261 = vld [vmem:[%s367 + $0x558] sm:$0xff]
      %v1262 = vld [vmem:[%s367 + $0x560] sm:$0xff]
      %v1263 = vld [vmem:[%s367 + $0x568] sm:$0xff]
      %v1264 = vld [vmem:[%s367 + $0x570] sm:$0xff]
      %v1265 = vld [vmem:[%s367 + $0x578] sm:$0xff]
      %v1266 = vld [vmem:[%s367 + $0x580] sm:$0xff]
      %v1267 = vld [vmem:[%s367 + $0x588] sm:$0xff]
      %v1268 = vld [vmem:[%s367 + $0x590] sm:$0xff]
      %v1269 = vld [vmem:[%s367 + $0x598] sm:$0xff]
      %v1270 = vld [vmem:[%s367 + $0x5a0] sm:$0xff]
      %v1271 = vld [vmem:[%s367 + $0x5a8] sm:$0xff]
      %v1272 = vld [vmem:[%s367 + $0x5b0] sm:$0xff]
      %v1273 = vld [vmem:[%s367 + $0x5b8] sm:$0xff]
      %v1274 = vld [vmem:[%s367 + $0x5c0] sm:$0xff]
      %v1275 = vld [vmem:[%s367 + $0x5c8] sm:$0xff]
      %v1276 = vld [vmem:[%s367 + $0x5d0] sm:$0xff]
      %v1277 = vld [vmem:[%s367 + $0x5d8] sm:$0xff]
      %v1278 = vld [vmem:[%s367 + $0x5e0] sm:$0xff]
      %v1279 = vld [vmem:[%s367 + $0x5e8] sm:$0xff]
      %v1280 = vld [vmem:[%s367 + $0x5f0] sm:$0xff]
      %v1281 = vld [vmem:[%s367 + $0x5f8] sm:$0xff]
      %v1282 = vld [vmem:[%s367 + $0x600] sm:$0xff]
      %v1283 = vld [vmem:[%s367 + $0x608] sm:$0xff]
      %v1284 = vld [vmem:[%s367 + $0x610] sm:$0xff]
      %v1285 = vld [vmem:[%s367 + $0x618] sm:$0xff]
      %v1286 = vld [vmem:[%s367 + $0x620] sm:$0xff]
      %v1287 = vld [vmem:[%s367 + $0x628] sm:$0xff]
      %v1288 = vld [vmem:[%s367 + $0x630] sm:$0xff]
      %v1289 = vld [vmem:[%s367 + $0x638] sm:$0xff]
      %v1290 = vld [vmem:[%s367 + $0x640] sm:$0xff]
      %v1291 = vld [vmem:[%s367 + $0x648] sm:$0xff]
      %v1292 = vld [vmem:[%s367 + $0x650] sm:$0xff]
      %v1293 = vld [vmem:[%s367 + $0x658] sm:$0xff]
      %v1294 = vld [vmem:[%s367 + $0x660] sm:$0xff]
      %v1295 = vld [vmem:[%s367 + $0x668] sm:$0xff]
      %v1296 = vld [vmem:[%s367 + $0x670] sm:$0xff]
      %v1297 = vld [vmem:[%s367 + $0x678] sm:$0xff]
      %v1298 = vld [vmem:[%s367 + $0x680] sm:$0xff]
      %v1299 = vld [vmem:[%s367 + $0x688] sm:$0xff]
      %v1300 = vld [vmem:[%s367 + $0x690] sm:$0xff]
      %v1301 = vld [vmem:[%s367 + $0x698] sm:$0xff]
      %v1302 = vld [vmem:[%s367 + $0x6a0] sm:$0xff]
      %v1303 = vld [vmem:[%s367 + $0x6a8] sm:$0xff]
      %v1304 = vld [vmem:[%s367 + $0x6b0] sm:$0xff]
      %v1305 = vld [vmem:[%s367 + $0x6b8] sm:$0xff]
      %v1306 = vld [vmem:[%s367 + $0x6c0] sm:$0xff]
      %v1307 = vld [vmem:[%s367 + $0x6c8] sm:$0xff]
      %v1308 = vld [vmem:[%s367 + $0x6d0] sm:$0xff]
      %v1309 = vld [vmem:[%s367 + $0x6d8] sm:$0xff]
      %v1310 = vld [vmem:[%s367 + $0x6e0] sm:$0xff]
      %v1311 = vld [vmem:[%s367 + $0x6e8] sm:$0xff]
      %v1312 = vld [vmem:[%s367 + $0x6f0] sm:$0xff]
      %v1313 = vld [vmem:[%s367 + $0x6f8] sm:$0xff]
      %v1314 = vpack.c.bf16 %v1104, %v1090
      %v1315 = vpack.c.bf16 %v1105, %v1091
      %v1316 = vpack.c.bf16 %v1106, %v1092
      %v1317 = vpack.c.bf16 %v1107, %v1093
      %v1318 = vpack.c.bf16 %v1108, %v1094
      %v1319 = vpack.c.bf16 %v1109, %v1095
      %v1320 = vpack.c.bf16 %v1110, %v1096
      %v1321 = vpack.c.bf16 %v1111, %v1097
      %v1322 = vpack.c.bf16 %v1112, %v1098
      %v1323 = vpack.c.bf16 %v1113, %v1099
      %v1324 = vpack.c.bf16 %v1114, %v1100
      %v1325 = vpack.c.bf16 %v1115, %v1101
      %v1326 = vpack.c.bf16 %v1116, %v1102
      %v1327 = vpack.c.bf16 %v1117, %v1103
      %v1328 = vpack.c.bf16 %v1132, %v1118
      %v1329 = vpack.c.bf16 %v1133, %v1119
      %v1330 = vpack.c.bf16 %v1134, %v1120
      %v1331 = vpack.c.bf16 %v1135, %v1121
      %v1332 = vpack.c.bf16 %v1136, %v1122
      %v1333 = vpack.c.bf16 %v1137, %v1123
      %v1334 = vpack.c.bf16 %v1138, %v1124
      %v1335 = vpack.c.bf16 %v1139, %v1125
      %v1336 = vpack.c.bf16 %v1140, %v1126
      %v1337 = vpack.c.bf16 %v1141, %v1127
      %v1338 = vpack.c.bf16 %v1142, %v1128
      %v1339 = vpack.c.bf16 %v1143, %v1129
      %v1340 = vpack.c.bf16 %v1144, %v1130
      %v1341 = vpack.c.bf16 %v1145, %v1131
      %v1342 = vpack.c.bf16 %v1160, %v1146
      %v1343 = vpack.c.bf16 %v1161, %v1147
      %v1344 = vpack.c.bf16 %v1162, %v1148
      %v1345 = vpack.c.bf16 %v1163, %v1149
      %v1346 = vpack.c.bf16 %v1164, %v1150
      %v1347 = vpack.c.bf16 %v1165, %v1151
      %v1348 = vpack.c.bf16 %v1166, %v1152
      %v1349 = vpack.c.bf16 %v1167, %v1153
      %v1350 = vpack.c.bf16 %v1168, %v1154
      %v1351 = vpack.c.bf16 %v1169, %v1155
      %v1352 = vpack.c.bf16 %v1170, %v1156
      %v1353 = vpack.c.bf16 %v1171, %v1157
      %v1354 = vpack.c.bf16 %v1172, %v1158
      %v1355 = vpack.c.bf16 %v1173, %v1159
      %v1356 = vpack.c.bf16 %v1188, %v1174
      %v1357 = vpack.c.bf16 %v1189, %v1175
      %v1358 = vpack.c.bf16 %v1190, %v1176
      %v1359 = vpack.c.bf16 %v1191, %v1177
      %v1360 = vpack.c.bf16 %v1192, %v1178
      %v1361 = vpack.c.bf16 %v1193, %v1179
      %v1362 = vpack.c.bf16 %v1194, %v1180
      %v1363 = vpack.c.bf16 %v1195, %v1181
      %v1364 = vpack.c.bf16 %v1196, %v1182
      %v1365 = vpack.c.bf16 %v1197, %v1183
      %v1366 = vpack.c.bf16 %v1198, %v1184
      %v1367 = vpack.c.bf16 %v1199, %v1185
      %v1368 = vpack.c.bf16 %v1200, %v1186
      %v1369 = vpack.c.bf16 %v1201, %v1187
      %v1370 = vpack.c.bf16 %v1216, %v1202
      %v1371 = vpack.c.bf16 %v1217, %v1203
      %v1372 = vpack.c.bf16 %v1218, %v1204
      %v1373 = vpack.c.bf16 %v1219, %v1205
      %v1374 = vpack.c.bf16 %v1220, %v1206
      %v1375 = vpack.c.bf16 %v1221, %v1207
      %v1376 = vpack.c.bf16 %v1222, %v1208
      %v1377 = vpack.c.bf16 %v1223, %v1209
      %v1378 = vpack.c.bf16 %v1224, %v1210
      %v1379 = vpack.c.bf16 %v1225, %v1211
      %v1380 = vpack.c.bf16 %v1226, %v1212
      %v1381 = vpack.c.bf16 %v1227, %v1213
      %v1382 = vpack.c.bf16 %v1228, %v1214
      %v1383 = vpack.c.bf16 %v1229, %v1215
      %v1384 = vpack.c.bf16 %v1244, %v1230
      %v1385 = vpack.c.bf16 %v1245, %v1231
      %v1386 = vpack.c.bf16 %v1246, %v1232
      %v1387 = vpack.c.bf16 %v1247, %v1233
      %v1388 = vpack.c.bf16 %v1248, %v1234
      %v1389 = vpack.c.bf16 %v1249, %v1235
      %v1390 = vpack.c.bf16 %v1250, %v1236
      %v1391 = vpack.c.bf16 %v1251, %v1237
      %v1392 = vpack.c.bf16 %v1252, %v1238
      %v1393 = vpack.c.bf16 %v1253, %v1239
      %v1394 = vpack.c.bf16 %v1254, %v1240
      %v1395 = vpack.c.bf16 %v1255, %v1241
      %v1396 = vpack.c.bf16 %v1256, %v1242
      %v1397 = vpack.c.bf16 %v1257, %v1243
      %v1398 = vpack.c.bf16 %v1272, %v1258
      %v1399 = vpack.c.bf16 %v1273, %v1259
      %v1400 = vpack.c.bf16 %v1274, %v1260
      %v1401 = vpack.c.bf16 %v1275, %v1261
      %v1402 = vpack.c.bf16 %v1276, %v1262
      %v1403 = vpack.c.bf16 %v1277, %v1263
      %v1404 = vpack.c.bf16 %v1278, %v1264
      %v1405 = vpack.c.bf16 %v1279, %v1265
      %v1406 = vpack.c.bf16 %v1280, %v1266
      %v1407 = vpack.c.bf16 %v1281, %v1267
      %v1408 = vpack.c.bf16 %v1282, %v1268
      %v1409 = vpack.c.bf16 %v1283, %v1269
      %v1410 = vpack.c.bf16 %v1284, %v1270
      %v1411 = vpack.c.bf16 %v1285, %v1271
      %v1412 = vpack.c.bf16 %v1300, %v1286
      %v1413 = vpack.c.bf16 %v1301, %v1287
      %v1414 = vpack.c.bf16 %v1302, %v1288
      %v1415 = vpack.c.bf16 %v1303, %v1289
      %v1416 = vpack.c.bf16 %v1304, %v1290
      %v1417 = vpack.c.bf16 %v1305, %v1291
      %v1418 = vpack.c.bf16 %v1306, %v1292
      %v1419 = vpack.c.bf16 %v1307, %v1293
      %v1420 = vpack.c.bf16 %v1308, %v1294
      %v1421 = vpack.c.bf16 %v1309, %v1295
      %v1422 = vpack.c.bf16 %v1310, %v1296
      %v1423 = vpack.c.bf16 %v1311, %v1297
      %v1424 = vpack.c.bf16 %v1312, %v1298
      %v1425 = vpack.c.bf16 %v1313, %v1299
      %v1427 = vlaneseq
      %v1428 = vshrl.u32 %v1427, 7
      %v1429 = vsub.s32 0, %v1428
      %v1430 = vrot.slane %v1085, %v1429
      %vm1432 = vcmask 785408
      %v1434 = vsel %vm1432, %v1327, 0
      %v1437 = vsel %vm1432, %v1341, 0
      %v1440 = vsel %vm1432, %v1355, 0
      %v1443 = vsel %vm1432, %v1369, 0
      %v1446 = vsel %vm1432, %v1383, 0
      %v1449 = vsel %vm1432, %v1397, 0
      %v1452 = vsel %vm1432, %v1411, 0
      %v1455 = vsel %vm1432, %v1425, 0
      %1457 = vmatprep.subr.bf16.mxu0 0
      %1458 = vmatpush1.bf16.msra.mxu0 %v603
      %1459 = vmatprep.subr.bf16.mxu0 0
      %1460 = vmatpush1.bf16.msra.mxu0 %v604
      %1461 = vmatprep.subr.bf16.mxu0 0
      %1462 = vmatpush1.bf16.msra.mxu0 %v605
      %1463 = vmatprep.subr.bf16.mxu0 0
      %1464 = vmatpush1.bf16.msra.mxu0 %v606
      %1465 = vmatprep.subr.bf16.mxu0 0
      %1466 = vmatpush1.bf16.msra.mxu0 %v607
      %1467 = vmatprep.subr.bf16.mxu0 0
      %1468 = vmatpush1.bf16.msra.mxu0 %v608
      %1469 = vmatprep.subr.bf16.mxu0 0
      %1470 = vmatpush1.bf16.msra.mxu0 %v609
      %1471 = vmatprep.subr.bf16.mxu0 0
      %1472 = vmatpush1.bf16.msra.mxu0 %v610
      %1473 = vmatprep.subr.bf16.mxu0 0
      %1474 = vmatpush1.bf16.msra.mxu0 %v611
      %1475 = vmatprep.subr.bf16.mxu0 0
      %1476 = vmatpush1.bf16.msra.mxu0 %v612
      %1477 = vmatprep.subr.bf16.mxu0 0
      %1478 = vmatpush1.bf16.msra.mxu0 %v613
      %1479 = vmatprep.subr.bf16.mxu0 0
      %1480 = vmatpush1.bf16.msra.mxu0 %v614
      %1481 = vmatprep.subr.bf16.mxu0 0
      %1482 = vmatpush1.bf16.msra.mxu0 %v615
      %1483 = vmatprep.subr.bf16.mxu0 0
      %1484 = vmatpush1.bf16.msra.mxu0 %v616
      %1485 = vmatprep.subr.bf16.mxu0 0
      %1486 = vmatpush1.bf16.msra.mxu0 %v617
      %1487 = vmatprep.subr.bf16.mxu0 0
      %1488 = vmatpush1.bf16.msra.mxu0 %v618
      %1489 = vmatprep.mubr.bf16.mxu0 %v1315
      %1490 = vmatmul.mubr.bf16.gmra.mrb[0].mxu0 %v1314
      %v1491 = vpop.f32.mrb[0].mxu0
      %v1492 = vadd.f32 %v1430, %v1491
      %v1493 = vpop.f32.mrb[0].mxu0
      %v1494 = vpop.f32.mrb[0].mxu0
      %v1495 = vadd.f32 %v1430, %v1494
      %v1496 = vpop.f32.mrb[0].mxu0
      %1497 = vmatprep.mubr.bf16.mxu0 %v1329
      %1498 = vmatmul.mubr.bf16.gmra.mrb[0].mxu0 %v1328
      %v1499 = vpop.f32.mrb[0].mxu0
      %v1500 = vadd.f32 %v1430, %v1499
      %v1501 = vpop.f32.mrb[0].mxu0
      %v1502 = vpop.f32.mrb[0].mxu0
      %v1503 = vadd.f32 %v1430, %v1502
      %v1504 = vpop.f32.mrb[0].mxu0
      %1505 = vmatprep.mubr.bf16.mxu0 %v1343
      %1506 = vmatmul.mubr.bf16.gmra.mrb[0].mxu0 %v1342
      %v1507 = vpop.f32.mrb[0].mxu0
      %v1508 = vadd.f32 %v1430, %v1507
      %v1509 = vpop.f32.mrb[0].mxu0
      %v1510 = vpop.f32.mrb[0].mxu0
      %v1511 = vadd.f32 %v1430, %v1510
      %v1512 = vpop.f32.mrb[0].mxu0
      %1513 = vmatprep.mubr.bf16.mxu0 %v1357
      %1514 = vmatmul.mubr.bf16.gmra.mrb[0].mxu0 %v1356
      %v1515 = vpop.f32.mrb[0].mxu0
      %v1516 = vadd.f32 %v1430, %v1515
      %v1517 = vpop.f32.mrb[0].mxu0
      %v1518 = vpop.f32.mrb[0].mxu0
      %v1519 = vadd.f32 %v1430, %v1518
      %v1520 = vpop.f32.mrb[0].mxu0
      %1521 = vmatprep.mubr.bf16.mxu0 %v1371
      %1522 = vmatmul.mubr.bf16.gmra.mrb[0].mxu0 %v1370
      %v1523 = vpop.f32.mrb[0].mxu0
      %v1524 = vadd.f32 %v1430, %v1523
      %v1525 = vpop.f32.mrb[0].mxu0
      %v1526 = vpop.f32.mrb[0].mxu0
      %v1527 = vadd.f32 %v1430, %v1526
      %v1528 = vpop.f32.mrb[0].mxu0
      %1529 = vmatprep.mubr.bf16.mxu0 %v1385
      %1530 = vmatmul.mubr.bf16.gmra.mrb[0].mxu0 %v1384
      %v1531 = vpop.f32.mrb[0].mxu0
      %v1532 = vadd.f32 %v1430, %v1531
      %v1533 = vpop.f32.mrb[0].mxu0
      %v1534 = vpop.f32.mrb[0].mxu0
      %v1535 = vadd.f32 %v1430, %v1534
      %v1536 = vpop.f32.mrb[0].mxu0
      %1537 = vmatprep.mubr.bf16.mxu0 %v1399
      %1538 = vmatmul.mubr.bf16.gmra.mrb[0].mxu0 %v1398
      %v1539 = vpop.f32.mrb[0].mxu0
      %v1540 = vadd.f32 %v1430, %v1539
      %v1541 = vpop.f32.mrb[0].mxu0
      %v1542 = vpop.f32.mrb[0].mxu0
      %v1543 = vadd.f32 %v1430, %v1542
      %v1544 = vpop.f32.mrb[0].mxu0
      %1545 = vmatprep.mubr.bf16.mxu0 %v1413
      %1546 = vmatmul.mubr.bf16.gmra.mrb[0].mxu0 %v1412
      %v1547 = vpop.f32.mrb[0].mxu0
      %v1548 = vadd.f32 %v1430, %v1547
      %v1549 = vpop.f32.mrb[0].mxu0
      %v1550 = vpop.f32.mrb[0].mxu0
      %v1551 = vadd.f32 %v1430, %v1550
      %v1552 = vpop.f32.mrb[0].mxu0
      %1553 = vdwg.mxu0
      %1554 = vmatprep.subr.bf16.mxu0 0
      %1555 = vmatpush1.bf16.msra.mxu0 %v619
      %1556 = vmatprep.subr.bf16.mxu0 0
      %1557 = vmatpush1.bf16.msra.mxu0 %v620
      %1558 = vmatprep.subr.bf16.mxu0 0
      %1559 = vmatpush1.bf16.msra.mxu0 %v621
      %1560 = vmatprep.subr.bf16.mxu0 0
      %1561 = vmatpush1.bf16.msra.mxu0 %v622
      %1562 = vmatprep.subr.bf16.mxu0 0
      %1563 = vmatpush1.bf16.msra.mxu0 %v623
      %1564 = vmatprep.subr.bf16.mxu0 0
      %1565 = vmatpush1.bf16.msra.mxu0 %v624
      %1566 = vmatprep.subr.bf16.mxu0 0
      %1567 = vmatpush1.bf16.msra.mxu0 %v625
      %1568 = vmatprep.subr.bf16.mxu0 0
      %1569 = vmatpush1.bf16.msra.mxu0 %v626
      %1570 = vmatprep.subr.bf16.mxu0 0
      %1571 = vmatpush1.bf16.msra.mxu0 %v627
      %1572 = vmatprep.subr.bf16.mxu0 0
      %1573 = vmatpush1.bf16.msra.mxu0 %v628
      %1574 = vmatprep.subr.bf16.mxu0 0
      %1575 = vmatpush1.bf16.msra.mxu0 %v629
      %1576 = vmatprep.subr.bf16.mxu0 0
      %1577 = vmatpush1.bf16.msra.mxu0 %v630
      %1578 = vmatprep.subr.bf16.mxu0 0
      %1579 = vmatpush1.bf16.msra.mxu0 %v631
      %1580 = vmatprep.subr.bf16.mxu0 0
      %1581 = vmatpush1.bf16.msra.mxu0 %v632
      %1582 = vmatprep.subr.bf16.mxu0 0
      %1583 = vmatpush1.bf16.msra.mxu0 %v633
      %1584 = vmatprep.subr.bf16.mxu0 0
      %1585 = vmatpush1.bf16.msra.mxu0 %v634
      %1586 = vmatprep.mubr.bf16.mxu0 %v1317
      %1587 = vmatmul.mubr.bf16.gmra.mrb[0].mxu0 %v1316
      %v1588 = vpop.f32.mrb[0].mxu0
      %v1589 = vadd.f32 %v1492, %v1588
      %v1590 = vpop.f32.mrb[0].mxu0
      %v1591 = vpop.f32.mrb[0].mxu0
      %v1592 = vadd.f32 %v1495, %v1591
      %v1593 = vpop.f32.mrb[0].mxu0
      %1594 = vmatprep.mubr.bf16.mxu0 %v1331
      %1595 = vmatmul.mubr.bf16.gmra.mrb[0].mxu0 %v1330
      %v1596 = vpop.f32.mrb[0].mxu0
      %v1597 = vadd.f32 %v1500, %v1596
      %v1598 = vpop.f32.mrb[0].mxu0
      %v1599 = vpop.f32.mrb[0].mxu0
      %v1600 = vadd.f32 %v1503, %v1599
      %v1601 = vpop.f32.mrb[0].mxu0
      %1602 = vmatprep.mubr.bf16.mxu0 %v1345
      %1603 = vmatmul.mubr.bf16.gmra.mrb[0].mxu0 %v1344
      %v1604 = vpop.f32.mrb[0].mxu0
      %v1605 = vadd.f32 %v1508, %v1604
      %v1606 = vpop.f32.mrb[0].mxu0
      %v1607 = vpop.f32.mrb[0].mxu0
      %v1608 = vadd.f32 %v1511, %v1607
      %v1609 = vpop.f32.mrb[0].mxu0
      %1610 = vmatprep.mubr.bf16.mxu0 %v1359
      %1611 = vmatmul.mubr.bf16.gmra.mrb[0].mxu0 %v1358
      %v1612 = vpop.f32.mrb[0].mxu0
      %v1613 = vadd.f32 %v1516, %v1612
      %v1614 = vpop.f32.mrb[0].mxu0
      %v1615 = vpop.f32.mrb[0].mxu0
      %v1616 = vadd.f32 %v1519, %v1615
      %v1617 = vpop.f32.mrb[0].mxu0
      %1618 = vmatprep.mubr.bf16.mxu0 %v1373
      %1619 = vmatmul.mubr.bf16.gmra.mrb[0].mxu0 %v1372
      %v1620 = vpop.f32.mrb[0].mxu0
      %v1621 = vadd.f32 %v1524, %v1620
      %v1622 = vpop.f32.mrb[0].mxu0
      %v1623 = vpop.f32.mrb[0].mxu0
      %v1624 = vadd.f32 %v1527, %v1623
      %v1625 = vpop.f32.mrb[0].mxu0
      %1626 = vmatprep.mubr.bf16.mxu0 %v1387
      %1627 = vmatmul.mubr.bf16.gmra.mrb[0].mxu0 %v1386
      %v1628 = vpop.f32.mrb[0].mxu0
      %v1629 = vadd.f32 %v1532, %v1628
      %v1630 = vpop.f32.mrb[0].mxu0
      %v1631 = vpop.f32.mrb[0].mxu0
      %v1632 = vadd.f32 %v1535, %v1631
      %v1633 = vpop.f32.mrb[0].mxu0
      %1634 = vmatprep.mubr.bf16.mxu0 %v1401
      %1635 = vmatmul.mubr.bf16.gmra.mrb[0].mxu0 %v1400
      %v1636 = vpop.f32.mrb[0].mxu0
      %v1637 = vadd.f32 %v1540, %v1636
      %v1638 = vpop.f32.mrb[0].mxu0
      %v1639 = vpop.f32.mrb[0].mxu0
      %v1640 = vadd.f32 %v1543, %v1639
      %v1641 = vpop.f32.mrb[0].mxu0
      %1642 = vmatprep.mubr.bf16.mxu0 %v1415
      %1643 = vmatmul.mubr.bf16.gmra.mrb[0].mxu0 %v1414
      %v1644 = vpop.f32.mrb[0].mxu0
      %v1645 = vadd.f32 %v1548, %v1644
      %v1646 = vpop.f32.mrb[0].mxu0
      %v1647 = vpop.f32.mrb[0].mxu0
      %v1648 = vadd.f32 %v1551, %v1647
      %v1649 = vpop.f32.mrb[0].mxu0
      %1650 = vdwg.mxu0
      %1651 = vmatprep.subr.bf16.mxu0 0
      %1652 = vmatpush1.bf16.msra.mxu0 %v635
      %1653 = vmatprep.subr.bf16.mxu0 0
      %1654 = vmatpush1.bf16.msra.mxu0 %v636
      %1655 = vmatprep.subr.bf16.mxu0 0
      %1656 = vmatpush1.bf16.msra.mxu0 %v637
      %1657 = vmatprep.subr.bf16.mxu0 0
      %1658 = vmatpush1.bf16.msra.mxu0 %v638
      %1659 = vmatprep.subr.bf16.mxu0 0
      %1660 = vmatpush1.bf16.msra.mxu0 %v639
      %1661 = vmatprep.subr.bf16.mxu0 0
      %1662 = vmatpush1.bf16.msra.mxu0 %v640
      %1663 = vmatprep.subr.bf16.mxu0 0
      %1664 = vmatpush1.bf16.msra.mxu0 %v641
      %1665 = vmatprep.subr.bf16.mxu0 0
      %1666 = vmatpush1.bf16.msra.mxu0 %v642
      %1667 = vmatprep.subr.bf16.mxu0 0
      %1668 = vmatpush1.bf16.msra.mxu0 %v643
      %1669 = vmatprep.subr.bf16.mxu0 0
      %1670 = vmatpush1.bf16.msra.mxu0 %v644
      %1671 = vmatprep.subr.bf16.mxu0 0
      %1672 = vmatpush1.bf16.msra.mxu0 %v645
      %1673 = vmatprep.subr.bf16.mxu0 0
      %1674 = vmatpush1.bf16.msra.mxu0 %v646
      %1675 = vmatprep.subr.bf16.mxu0 0
      %1676 = vmatpush1.bf16.msra.mxu0 %v647
      %1677 = vmatprep.subr.bf16.mxu0 0
      %1678 = vmatpush1.bf16.msra.mxu0 %v648
      %1679 = vmatprep.subr.bf16.mxu0 0
      %1680 = vmatpush1.bf16.msra.mxu0 %v649
      %1681 = vmatprep.subr.bf16.mxu0 0
      %1682 = vmatpush1.bf16.msra.mxu0 %v650
      %1683 = vmatprep.mubr.bf16.mxu0 %v1319
      %1684 = vmatmul.mubr.bf16.gmra.mrb[0].mxu0 %v1318
      %v1685 = vpop.f32.mrb[0].mxu0
      %v1686 = vadd.f32 %v1589, %v1685
      %v1687 = vpop.f32.mrb[0].mxu0
      %v1688 = vpop.f32.mrb[0].mxu0
      %v1689 = vadd.f32 %v1592, %v1688
      %v1690 = vpop.f32.mrb[0].mxu0
      %1691 = vmatprep.mubr.bf16.mxu0 %v1333
      %1692 = vmatmul.mubr.bf16.gmra.mrb[0].mxu0 %v1332
      %v1693 = vpop.f32.mrb[0].mxu0
      %v1694 = vadd.f32 %v1597, %v1693
      %v1695 = vpop.f32.mrb[0].mxu0
      %v1696 = vpop.f32.mrb[0].mxu0
      %v1697 = vadd.f32 %v1600, %v1696
      %v1698 = vpop.f32.mrb[0].mxu0
      %1699 = vmatprep.mubr.bf16.mxu0 %v1347
      %1700 = vmatmul.mubr.bf16.gmra.mrb[0].mxu0 %v1346
      %v1701 = vpop.f32.mrb[0].mxu0
      %v1702 = vadd.f32 %v1605, %v1701
      %v1703 = vpop.f32.mrb[0].mxu0
      %v1704 = vpop.f32.mrb[0].mxu0
      %v1705 = vadd.f32 %v1608, %v1704
      %v1706 = vpop.f32.mrb[0].mxu0
      %1707 = vmatprep.mubr.bf16.mxu0 %v1361
      %1708 = vmatmul.mubr.bf16.gmra.mrb[0].mxu0 %v1360
      %v1709 = vpop.f32.mrb[0].mxu0
      %v1710 = vadd.f32 %v1613, %v1709
      %v1711 = vpop.f32.mrb[0].mxu0
      %v1712 = vpop.f32.mrb[0].mxu0
      %v1713 = vadd.f32 %v1616, %v1712
      %v1714 = vpop.f32.mrb[0].mxu0
      %1715 = vmatprep.mubr.bf16.mxu0 %v1375
      %1716 = vmatmul.mubr.bf16.gmra.mrb[0].mxu0 %v1374
      %v1717 = vpop.f32.mrb[0].mxu0
      %v1718 = vadd.f32 %v1621, %v1717
      %v1719 = vpop.f32.mrb[0].mxu0
      %v1720 = vpop.f32.mrb[0].mxu0
      %v1721 = vadd.f32 %v1624, %v1720
      %v1722 = vpop.f32.mrb[0].mxu0
      %1723 = vmatprep.mubr.bf16.mxu0 %v1389
      %1724 = vmatmul.mubr.bf16.gmra.mrb[0].mxu0 %v1388
      %v1725 = vpop.f32.mrb[0].mxu0
      %v1726 = vadd.f32 %v1629, %v1725
      %v1727 = vpop.f32.mrb[0].mxu0
      %v1728 = vpop.f32.mrb[0].mxu0
      %v1729 = vadd.f32 %v1632, %v1728
      %v1730 = vpop.f32.mrb[0].mxu0
      %1731 = vmatprep.mubr.bf16.mxu0 %v1403
      %1732 = vmatmul.mubr.bf16.gmra.mrb[0].mxu0 %v1402
      %v1733 = vpop.f32.mrb[0].mxu0
      %v1734 = vadd.f32 %v1637, %v1733
      %v1735 = vpop.f32.mrb[0].mxu0
      %v1736 = vpop.f32.mrb[0].mxu0
      %v1737 = vadd.f32 %v1640, %v1736
      %v1738 = vpop.f32.mrb[0].mxu0
      %1739 = vmatprep.mubr.bf16.mxu0 %v1417
      %1740 = vmatmul.mubr.bf16.gmra.mrb[0].mxu0 %v1416
      %v1741 = vpop.f32.mrb[0].mxu0
      %v1742 = vadd.f32 %v1645, %v1741
      %v1743 = vpop.f32.mrb[0].mxu0
      %v1744 = vpop.f32.mrb[0].mxu0
      %v1745 = vadd.f32 %v1648, %v1744
      %v1746 = vpop.f32.mrb[0].mxu0
      %1747 = vdwg.mxu0
      %1748 = vmatprep.subr.bf16.mxu0 0
      %1749 = vmatpush1.bf16.msra.mxu0 %v651
      %1750 = vmatprep.subr.bf16.mxu0 0
      %1751 = vmatpush1.bf16.msra.mxu0 %v652
      %1752 = vmatprep.subr.bf16.mxu0 0
      %1753 = vmatpush1.bf16.msra.mxu0 %v653
      %1754 = vmatprep.subr.bf16.mxu0 0
      %1755 = vmatpush1.bf16.msra.mxu0 %v654
      %1756 = vmatprep.subr.bf16.mxu0 0
      %1757 = vmatpush1.bf16.msra.mxu0 %v655
      %1758 = vmatprep.subr.bf16.mxu0 0
      %1759 = vmatpush1.bf16.msra.mxu0 %v656
      %1760 = vmatprep.subr.bf16.mxu0 0
      %1761 = vmatpush1.bf16.msra.mxu0 %v657
      %1762 = vmatprep.subr.bf16.mxu0 0
      %1763 = vmatpush1.bf16.msra.mxu0 %v658
      %1764 = vmatprep.subr.bf16.mxu0 0
      %1765 = vmatpush1.bf16.msra.mxu0 %v659
      %1766 = vmatprep.subr.bf16.mxu0 0
      %1767 = vmatpush1.bf16.msra.mxu0 %v660
      %1768 = vmatprep.subr.bf16.mxu0 0
      %1769 = vmatpush1.bf16.msra.mxu0 %v661
      %1770 = vmatprep.subr.bf16.mxu0 0
      %1771 = vmatpush1.bf16.msra.mxu0 %v662
      %1772 = vmatprep.subr.bf16.mxu0 0
      %1773 = vmatpush1.bf16.msra.mxu0 %v663
      %1774 = vmatprep.subr.bf16.mxu0 0
      %1775 = vmatpush1.bf16.msra.mxu0 %v664
      %1776 = vmatprep.subr.bf16.mxu0 0
      %1777 = vmatpush1.bf16.msra.mxu0 %v665
      %1778 = vmatprep.subr.bf16.mxu0 0
      %1779 = vmatpush1.bf16.msra.mxu0 %v666
      %1780 = vmatprep.mubr.bf16.mxu0 %v1321
      %1781 = vmatmul.mubr.bf16.gmra.mrb[0].mxu0 %v1320
      %v1782 = vpop.f32.mrb[0].mxu0
      %v1783 = vadd.f32 %v1686, %v1782
      %v1784 = vpop.f32.mrb[0].mxu0
      %v1785 = vpop.f32.mrb[0].mxu0
      %v1786 = vadd.f32 %v1689, %v1785
      %v1787 = vpop.f32.mrb[0].mxu0
      %1788 = vmatprep.mubr.bf16.mxu0 %v1335
      %1789 = vmatmul.mubr.bf16.gmra.mrb[0].mxu0 %v1334
      %v1790 = vpop.f32.mrb[0].mxu0
      %v1791 = vadd.f32 %v1694, %v1790
      %v1792 = vpop.f32.mrb[0].mxu0
      %v1793 = vpop.f32.mrb[0].mxu0
      %v1794 = vadd.f32 %v1697, %v1793
      %v1795 = vpop.f32.mrb[0].mxu0
      %1796 = vmatprep.mubr.bf16.mxu0 %v1349
      %1797 = vmatmul.mubr.bf16.gmra.mrb[0].mxu0 %v1348
      %v1798 = vpop.f32.mrb[0].mxu0
      %v1799 = vadd.f32 %v1702, %v1798
      %v1800 = vpop.f32.mrb[0].mxu0
      %v1801 = vpop.f32.mrb[0].mxu0
      %v1802 = vadd.f32 %v1705, %v1801
      %v1803 = vpop.f32.mrb[0].mxu0
      %1804 = vmatprep.mubr.bf16.mxu0 %v1363
      %1805 = vmatmul.mubr.bf16.gmra.mrb[0].mxu0 %v1362
      %v1806 = vpop.f32.mrb[0].mxu0
      %v1807 = vadd.f32 %v1710, %v1806
      %v1808 = vpop.f32.mrb[0].mxu0
      %v1809 = vpop.f32.mrb[0].mxu0
      %v1810 = vadd.f32 %v1713, %v1809
      %v1811 = vpop.f32.mrb[0].mxu0
      %1812 = vmatprep.mubr.bf16.mxu0 %v1377
      %1813 = vmatmul.mubr.bf16.gmra.mrb[0].mxu0 %v1376
      %v1814 = vpop.f32.mrb[0].mxu0
      %v1815 = vadd.f32 %v1718, %v1814
      %v1816 = vpop.f32.mrb[0].mxu0
      %v1817 = vpop.f32.mrb[0].mxu0
      %v1818 = vadd.f32 %v1721, %v1817
      %v1819 = vpop.f32.mrb[0].mxu0
      %1820 = vmatprep.mubr.bf16.mxu0 %v1391
      %1821 = vmatmul.mubr.bf16.gmra.mrb[0].mxu0 %v1390
      %v1822 = vpop.f32.mrb[0].mxu0
      %v1823 = vadd.f32 %v1726, %v1822
      %v1824 = vpop.f32.mrb[0].mxu0
      %v1825 = vpop.f32.mrb[0].mxu0
      %v1826 = vadd.f32 %v1729, %v1825
      %v1827 = vpop.f32.mrb[0].mxu0
      %1828 = vmatprep.mubr.bf16.mxu0 %v1405
      %1829 = vmatmul.mubr.bf16.gmra.mrb[0].mxu0 %v1404
      %v1830 = vpop.f32.mrb[0].mxu0
      %v1831 = vadd.f32 %v1734, %v1830
      %v1832 = vpop.f32.mrb[0].mxu0
      %v1833 = vpop.f32.mrb[0].mxu0
      %v1834 = vadd.f32 %v1737, %v1833
      %v1835 = vpop.f32.mrb[0].mxu0
      %1836 = vmatprep.mubr.bf16.mxu0 %v1419
      %1837 = vmatmul.mubr.bf16.gmra.mrb[0].mxu0 %v1418
      %v1838 = vpop.f32.mrb[0].mxu0
      %v1839 = vadd.f32 %v1742, %v1838
      %v1840 = vpop.f32.mrb[0].mxu0
      %v1841 = vpop.f32.mrb[0].mxu0
      %v1842 = vadd.f32 %v1745, %v1841
      %v1843 = vpop.f32.mrb[0].mxu0
      %1844 = vdwg.mxu0
      %1845 = vmatprep.subr.bf16.mxu0 0
      %1846 = vmatpush1.bf16.msra.mxu0 %v667
      %1847 = vmatprep.subr.bf16.mxu0 0
      %1848 = vmatpush1.bf16.msra.mxu0 %v668
      %1849 = vmatprep.subr.bf16.mxu0 0
      %1850 = vmatpush1.bf16.msra.mxu0 %v669
      %1851 = vmatprep.subr.bf16.mxu0 0
      %1852 = vmatpush1.bf16.msra.mxu0 %v670
      %1853 = vmatprep.subr.bf16.mxu0 0
      %1854 = vmatpush1.bf16.msra.mxu0 %v671
      %1855 = vmatprep.subr.bf16.mxu0 0
      %1856 = vmatpush1.bf16.msra.mxu0 %v672
      %1857 = vmatprep.subr.bf16.mxu0 0
      %1858 = vmatpush1.bf16.msra.mxu0 %v673
      %1859 = vmatprep.subr.bf16.mxu0 0
      %1860 = vmatpush1.bf16.msra.mxu0 %v674
      %1861 = vmatprep.subr.bf16.mxu0 0
      %1862 = vmatpush1.bf16.msra.mxu0 %v675
      %1863 = vmatprep.subr.bf16.mxu0 0
      %1864 = vmatpush1.bf16.msra.mxu0 %v676
      %1865 = vmatprep.subr.bf16.mxu0 0
      %1866 = vmatpush1.bf16.msra.mxu0 %v677
      %1867 = vmatprep.subr.bf16.mxu0 0
      %1868 = vmatpush1.bf16.msra.mxu0 %v678
      %1869 = vmatprep.subr.bf16.mxu0 0
      %1870 = vmatpush1.bf16.msra.mxu0 %v679
      %1871 = vmatprep.subr.bf16.mxu0 0
      %1872 = vmatpush1.bf16.msra.mxu0 %v680
      %1873 = vmatprep.subr.bf16.mxu0 0
      %1874 = vmatpush1.bf16.msra.mxu0 %v681
      %1875 = vmatprep.subr.bf16.mxu0 0
      %1876 = vmatpush1.bf16.msra.mxu0 %v682
      %1877 = vmatprep.mubr.bf16.mxu0 %v1323
      %1878 = vmatmul.mubr.bf16.gmra.mrb[0].mxu0 %v1322
      %v1879 = vpop.f32.mrb[0].mxu0
      %v1880 = vadd.f32 %v1783, %v1879
      %v1881 = vpop.f32.mrb[0].mxu0
      %v1882 = vpop.f32.mrb[0].mxu0
      %v1883 = vadd.f32 %v1786, %v1882
      %v1884 = vpop.f32.mrb[0].mxu0
      %1885 = vmatprep.mubr.bf16.mxu0 %v1337
      %1886 = vmatmul.mubr.bf16.gmra.mrb[0].mxu0 %v1336
      %v1887 = vpop.f32.mrb[0].mxu0
      %v1888 = vadd.f32 %v1791, %v1887
      %v1889 = vpop.f32.mrb[0].mxu0
      %v1890 = vpop.f32.mrb[0].mxu0
      %v1891 = vadd.f32 %v1794, %v1890
      %v1892 = vpop.f32.mrb[0].mxu0
      %1893 = vmatprep.mubr.bf16.mxu0 %v1351
      %1894 = vmatmul.mubr.bf16.gmra.mrb[0].mxu0 %v1350
      %v1895 = vpop.f32.mrb[0].mxu0
      %v1896 = vadd.f32 %v1799, %v1895
      %v1897 = vpop.f32.mrb[0].mxu0
      %v1898 = vpop.f32.mrb[0].mxu0
      %v1899 = vadd.f32 %v1802, %v1898
      %v1900 = vpop.f32.mrb[0].mxu0
      %1901 = vmatprep.mubr.bf16.mxu0 %v1365
      %1902 = vmatmul.mubr.bf16.gmra.mrb[0].mxu0 %v1364
      %v1903 = vpop.f32.mrb[0].mxu0
      %v1904 = vadd.f32 %v1807, %v1903
      %v1905 = vpop.f32.mrb[0].mxu0
      %v1906 = vpop.f32.mrb[0].mxu0
      %v1907 = vadd.f32 %v1810, %v1906
      %v1908 = vpop.f32.mrb[0].mxu0
      %1909 = vmatprep.mubr.bf16.mxu0 %v1379
      %1910 = vmatmul.mubr.bf16.gmra.mrb[0].mxu0 %v1378
      %v1911 = vpop.f32.mrb[0].mxu0
      %v1912 = vadd.f32 %v1815, %v1911
      %v1913 = vpop.f32.mrb[0].mxu0
      %v1914 = vpop.f32.mrb[0].mxu0
      %v1915 = vadd.f32 %v1818, %v1914
      %v1916 = vpop.f32.mrb[0].mxu0
      %1917 = vmatprep.mubr.bf16.mxu0 %v1393
      %1918 = vmatmul.mubr.bf16.gmra.mrb[0].mxu0 %v1392
      %v1919 = vpop.f32.mrb[0].mxu0
      %v1920 = vadd.f32 %v1823, %v1919
      %v1921 = vpop.f32.mrb[0].mxu0
      %v1922 = vpop.f32.mrb[0].mxu0
      %v1923 = vadd.f32 %v1826, %v1922
      %v1924 = vpop.f32.mrb[0].mxu0
      %1925 = vmatprep.mubr.bf16.mxu0 %v1407
      %1926 = vmatmul.mubr.bf16.gmra.mrb[0].mxu0 %v1406
      %v1927 = vpop.f32.mrb[0].mxu0
      %v1928 = vadd.f32 %v1831, %v1927
      %v1929 = vpop.f32.mrb[0].mxu0
      %v1930 = vpop.f32.mrb[0].mxu0
      %v1931 = vadd.f32 %v1834, %v1930
      %v1932 = vpop.f32.mrb[0].mxu0
      %1933 = vmatprep.mubr.bf16.mxu0 %v1421
      %1934 = vmatmul.mubr.bf16.gmra.mrb[0].mxu0 %v1420
      %v1935 = vpop.f32.mrb[0].mxu0
      %v1936 = vadd.f32 %v1839, %v1935
      %v1937 = vpop.f32.mrb[0].mxu0
      %v1938 = vpop.f32.mrb[0].mxu0
      %v1939 = vadd.f32 %v1842, %v1938
      %v1940 = vpop.f32.mrb[0].mxu0
      %1941 = vdwg.mxu0
      %1942 = vmatprep.subr.bf16.mxu0 0
      %1943 = vmatpush1.bf16.msra.mxu0 %v683
      %1944 = vmatprep.subr.bf16.mxu0 0
      %1945 = vmatpush1.bf16.msra.mxu0 %v684
      %1946 = vmatprep.subr.bf16.mxu0 0
      %1947 = vmatpush1.bf16.msra.mxu0 %v685
      %1948 = vmatprep.subr.bf16.mxu0 0
      %1949 = vmatpush1.bf16.msra.mxu0 %v686
      %1950 = vmatprep.subr.bf16.mxu0 0
      %1951 = vmatpush1.bf16.msra.mxu0 %v687
      %1952 = vmatprep.subr.bf16.mxu0 0
      %1953 = vmatpush1.bf16.msra.mxu0 %v688
      %1954 = vmatprep.subr.bf16.mxu0 0
      %1955 = vmatpush1.bf16.msra.mxu0 %v689
      %1956 = vmatprep.subr.bf16.mxu0 0
      %1957 = vmatpush1.bf16.msra.mxu0 %v690
      %1958 = vmatprep.subr.bf16.mxu0 0
      %1959 = vmatpush1.bf16.msra.mxu0 %v691
      %1960 = vmatprep.subr.bf16.mxu0 0
      %1961 = vmatpush1.bf16.msra.mxu0 %v692
      %1962 = vmatprep.subr.bf16.mxu0 0
      %1963 = vmatpush1.bf16.msra.mxu0 %v693
      %1964 = vmatprep.subr.bf16.mxu0 0
      %1965 = vmatpush1.bf16.msra.mxu0 %v694
      %1966 = vmatprep.subr.bf16.mxu0 0
      %1967 = vmatpush1.bf16.msra.mxu0 %v695
      %1968 = vmatprep.subr.bf16.mxu0 0
      %1969 = vmatpush1.bf16.msra.mxu0 %v696
      %1970 = vmatprep.subr.bf16.mxu0 0
      %1971 = vmatpush1.bf16.msra.mxu0 %v697
      %1972 = vmatprep.subr.bf16.mxu0 0
      %1973 = vmatpush1.bf16.msra.mxu0 %v698
      %1974 = vmatprep.mubr.bf16.mxu0 %v1325
      %1975 = vmatmul.mubr.bf16.gmra.mrb[0].mxu0 %v1324
      %v1976 = vpop.f32.mrb[0].mxu0
      %v1977 = vadd.f32 %v1880, %v1976
      %v1978 = vpop.f32.mrb[0].mxu0
      %v1979 = vpop.f32.mrb[0].mxu0
      %v1980 = vadd.f32 %v1883, %v1979
      %v1981 = vpop.f32.mrb[0].mxu0
      %1982 = vmatprep.mubr.bf16.mxu0 %v1339
      %1983 = vmatmul.mubr.bf16.gmra.mrb[0].mxu0 %v1338
      %v1984 = vpop.f32.mrb[0].mxu0
      %v1985 = vadd.f32 %v1888, %v1984
      %v1986 = vpop.f32.mrb[0].mxu0
      %v1987 = vpop.f32.mrb[0].mxu0
      %v1988 = vadd.f32 %v1891, %v1987
      %v1989 = vpop.f32.mrb[0].mxu0
      %1990 = vmatprep.mubr.bf16.mxu0 %v1353
      %1991 = vmatmul.mubr.bf16.gmra.mrb[0].mxu0 %v1352
      %v1992 = vpop.f32.mrb[0].mxu0
      %v1993 = vadd.f32 %v1896, %v1992
      %v1994 = vpop.f32.mrb[0].mxu0
      %v1995 = vpop.f32.mrb[0].mxu0
      %v1996 = vadd.f32 %v1899, %v1995
      %v1997 = vpop.f32.mrb[0].mxu0
      %1998 = vmatprep.mubr.bf16.mxu0 %v1367
      %1999 = vmatmul.mubr.bf16.gmra.mrb[0].mxu0 %v1366
      %v2000 = vpop.f32.mrb[0].mxu0
      %v2001 = vadd.f32 %v1904, %v2000
      %v2002 = vpop.f32.mrb[0].mxu0
      %v2003 = vpop.f32.mrb[0].mxu0
      %v2004 = vadd.f32 %v1907, %v2003
      %v2005 = vpop.f32.mrb[0].mxu0
      %2006 = vmatprep.mubr.bf16.mxu0 %v1381
      %2007 = vmatmul.mubr.bf16.gmra.mrb[0].mxu0 %v1380
      %v2008 = vpop.f32.mrb[0].mxu0
      %v2009 = vadd.f32 %v1912, %v2008
      %v2010 = vpop.f32.mrb[0].mxu0
      %v2011 = vpop.f32.mrb[0].mxu0
      %v2012 = vadd.f32 %v1915, %v2011
      %v2013 = vpop.f32.mrb[0].mxu0
      %2014 = vmatprep.mubr.bf16.mxu0 %v1395
      %2015 = vmatmul.mubr.bf16.gmra.mrb[0].mxu0 %v1394
      %v2016 = vpop.f32.mrb[0].mxu0
      %v2017 = vadd.f32 %v1920, %v2016
      %v2018 = vpop.f32.mrb[0].mxu0
      %v2019 = vpop.f32.mrb[0].mxu0
      %v2020 = vadd.f32 %v1923, %v2019
      %v2021 = vpop.f32.mrb[0].mxu0
      %2022 = vmatprep.mubr.bf16.mxu0 %v1409
      %2023 = vmatmul.mubr.bf16.gmra.mrb[0].mxu0 %v1408
      %v2024 = vpop.f32.mrb[0].mxu0
      %v2025 = vadd.f32 %v1928, %v2024
      %v2026 = vpop.f32.mrb[0].mxu0
      %v2027 = vpop.f32.mrb[0].mxu0
      %v2028 = vadd.f32 %v1931, %v2027
      %v2029 = vpop.f32.mrb[0].mxu0
      %2030 = vmatprep.mubr.bf16.mxu0 %v1423
      %2031 = vmatmul.mubr.bf16.gmra.mrb[0].mxu0 %v1422
      %v2032 = vpop.f32.mrb[0].mxu0
      %v2033 = vadd.f32 %v1936, %v2032
      %v2034 = vpop.f32.mrb[0].mxu0
      %v2035 = vpop.f32.mrb[0].mxu0
      %v2036 = vadd.f32 %v1939, %v2035
      %v2037 = vpop.f32.mrb[0].mxu0
      %2038 = vdwg.mxu0
      %2039 = vmatprep.subr.bf16.mxu0 0
      %2040 = vmatpush1.bf16.msra.mxu0 %v699
      %2041 = vmatprep.subr.bf16.mxu0 0
      %2042 = vmatpush1.bf16.msra.mxu0 %v700
      %2043 = vmatprep.subr.bf16.mxu0 0
      %2044 = vmatpush1.bf16.msra.mxu0 %v701
      %2045 = vmatprep.subr.bf16.mxu0 0
      %2046 = vmatpush1.bf16.msra.mxu0 %v702
      %2047 = vmatprep.subr.bf16.mxu0 0
      %2048 = vmatpush1.bf16.msra.mxu0 %v703
      %2049 = vmatprep.subr.bf16.mxu0 0
      %2050 = vmatpush1.bf16.msra.mxu0 %v704
      %2051 = vmatprep.subr.bf16.mxu0 0
      %2052 = vmatpush1.bf16.msra.mxu0 %v705
      %2053 = vmatprep.subr.bf16.mxu0 0
      %2054 = vmatpush1.bf16.msra.mxu0 %v706
      %2055 = vmatprep.subr.bf16.mxu0 0
      %2056 = vmatpush1.bf16.msra.mxu0 %v707
      %2057 = vmatprep.subr.bf16.mxu0 0
      %2058 = vmatpush1.bf16.msra.mxu0 %v708
      %2059 = vmatprep.subr.bf16.mxu0 0
      %2060 = vmatpush1.bf16.msra.mxu0 %v709
      %2061 = vmatprep.subr.bf16.mxu0 0
      %2062 = vmatpush1.bf16.msra.mxu0 %v710
      %2063 = vmatprep.subr.bf16.mxu0 0
      %2064 = vmatpush1.bf16.msra.mxu0 %v711
      %2065 = vmatprep.subr.bf16.mxu0 0
      %2066 = vmatpush1.bf16.msra.mxu0 %v712
      %2067 = vmatprep.subr.bf16.mxu0 0
      %2068 = vmatpush1.bf16.msra.mxu0 0
      %2069 = vmatprep.subr.bf16.mxu0 0
      %2070 = vmatpush1.bf16.msra.mxu0 0
      %2071 = vmatprep.mubr.bf16.mxu0 %v1434
      %2072 = vmatmul.mubr.bf16.gmra.mrb[0].mxu0 %v1326
      %v2073 = vpop.f32.mrb[0].mxu0
      %v2074 = vadd.f32 %v1977, %v2073
      %v2075 = vpop.f32.mrb[0].mxu0
      %v2076 = vpop.f32.mrb[0].mxu0
      %v2077 = vadd.f32 %v1980, %v2076
      %v2078 = vpop.f32.mrb[0].mxu0
      %2079 = vmatprep.mubr.bf16.mxu0 %v1437
      %2080 = vmatmul.mubr.bf16.gmra.mrb[0].mxu0 %v1340
      %v2081 = vpop.f32.mrb[0].mxu0
      %v2082 = vadd.f32 %v1985, %v2081
      %v2083 = vpop.f32.mrb[0].mxu0
      %v2084 = vpop.f32.mrb[0].mxu0
      %v2085 = vadd.f32 %v1988, %v2084
      %v2086 = vpop.f32.mrb[0].mxu0
      %2087 = vmatprep.mubr.bf16.mxu0 %v1440
      %2088 = vmatmul.mubr.bf16.gmra.mrb[0].mxu0 %v1354
      %v2089 = vpop.f32.mrb[0].mxu0
      %v2090 = vadd.f32 %v1993, %v2089
      %v2091 = vpop.f32.mrb[0].mxu0
      %v2092 = vpop.f32.mrb[0].mxu0
      %v2093 = vadd.f32 %v1996, %v2092
      %v2094 = vpop.f32.mrb[0].mxu0
      %2095 = vmatprep.mubr.bf16.mxu0 %v1443
      %2096 = vmatmul.mubr.bf16.gmra.mrb[0].mxu0 %v1368
      %v2097 = vpop.f32.mrb[0].mxu0
      %v2098 = vadd.f32 %v2001, %v2097
      %v2099 = vpop.f32.mrb[0].mxu0
      %v2100 = vpop.f32.mrb[0].mxu0
      %v2101 = vadd.f32 %v2004, %v2100
      %v2102 = vpop.f32.mrb[0].mxu0
      %2103 = vmatprep.mubr.bf16.mxu0 %v1446
      %2104 = vmatmul.mubr.bf16.gmra.mrb[0].mxu0 %v1382
      %v2105 = vpop.f32.mrb[0].mxu0
      %v2106 = vadd.f32 %v2009, %v2105
      %v2107 = vpop.f32.mrb[0].mxu0
      %v2108 = vpop.f32.mrb[0].mxu0
      %v2109 = vadd.f32 %v2012, %v2108
      %v2110 = vpop.f32.mrb[0].mxu0
      %2111 = vmatprep.mubr.bf16.mxu0 %v1449
      %2112 = vmatmul.mubr.bf16.gmra.mrb[0].mxu0 %v1396
      %v2113 = vpop.f32.mrb[0].mxu0
      %v2114 = vadd.f32 %v2017, %v2113
      %v2115 = vpop.f32.mrb[0].mxu0
      %v2116 = vpop.f32.mrb[0].mxu0
      %v2117 = vadd.f32 %v2020, %v2116
      %v2118 = vpop.f32.mrb[0].mxu0
      %2119 = vmatprep.mubr.bf16.mxu0 %v1452
      %2120 = vmatmul.mubr.bf16.gmra.mrb[0].mxu0 %v1410
      %v2121 = vpop.f32.mrb[0].mxu0
      %v2122 = vadd.f32 %v2025, %v2121
      %v2123 = vpop.f32.mrb[0].mxu0
      %v2124 = vpop.f32.mrb[0].mxu0
      %v2125 = vadd.f32 %v2028, %v2124
      %v2126 = vpop.f32.mrb[0].mxu0
      %2127 = vmatprep.mubr.bf16.mxu0 %v1455
      %2128 = vmatmul.mubr.bf16.gmra.mrb[0].mxu0 %v1424
      %v2129 = vpop.f32.mrb[0].mxu0
      %v2130 = vadd.f32 %v2033, %v2129
      %v2131 = vpop.f32.mrb[0].mxu0
      %v2132 = vpop.f32.mrb[0].mxu0
      %v2133 = vadd.f32 %v2036, %v2132
      %v2134 = vpop.f32.mrb[0].mxu0
      %2135 = vdwg.mxu0
      %v2136 = vtanh.pop %v2074
      %v2137 = vtanh.pop %v2077
      %v2138 = vtanh.pop %v2082
      %v2139 = vtanh.pop %v2085
      %v2140 = vtanh.pop %v2090
      %v2141 = vtanh.pop %v2093
      %v2142 = vtanh.pop %v2098
      %v2143 = vtanh.pop %v2101
      %v2144 = vtanh.pop %v2106
      %v2145 = vtanh.pop %v2109
      %v2146 = vtanh.pop %v2114
      %v2147 = vtanh.pop %v2117
      %v2148 = vtanh.pop %v2122
      %v2149 = vtanh.pop %v2125
      %v2150 = vtanh.pop %v2130
      %v2151 = vtanh.pop %v2133
      %v2152 = vpack.c.bf16 %v2137, %v2136
      %v2153 = vpack.c.bf16 %v2139, %v2138
      %v2154 = vpack.c.bf16 %v2141, %v2140
      %v2155 = vpack.c.bf16 %v2143, %v2142
      %v2156 = vpack.c.bf16 %v2145, %v2144
      %v2157 = vpack.c.bf16 %v2147, %v2146
      %v2158 = vpack.c.bf16 %v2149, %v2148
      %v2159 = vpack.c.bf16 %v2151, %v2150
      %v2161 = vlaneseq
      %v2162 = vshrl.u32 %v2161, 7
      %v2163 = vsub.s32 0, %v2162
      %v2164 = vrot.slane %v1086, %v2163
      %2166 = vmatprep.subr.bf16.mxu0 0
      %2167 = vmatpush1.bf16.msra.mxu0 %v729
      %2168 = vmatprep.subr.bf16.mxu0 0
      %2169 = vmatpush1.bf16.msra.mxu0 %v730
      %2170 = vmatprep.subr.bf16.mxu0 0
      %2171 = vmatpush1.bf16.msra.mxu0 %v731
      %2172 = vmatprep.subr.bf16.mxu0 0
      %2173 = vmatpush1.bf16.msra.mxu0 %v732
      %2174 = vmatprep.subr.bf16.mxu0 0
      %2175 = vmatpush1.bf16.msra.mxu0 %v733
      %2176 = vmatprep.subr.bf16.mxu0 0
      %2177 = vmatpush1.bf16.msra.mxu0 %v734
      %2178 = vmatprep.subr.bf16.mxu0 0
      %2179 = vmatpush1.bf16.msra.mxu0 %v735
      %2180 = vmatprep.subr.bf16.mxu0 0
      %2181 = vmatpush1.bf16.msra.mxu0 %v736
      %2182 = vmatprep.subr.bf16.mxu0 0
      %2183 = vmatpush1.bf16.msra.mxu0 0
      %2184 = vmatprep.subr.bf16.mxu0 0
      %2185 = vmatpush1.bf16.msra.mxu0 0
      %2186 = vmatprep.subr.bf16.mxu0 0
      %2187 = vmatpush1.bf16.msra.mxu0 0
      %2188 = vmatprep.subr.bf16.mxu0 0
      %2189 = vmatpush1.bf16.msra.mxu0 0
      %2190 = vmatprep.subr.bf16.mxu0 0
      %2191 = vmatpush1.bf16.msra.mxu0 0
      %2192 = vmatprep.subr.bf16.mxu0 0
      %2193 = vmatpush1.bf16.msra.mxu0 0
      %2194 = vmatprep.subr.bf16.mxu0 0
      %2195 = vmatpush1.bf16.msra.mxu0 0
      %2196 = vmatprep.subr.bf16.mxu0 0
      %2197 = vmatpush1.bf16.msra.mxu0 0
      %2198 = vmatprep.mubr.bf16.mxu0 0
      %2199 = vmatmul.mubr.bf16.gmra.mrb[0].mxu0 %v2152
      %v2200 = vpop.f32.mrb[0].mxu0
      %v2201 = vadd.f32 %v2164, %v2200
      %v2202 = vpop.f32.mrb[0].mxu0
      %v2203 = vpop.f32.mrb[0].mxu0
      %v2204 = vadd.f32 %v2164, %v2203
      %v2205 = vpop.f32.mrb[0].mxu0
      %2206 = vmatprep.mubr.bf16.mxu0 0
      %2207 = vmatmul.mubr.bf16.gmra.mrb[0].mxu0 %v2153
      %v2208 = vpop.f32.mrb[0].mxu0
      %v2209 = vadd.f32 %v2164, %v2208
      %v2210 = vpop.f32.mrb[0].mxu0
      %v2211 = vpop.f32.mrb[0].mxu0
      %v2212 = vadd.f32 %v2164, %v2211
      %v2213 = vpop.f32.mrb[0].mxu0
      %2214 = vmatprep.mubr.bf16.mxu0 0
      %2215 = vmatmul.mubr.bf16.gmra.mrb[0].mxu0 %v2154
      %v2216 = vpop.f32.mrb[0].mxu0
      %v2217 = vadd.f32 %v2164, %v2216
      %v2218 = vpop.f32.mrb[0].mxu0
      %v2219 = vpop.f32.mrb[0].mxu0
      %v2220 = vadd.f32 %v2164, %v2219
      %v2221 = vpop.f32.mrb[0].mxu0
      %2222 = vmatprep.mubr.bf16.mxu0 0
      %2223 = vmatmul.mubr.bf16.gmra.mrb[0].mxu0 %v2155
      %v2224 = vpop.f32.mrb[0].mxu0
      %v2225 = vadd.f32 %v2164, %v2224
      %v2226 = vpop.f32.mrb[0].mxu0
      %v2227 = vpop.f32.mrb[0].mxu0
      %v2228 = vadd.f32 %v2164, %v2227
      %v2229 = vpop.f32.mrb[0].mxu0
      %2230 = vmatprep.mubr.bf16.mxu0 0
      %2231 = vmatmul.mubr.bf16.gmra.mrb[0].mxu0 %v2156
      %v2232 = vpop.f32.mrb[0].mxu0
      %v2233 = vadd.f32 %v2164, %v2232
      %v2234 = vpop.f32.mrb[0].mxu0
      %v2235 = vpop.f32.mrb[0].mxu0
      %v2236 = vadd.f32 %v2164, %v2235
      %v2237 = vpop.f32.mrb[0].mxu0
      %2238 = vmatprep.mubr.bf16.mxu0 0
      %2239 = vmatmul.mubr.bf16.gmra.mrb[0].mxu0 %v2157
      %v2240 = vpop.f32.mrb[0].mxu0
      %v2241 = vadd.f32 %v2164, %v2240
      %v2242 = vpop.f32.mrb[0].mxu0
      %v2243 = vpop.f32.mrb[0].mxu0
      %v2244 = vadd.f32 %v2164, %v2243
      %v2245 = vpop.f32.mrb[0].mxu0
      %2246 = vmatprep.mubr.bf16.mxu0 0
      %2247 = vmatmul.mubr.bf16.gmra.mrb[0].mxu0 %v2158
      %v2248 = vpop.f32.mrb[0].mxu0
      %v2249 = vadd.f32 %v2164, %v2248
      %v2250 = vpop.f32.mrb[0].mxu0
      %v2251 = vpop.f32.mrb[0].mxu0
      %v2252 = vadd.f32 %v2164, %v2251
      %v2253 = vpop.f32.mrb[0].mxu0
      %2254 = vmatprep.mubr.bf16.mxu0 0
      %2255 = vmatmul.mubr.bf16.gmra.mrb[0].mxu0 %v2159
      %v2256 = vpop.f32.mrb[0].mxu0
      %v2257 = vadd.f32 %v2164, %v2256
      %v2258 = vpop.f32.mrb[0].mxu0
      %v2259 = vpop.f32.mrb[0].mxu0
      %v2260 = vadd.f32 %v2164, %v2259
      %v2261 = vpop.f32.mrb[0].mxu0
      %2262 = vdwg.mxu0
      %v2263 = vtanh.pop %v2201
      %v2264 = vtanh.pop %v2204
      %v2265 = vtanh.pop %v2209
      %v2266 = vtanh.pop %v2212
      %v2267 = vtanh.pop %v2217
      %v2268 = vtanh.pop %v2220
      %v2269 = vtanh.pop %v2225
      %v2270 = vtanh.pop %v2228
      %v2271 = vtanh.pop %v2233
      %v2272 = vtanh.pop %v2236
      %v2273 = vtanh.pop %v2241
      %v2274 = vtanh.pop %v2244
      %v2275 = vtanh.pop %v2249
      %v2276 = vtanh.pop %v2252
      %v2277 = vtanh.pop %v2257
      %v2278 = vtanh.pop %v2260
      %v2279 = vpack.c.bf16 %v2264, %v2263
      %v2280 = vpack.c.bf16 %v2266, %v2265
      %v2281 = vpack.c.bf16 %v2268, %v2267
      %v2282 = vpack.c.bf16 %v2270, %v2269
      %v2283 = vpack.c.bf16 %v2272, %v2271
      %v2284 = vpack.c.bf16 %v2274, %v2273
      %v2285 = vpack.c.bf16 %v2276, %v2275
      %v2286 = vpack.c.bf16 %v2278, %v2277
      %v2288 = vlaneseq
      %v2289 = vshrl.u32 %v2288, 7
      %v2290 = vsub.s32 0, %v2289
      %v2291 = vrot.slane %v1087, %v2290
      %vm2293 = vcmask 523264
      %v2295 = vsel %vm2293, %v2279, 0
      %v2298 = vsel %vm2293, %v2280, 0
      %v2301 = vsel %vm2293, %v2281, 0
      %v2304 = vsel %vm2293, %v2282, 0
      %v2307 = vsel %vm2293, %v2283, 0
      %v2310 = vsel %vm2293, %v2284, 0
      %v2313 = vsel %vm2293, %v2285, 0
      %v2316 = vsel %vm2293, %v2286, 0
      %2318 = vmatprep.subr.bf16.mxu0 0
      %2319 = vmatpush1.bf16.msra.mxu0 %v745
      %2320 = vmatprep.subr.bf16.mxu0 0
      %2321 = vmatpush1.bf16.msra.mxu0 %v746
      %2322 = vmatprep.subr.bf16.mxu0 0
      %2323 = vmatpush1.bf16.msra.mxu0 %v747
      %2324 = vmatprep.subr.bf16.mxu0 0
      %2325 = vmatpush1.bf16.msra.mxu0 %v748
      %2326 = vmatprep.subr.bf16.mxu0 0
      %2327 = vmatpush1.bf16.msra.mxu0 0
      %2328 = vmatprep.subr.bf16.mxu0 0
      %2329 = vmatpush1.bf16.msra.mxu0 0
      %2330 = vmatprep.subr.bf16.mxu0 0
      %2331 = vmatpush1.bf16.msra.mxu0 0
      %2332 = vmatprep.subr.bf16.mxu0 0
      %2333 = vmatpush1.bf16.msra.mxu0 0
      %2334 = vmatprep.subr.bf16.mxu0 0
      %2335 = vmatpush1.bf16.msra.mxu0 0
      %2336 = vmatprep.subr.bf16.mxu0 0
      %2337 = vmatpush1.bf16.msra.mxu0 0
      %2338 = vmatprep.subr.bf16.mxu0 0
      %2339 = vmatpush1.bf16.msra.mxu0 0
      %2340 = vmatprep.subr.bf16.mxu0 0
      %2341 = vmatpush1.bf16.msra.mxu0 0
      %2342 = vmatprep.subr.bf16.mxu0 0
      %2343 = vmatpush1.bf16.msra.mxu0 0
      %2344 = vmatprep.subr.bf16.mxu0 0
      %2345 = vmatpush1.bf16.msra.mxu0 0
      %2346 = vmatprep.subr.bf16.mxu0 0
      %2347 = vmatpush1.bf16.msra.mxu0 0
      %2348 = vmatprep.subr.bf16.mxu0 0
      %2349 = vmatpush1.bf16.msra.mxu0 0
      %2350 = vmatprep.mubr.bf16.mxu0 0
      %2351 = vmatmul.mubr.bf16.gmra.mrb[0].mxu0 %v2295
      %v2352 = vpop.f32.mrb[0].mxu0
      %v2353 = vadd.f32 %v2291, %v2352
      %v2354 = vpop.f32.mrb[0].mxu0
      %v2355 = vpop.f32.mrb[0].mxu0
      %v2356 = vadd.f32 %v2291, %v2355
      %v2357 = vpop.f32.mrb[0].mxu0
      %2358 = vmatprep.mubr.bf16.mxu0 0
      %2359 = vmatmul.mubr.bf16.gmra.mrb[0].mxu0 %v2298
      %v2360 = vpop.f32.mrb[0].mxu0
      %v2361 = vadd.f32 %v2291, %v2360
      %v2362 = vpop.f32.mrb[0].mxu0
      %v2363 = vpop.f32.mrb[0].mxu0
      %v2364 = vadd.f32 %v2291, %v2363
      %v2365 = vpop.f32.mrb[0].mxu0
      %2366 = vmatprep.mubr.bf16.mxu0 0
      %2367 = vmatmul.mubr.bf16.gmra.mrb[0].mxu0 %v2301
      %v2368 = vpop.f32.mrb[0].mxu0
      %v2369 = vadd.f32 %v2291, %v2368
      %v2370 = vpop.f32.mrb[0].mxu0
      %v2371 = vpop.f32.mrb[0].mxu0
      %v2372 = vadd.f32 %v2291, %v2371
      %v2373 = vpop.f32.mrb[0].mxu0
      %2374 = vmatprep.mubr.bf16.mxu0 0
      %2375 = vmatmul.mubr.bf16.gmra.mrb[0].mxu0 %v2304
      %v2376 = vpop.f32.mrb[0].mxu0
      %v2377 = vadd.f32 %v2291, %v2376
      %v2378 = vpop.f32.mrb[0].mxu0
      %v2379 = vpop.f32.mrb[0].mxu0
      %v2380 = vadd.f32 %v2291, %v2379
      %v2381 = vpop.f32.mrb[0].mxu0
      %2382 = vmatprep.mubr.bf16.mxu0 0
      %2383 = vmatmul.mubr.bf16.gmra.mrb[0].mxu0 %v2307
      %v2384 = vpop.f32.mrb[0].mxu0
      %v2385 = vadd.f32 %v2291, %v2384
      %v2386 = vpop.f32.mrb[0].mxu0
      %v2387 = vpop.f32.mrb[0].mxu0
      %v2388 = vadd.f32 %v2291, %v2387
      %v2389 = vpop.f32.mrb[0].mxu0
      %2390 = vmatprep.mubr.bf16.mxu0 0
      %2391 = vmatmul.mubr.bf16.gmra.mrb[0].mxu0 %v2310
      %v2392 = vpop.f32.mrb[0].mxu0
      %v2393 = vadd.f32 %v2291, %v2392
      %v2394 = vpop.f32.mrb[0].mxu0
      %v2395 = vpop.f32.mrb[0].mxu0
      %v2396 = vadd.f32 %v2291, %v2395
      %v2397 = vpop.f32.mrb[0].mxu0
      %2398 = vmatprep.mubr.bf16.mxu0 0
      %2399 = vmatmul.mubr.bf16.gmra.mrb[0].mxu0 %v2313
      %v2400 = vpop.f32.mrb[0].mxu0
      %v2401 = vadd.f32 %v2291, %v2400
      %v2402 = vpop.f32.mrb[0].mxu0
      %v2403 = vpop.f32.mrb[0].mxu0
      %v2404 = vadd.f32 %v2291, %v2403
      %v2405 = vpop.f32.mrb[0].mxu0
      %2406 = vmatprep.mubr.bf16.mxu0 0
      %2407 = vmatmul.mubr.bf16.gmra.mrb[0].mxu0 %v2316
      %v2408 = vpop.f32.mrb[0].mxu0
      %v2409 = vadd.f32 %v2291, %v2408
      %v2410 = vpop.f32.mrb[0].mxu0
      %v2411 = vpop.f32.mrb[0].mxu0
      %v2412 = vadd.f32 %v2291, %v2411
      %v2413 = vpop.f32.mrb[0].mxu0
      %2414 = vdwg.mxu0
      %v2415 = vtanh.pop %v2353
      %v2416 = vtanh.pop %v2356
      %v2417 = vtanh.pop %v2361
      %v2418 = vtanh.pop %v2364
      %v2419 = vtanh.pop %v2369
      %v2420 = vtanh.pop %v2372
      %v2421 = vtanh.pop %v2377
      %v2422 = vtanh.pop %v2380
      %v2423 = vtanh.pop %v2385
      %v2424 = vtanh.pop %v2388
      %v2425 = vtanh.pop %v2393
      %v2426 = vtanh.pop %v2396
      %v2427 = vtanh.pop %v2401
      %v2428 = vtanh.pop %v2404
      %v2429 = vtanh.pop %v2409
      %v2430 = vtanh.pop %v2412
      %v2431 = vpack.c.bf16 %v2416, %v2415
      %v2432 = vpack.c.bf16 %v2418, %v2417
      %v2433 = vpack.c.bf16 %v2420, %v2419
      %v2434 = vpack.c.bf16 %v2422, %v2421
      %v2435 = vpack.c.bf16 %v2424, %v2423
      %v2436 = vpack.c.bf16 %v2426, %v2425
      %v2437 = vpack.c.bf16 %v2428, %v2427
      %v2438 = vpack.c.bf16 %v2430, %v2429
      %v2441 = vlaneseq
      %v2442 = vshrl.u32 %v2441, 7
      %v2443 = vsub.s32 0, %v2442
      %v2444 = vrot.slane %v1088, %v2443
      %v2445 = vlaneseq
      %v2446 = vshrl.u32 %v2445, 7
      %v2447 = vsub.s32 1, %v2446
      %v2448 = vrot.slane %v1088, %v2447
      %v2449 = vlaneseq
      %v2450 = vshrl.u32 %v2449, 7
      %v2451 = vsub.s32 2, %v2450
      %v2452 = vrot.slane %v1088, %v2451
      %v2453 = vlaneseq
      %v2454 = vshrl.u32 %v2453, 7
      %v2455 = vsub.s32 3, %v2454
      %v2456 = vrot.slane %v1088, %v2455
      %v2457 = vlaneseq
      %v2458 = vshrl.u32 %v2457, 7
      %v2459 = vsub.s32 4, %v2458
      %v2460 = vrot.slane %v1088, %v2459
      %v2461 = vlaneseq
      %v2462 = vshrl.u32 %v2461, 7
      %v2463 = vsub.s32 5, %v2462
      %v2464 = vrot.slane %v1088, %v2463
      %v2465 = vlaneseq
      %v2466 = vshrl.u32 %v2465, 7
      %v2467 = vsub.s32 6, %v2466
      %v2468 = vrot.slane %v1088, %v2467
      %v2469 = vlaneseq
      %v2470 = vshrl.u32 %v2469, 7
      %v2471 = vsub.s32 7, %v2470
      %v2472 = vrot.slane %v1088, %v2471
      %v2473 = vlaneseq
      %v2474 = vshrl.u32 %v2473, 7
      %v2475 = vsub.s32 0, %v2474
      %v2476 = vrot.slane %v1089, %v2475
      %v2477 = vlaneseq
      %v2478 = vshrl.u32 %v2477, 7
      %v2479 = vsub.s32 1, %v2478
      %v2480 = vrot.slane %v1089, %v2479
      %v2481 = vlaneseq
      %v2482 = vshrl.u32 %v2481, 7
      %v2483 = vsub.s32 2, %v2482
      %v2484 = vrot.slane %v1089, %v2483
      %v2485 = vlaneseq
      %v2486 = vshrl.u32 %v2485, 7
      %v2487 = vsub.s32 3, %v2486
      %v2488 = vrot.slane %v1089, %v2487
      %v2489 = vlaneseq
      %v2490 = vshrl.u32 %v2489, 7
      %v2491 = vsub.s32 4, %v2490
      %v2492 = vrot.slane %v1089, %v2491
      %v2493 = vlaneseq
      %v2494 = vshrl.u32 %v2493, 7
      %v2495 = vsub.s32 5, %v2494
      %v2496 = vrot.slane %v1089, %v2495
      %2511 = vmatprep.subr.bf16.mxu0 %v974
      %2512 = vmatpush1.bf16.msra.mxu0 %v973
      %2513 = vmatprep.subr.bf16.mxu0 %v988
      %2514 = vmatpush1.bf16.msra.mxu0 %v987
      %2515 = vmatprep.subr.bf16.mxu0 %v1002
      %2516 = vmatpush1.bf16.msra.mxu0 %v1001
      %2517 = vmatprep.subr.bf16.mxu0 %v1016
      %2518 = vmatpush1.bf16.msra.mxu0 %v1015
      %2519 = vmatprep.subr.bf16.mxu0 %v1030
      %2520 = vmatpush1.bf16.msra.mxu0 %v1029
      %2521 = vmatprep.subr.bf16.mxu0 %v1044
      %2522 = vmatpush1.bf16.msra.mxu0 %v1043
      %2523 = vmatprep.subr.bf16.mxu0 %v1058
      %2524 = vmatpush1.bf16.msra.mxu0 %v1057
      %2525 = vmatprep.subr.bf16.mxu0 %v1072
      %2526 = vmatpush1.bf16.msra.mxu0 %v1071
      %2527 = vmatprep.subr.bf16.mxu0 0
      %2528 = vmatpush1.bf16.msra.mxu0 0
      %2529 = vmatprep.subr.bf16.mxu0 0
      %2530 = vmatpush1.bf16.msra.mxu0 0
      %2531 = vmatprep.subr.bf16.mxu0 0
      %2532 = vmatpush1.bf16.msra.mxu0 0
      %2533 = vmatprep.subr.bf16.mxu0 0
      %2534 = vmatpush1.bf16.msra.mxu0 0
      %2535 = vmatprep.subr.bf16.mxu0 0
      %2536 = vmatpush1.bf16.msra.mxu0 0
      %2537 = vmatprep.subr.bf16.mxu0 0
      %2538 = vmatpush1.bf16.msra.mxu0 0
      %2539 = vmatprep.subr.bf16.mxu0 0
      %2540 = vmatpush1.bf16.msra.mxu0 0
      %2541 = vmatprep.subr.bf16.mxu0 0
      %2542 = vmatpush1.bf16.msra.mxu0 0
      %2543 = vmatprep.mubr.bf16.mxu0 0
      %2544 = vmatmul.mubr.bf16.gmra.mrb[0].mxu0 %v2431
      %v2545 = vpop.f32.mrb[0].mxu0
      %v2546 = vadd.f32 %v2444, %v2545
      %v2547 = vpop.f32.mrb[0].mxu0
      %v2548 = vadd.f32 %v2448, %v2547
      %v2549 = vpop.f32.mrb[0].mxu0
      %v2550 = vadd.f32 %v2444, %v2549
      %v2551 = vpop.f32.mrb[0].mxu0
      %v2552 = vadd.f32 %v2448, %v2551
      %2553 = vmatprep.mubr.bf16.mxu0 0
      %2554 = vmatmul.mubr.bf16.gmra.mrb[0].mxu0 %v2432
      %v2555 = vpop.f32.mrb[0].mxu0
      %v2556 = vadd.f32 %v2444, %v2555
      %v2557 = vpop.f32.mrb[0].mxu0
      %v2558 = vadd.f32 %v2448, %v2557
      %v2559 = vpop.f32.mrb[0].mxu0
      %v2560 = vadd.f32 %v2444, %v2559
      %v2561 = vpop.f32.mrb[0].mxu0
      %v2562 = vadd.f32 %v2448, %v2561
      %2563 = vmatprep.mubr.bf16.mxu0 0
      %2564 = vmatmul.mubr.bf16.gmra.mrb[0].mxu0 %v2433
      %v2565 = vpop.f32.mrb[0].mxu0
      %v2566 = vadd.f32 %v2444, %v2565
      %v2567 = vpop.f32.mrb[0].mxu0
      %v2568 = vadd.f32 %v2448, %v2567
      %v2569 = vpop.f32.mrb[0].mxu0
      %v2570 = vadd.f32 %v2444, %v2569
      %v2571 = vpop.f32.mrb[0].mxu0
      %v2572 = vadd.f32 %v2448, %v2571
      %2573 = vmatprep.mubr.bf16.mxu0 0
      %2574 = vmatmul.mubr.bf16.gmra.mrb[0].mxu0 %v2434
      %v2575 = vpop.f32.mrb[0].mxu0
      %v2576 = vadd.f32 %v2444, %v2575
      %v2577 = vpop.f32.mrb[0].mxu0
      %v2578 = vadd.f32 %v2448, %v2577
      %v2579 = vpop.f32.mrb[0].mxu0
      %v2580 = vadd.f32 %v2444, %v2579
      %v2581 = vpop.f32.mrb[0].mxu0
      %v2582 = vadd.f32 %v2448, %v2581
      %2583 = vmatprep.mubr.bf16.mxu0 0
      %2584 = vmatmul.mubr.bf16.gmra.mrb[0].mxu0 %v2435
      %v2585 = vpop.f32.mrb[0].mxu0
      %v2586 = vadd.f32 %v2444, %v2585
      %v2587 = vpop.f32.mrb[0].mxu0
      %v2588 = vadd.f32 %v2448, %v2587
      %v2589 = vpop.f32.mrb[0].mxu0
      %v2590 = vadd.f32 %v2444, %v2589
      %v2591 = vpop.f32.mrb[0].mxu0
      %v2592 = vadd.f32 %v2448, %v2591
      %2593 = vmatprep.mubr.bf16.mxu0 0
      %2594 = vmatmul.mubr.bf16.gmra.mrb[0].mxu0 %v2436
      %v2595 = vpop.f32.mrb[0].mxu0
      %v2596 = vadd.f32 %v2444, %v2595
      %v2597 = vpop.f32.mrb[0].mxu0
      %v2598 = vadd.f32 %v2448, %v2597
      %v2599 = vpop.f32.mrb[0].mxu0
      %v2600 = vadd.f32 %v2444, %v2599
      %v2601 = vpop.f32.mrb[0].mxu0
      %v2602 = vadd.f32 %v2448, %v2601
      %2603 = vmatprep.mubr.bf16.mxu0 0
      %2604 = vmatmul.mubr.bf16.gmra.mrb[0].mxu0 %v2437
      %v2605 = vpop.f32.mrb[0].mxu0
      %v2606 = vadd.f32 %v2444, %v2605
      %v2607 = vpop.f32.mrb[0].mxu0
      %v2608 = vadd.f32 %v2448, %v2607
      %v2609 = vpop.f32.mrb[0].mxu0
      %v2610 = vadd.f32 %v2444, %v2609
      %v2611 = vpop.f32.mrb[0].mxu0
      %v2612 = vadd.f32 %v2448, %v2611
      %2613 = vmatprep.mubr.bf16.mxu0 0
      %2614 = vmatmul.mubr.bf16.gmra.mrb[0].mxu0 %v2438
      %v2615 = vpop.f32.mrb[0].mxu0
      %v2616 = vadd.f32 %v2444, %v2615
      %v2617 = vpop.f32.mrb[0].mxu0
      %v2618 = vadd.f32 %v2448, %v2617
      %v2619 = vpop.f32.mrb[0].mxu0
      %v2620 = vadd.f32 %v2444, %v2619
      %v2621 = vpop.f32.mrb[0].mxu0
      %v2622 = vadd.f32 %v2448, %v2621
      %2623 = vdwg.mxu0
      %2624 = vmatprep.subr.bf16.mxu0 %v976
      %2625 = vmatpush1.bf16.msra.mxu0 %v975
      %2626 = vmatprep.subr.bf16.mxu0 %v990
      %2627 = vmatpush1.bf16.msra.mxu0 %v989
      %2628 = vmatprep.subr.bf16.mxu0 %v1004
      %2629 = vmatpush1.bf16.msra.mxu0 %v1003
      %2630 = vmatprep.subr.bf16.mxu0 %v1018
      %2631 = vmatpush1.bf16.msra.mxu0 %v1017
      %2632 = vmatprep.subr.bf16.mxu0 %v1032
      %2633 = vmatpush1.bf16.msra.mxu0 %v1031
      %2634 = vmatprep.subr.bf16.mxu0 %v1046
      %2635 = vmatpush1.bf16.msra.mxu0 %v1045
      %2636 = vmatprep.subr.bf16.mxu0 %v1060
      %2637 = vmatpush1.bf16.msra.mxu0 %v1059
      %2638 = vmatprep.subr.bf16.mxu0 %v1074
      %2639 = vmatpush1.bf16.msra.mxu0 %v1073
      %2640 = vmatprep.subr.bf16.mxu0 0
      %2641 = vmatpush1.bf16.msra.mxu0 0
      %2642 = vmatprep.subr.bf16.mxu0 0
      %2643 = vmatpush1.bf16.msra.mxu0 0
      %2644 = vmatprep.subr.bf16.mxu0 0
      %2645 = vmatpush1.bf16.msra.mxu0 0
      %2646 = vmatprep.subr.bf16.mxu0 0
      %2647 = vmatpush1.bf16.msra.mxu0 0
      %2648 = vmatprep.subr.bf16.mxu0 0
      %2649 = vmatpush1.bf16.msra.mxu0 0
      %2650 = vmatprep.subr.bf16.mxu0 0
      %2651 = vmatpush1.bf16.msra.mxu0 0
      %2652 = vmatprep.subr.bf16.mxu0 0
      %2653 = vmatpush1.bf16.msra.mxu0 0
      %2654 = vmatprep.subr.bf16.mxu0 0
      %2655 = vmatpush1.bf16.msra.mxu0 0
      %2656 = vmatprep.mubr.bf16.mxu0 0
      %2657 = vmatmul.mubr.bf16.gmra.mrb[0].mxu0 %v2431
      %v2658 = vpop.f32.mrb[0].mxu0
      %v2659 = vadd.f32 %v2452, %v2658
      %v2660 = vpop.f32.mrb[0].mxu0
      %v2661 = vadd.f32 %v2456, %v2660
      %v2662 = vpop.f32.mrb[0].mxu0
      %v2663 = vadd.f32 %v2452, %v2662
      %v2664 = vpop.f32.mrb[0].mxu0
      %v2665 = vadd.f32 %v2456, %v2664
      %2666 = vmatprep.mubr.bf16.mxu0 0
      %2667 = vmatmul.mubr.bf16.gmra.mrb[0].mxu0 %v2432
      %v2668 = vpop.f32.mrb[0].mxu0
      %v2669 = vadd.f32 %v2452, %v2668
      %v2670 = vpop.f32.mrb[0].mxu0
      %v2671 = vadd.f32 %v2456, %v2670
      %v2672 = vpop.f32.mrb[0].mxu0
      %v2673 = vadd.f32 %v2452, %v2672
      %v2674 = vpop.f32.mrb[0].mxu0
      %v2675 = vadd.f32 %v2456, %v2674
      %2676 = vmatprep.mubr.bf16.mxu0 0
      %2677 = vmatmul.mubr.bf16.gmra.mrb[0].mxu0 %v2433
      %v2678 = vpop.f32.mrb[0].mxu0
      %v2679 = vadd.f32 %v2452, %v2678
      %v2680 = vpop.f32.mrb[0].mxu0
      %v2681 = vadd.f32 %v2456, %v2680
      %v2682 = vpop.f32.mrb[0].mxu0
      %v2683 = vadd.f32 %v2452, %v2682
      %v2684 = vpop.f32.mrb[0].mxu0
      %v2685 = vadd.f32 %v2456, %v2684
      %2686 = vmatprep.mubr.bf16.mxu0 0
      %2687 = vmatmul.mubr.bf16.gmra.mrb[0].mxu0 %v2434
      %v2688 = vpop.f32.mrb[0].mxu0
      %v2689 = vadd.f32 %v2452, %v2688
      %v2690 = vpop.f32.mrb[0].mxu0
      %v2691 = vadd.f32 %v2456, %v2690
      %v2692 = vpop.f32.mrb[0].mxu0
      %v2693 = vadd.f32 %v2452, %v2692
      %v2694 = vpop.f32.mrb[0].mxu0
      %v2695 = vadd.f32 %v2456, %v2694
      %2696 = vmatprep.mubr.bf16.mxu0 0
      %2697 = vmatmul.mubr.bf16.gmra.mrb[0].mxu0 %v2435
      %v2698 = vpop.f32.mrb[0].mxu0
      %v2699 = vadd.f32 %v2452, %v2698
      %v2700 = vpop.f32.mrb[0].mxu0
      %v2701 = vadd.f32 %v2456, %v2700
      %v2702 = vpop.f32.mrb[0].mxu0
      %v2703 = vadd.f32 %v2452, %v2702
      %v2704 = vpop.f32.mrb[0].mxu0
      %v2705 = vadd.f32 %v2456, %v2704
      %2706 = vmatprep.mubr.bf16.mxu0 0
      %2707 = vmatmul.mubr.bf16.gmra.mrb[0].mxu0 %v2436
      %v2708 = vpop.f32.mrb[0].mxu0
      %v2709 = vadd.f32 %v2452, %v2708
      %v2710 = vpop.f32.mrb[0].mxu0
      %v2711 = vadd.f32 %v2456, %v2710
      %v2712 = vpop.f32.mrb[0].mxu0
      %v2713 = vadd.f32 %v2452, %v2712
      %v2714 = vpop.f32.mrb[0].mxu0
      %v2715 = vadd.f32 %v2456, %v2714
      %2716 = vmatprep.mubr.bf16.mxu0 0
      %2717 = vmatmul.mubr.bf16.gmra.mrb[0].mxu0 %v2437
      %v2718 = vpop.f32.mrb[0].mxu0
      %v2719 = vadd.f32 %v2452, %v2718
      %v2720 = vpop.f32.mrb[0].mxu0
      %v2721 = vadd.f32 %v2456, %v2720
      %v2722 = vpop.f32.mrb[0].mxu0
      %v2723 = vadd.f32 %v2452, %v2722
      %v2724 = vpop.f32.mrb[0].mxu0
      %v2725 = vadd.f32 %v2456, %v2724
      %2726 = vmatprep.mubr.bf16.mxu0 0
      %2727 = vmatmul.mubr.bf16.gmra.mrb[0].mxu0 %v2438
      %v2728 = vpop.f32.mrb[0].mxu0
      %v2729 = vadd.f32 %v2452, %v2728
      %v2730 = vpop.f32.mrb[0].mxu0
      %v2731 = vadd.f32 %v2456, %v2730
      %v2732 = vpop.f32.mrb[0].mxu0
      %v2733 = vadd.f32 %v2452, %v2732
      %v2734 = vpop.f32.mrb[0].mxu0
      %v2735 = vadd.f32 %v2456, %v2734
      %2736 = vdwg.mxu0
      %2737 = vmatprep.subr.bf16.mxu0 %v978
      %2738 = vmatpush1.bf16.msra.mxu0 %v977
      %2739 = vmatprep.subr.bf16.mxu0 %v992
      %2740 = vmatpush1.bf16.msra.mxu0 %v991
      %2741 = vmatprep.subr.bf16.mxu0 %v1006
      %2742 = vmatpush1.bf16.msra.mxu0 %v1005
      %2743 = vmatprep.subr.bf16.mxu0 %v1020
      %2744 = vmatpush1.bf16.msra.mxu0 %v1019
      %2745 = vmatprep.subr.bf16.mxu0 %v1034
      %2746 = vmatpush1.bf16.msra.mxu0 %v1033
      %2747 = vmatprep.subr.bf16.mxu0 %v1048
      %2748 = vmatpush1.bf16.msra.mxu0 %v1047
      %2749 = vmatprep.subr.bf16.mxu0 %v1062
      %2750 = vmatpush1.bf16.msra.mxu0 %v1061
      %2751 = vmatprep.subr.bf16.mxu0 %v1076
      %2752 = vmatpush1.bf16.msra.mxu0 %v1075
      %2753 = vmatprep.subr.bf16.mxu0 0
      %2754 = vmatpush1.bf16.msra.mxu0 0
      %2755 = vmatprep.subr.bf16.mxu0 0
      %2756 = vmatpush1.bf16.msra.mxu0 0
      %2757 = vmatprep.subr.bf16.mxu0 0
      %2758 = vmatpush1.bf16.msra.mxu0 0
      %2759 = vmatprep.subr.bf16.mxu0 0
      %2760 = vmatpush1.bf16.msra.mxu0 0
      %2761 = vmatprep.subr.bf16.mxu0 0
      %2762 = vmatpush1.bf16.msra.mxu0 0
      %2763 = vmatprep.subr.bf16.mxu0 0
      %2764 = vmatpush1.bf16.msra.mxu0 0
      %2765 = vmatprep.subr.bf16.mxu0 0
      %2766 = vmatpush1.bf16.msra.mxu0 0
      %2767 = vmatprep.subr.bf16.mxu0 0
      %2768 = vmatpush1.bf16.msra.mxu0 0
      %2769 = vmatprep.mubr.bf16.mxu0 0
      %2770 = vmatmul.mubr.bf16.gmra.mrb[0].mxu0 %v2431
      %v2771 = vpop.f32.mrb[0].mxu0
      %v2772 = vadd.f32 %v2460, %v2771
      %v2773 = vpop.f32.mrb[0].mxu0
      %v2774 = vadd.f32 %v2464, %v2773
      %v2775 = vpop.f32.mrb[0].mxu0
      %v2776 = vadd.f32 %v2460, %v2775
      %v2777 = vpop.f32.mrb[0].mxu0
      %v2778 = vadd.f32 %v2464, %v2777
      %2779 = vmatprep.mubr.bf16.mxu0 0
      %2780 = vmatmul.mubr.bf16.gmra.mrb[0].mxu0 %v2432
      %v2781 = vpop.f32.mrb[0].mxu0
      %v2782 = vadd.f32 %v2460, %v2781
      %v2783 = vpop.f32.mrb[0].mxu0
      %v2784 = vadd.f32 %v2464, %v2783
      %v2785 = vpop.f32.mrb[0].mxu0
      %v2786 = vadd.f32 %v2460, %v2785
      %v2787 = vpop.f32.mrb[0].mxu0
      %v2788 = vadd.f32 %v2464, %v2787
      %2789 = vmatprep.mubr.bf16.mxu0 0
      %2790 = vmatmul.mubr.bf16.gmra.mrb[0].mxu0 %v2433
      %v2791 = vpop.f32.mrb[0].mxu0
      %v2792 = vadd.f32 %v2460, %v2791
      %v2793 = vpop.f32.mrb[0].mxu0
      %v2794 = vadd.f32 %v2464, %v2793
      %v2795 = vpop.f32.mrb[0].mxu0
      %v2796 = vadd.f32 %v2460, %v2795
      %v2797 = vpop.f32.mrb[0].mxu0
      %v2798 = vadd.f32 %v2464, %v2797
      %2799 = vmatprep.mubr.bf16.mxu0 0
      %2800 = vmatmul.mubr.bf16.gmra.mrb[0].mxu0 %v2434
      %v2801 = vpop.f32.mrb[0].mxu0
      %v2802 = vadd.f32 %v2460, %v2801
      %v2803 = vpop.f32.mrb[0].mxu0
      %v2804 = vadd.f32 %v2464, %v2803
      %v2805 = vpop.f32.mrb[0].mxu0
      %v2806 = vadd.f32 %v2460, %v2805
      %v2807 = vpop.f32.mrb[0].mxu0
      %v2808 = vadd.f32 %v2464, %v2807
      %2809 = vmatprep.mubr.bf16.mxu0 0
      %2810 = vmatmul.mubr.bf16.gmra.mrb[0].mxu0 %v2435
      %v2811 = vpop.f32.mrb[0].mxu0
      %v2812 = vadd.f32 %v2460, %v2811
      %v2813 = vpop.f32.mrb[0].mxu0
      %v2814 = vadd.f32 %v2464, %v2813
      %v2815 = vpop.f32.mrb[0].mxu0
      %v2816 = vadd.f32 %v2460, %v2815
      %v2817 = vpop.f32.mrb[0].mxu0
      %v2818 = vadd.f32 %v2464, %v2817
      %2819 = vmatprep.mubr.bf16.mxu0 0
      %2820 = vmatmul.mubr.bf16.gmra.mrb[0].mxu0 %v2436
      %v2821 = vpop.f32.mrb[0].mxu0
      %v2822 = vadd.f32 %v2460, %v2821
      %v2823 = vpop.f32.mrb[0].mxu0
      %v2824 = vadd.f32 %v2464, %v2823
      %v2825 = vpop.f32.mrb[0].mxu0
      %v2826 = vadd.f32 %v2460, %v2825
      %v2827 = vpop.f32.mrb[0].mxu0
      %v2828 = vadd.f32 %v2464, %v2827
      %2829 = vmatprep.mubr.bf16.mxu0 0
      %2830 = vmatmul.mubr.bf16.gmra.mrb[0].mxu0 %v2437
      %v2831 = vpop.f32.mrb[0].mxu0
      %v2832 = vadd.f32 %v2460, %v2831
      %v2833 = vpop.f32.mrb[0].mxu0
      %v2834 = vadd.f32 %v2464, %v2833
      %v2835 = vpop.f32.mrb[0].mxu0
      %v2836 = vadd.f32 %v2460, %v2835
      %v2837 = vpop.f32.mrb[0].mxu0
      %v2838 = vadd.f32 %v2464, %v2837
      %2839 = vmatprep.mubr.bf16.mxu0 0
      %2840 = vmatmul.mubr.bf16.gmra.mrb[0].mxu0 %v2438
      %v2841 = vpop.f32.mrb[0].mxu0
      %v2842 = vadd.f32 %v2460, %v2841
      %v2843 = vpop.f32.mrb[0].mxu0
      %v2844 = vadd.f32 %v2464, %v2843
      %v2845 = vpop.f32.mrb[0].mxu0
      %v2846 = vadd.f32 %v2460, %v2845
      %v2847 = vpop.f32.mrb[0].mxu0
      %v2848 = vadd.f32 %v2464, %v2847
      %2849 = vdwg.mxu0
      %2850 = vmatprep.subr.bf16.mxu0 %v980
      %2851 = vmatpush1.bf16.msra.mxu0 %v979
      %2852 = vmatprep.subr.bf16.mxu0 %v994
      %2853 = vmatpush1.bf16.msra.mxu0 %v993
      %2854 = vmatprep.subr.bf16.mxu0 %v1008
      %2855 = vmatpush1.bf16.msra.mxu0 %v1007
      %2856 = vmatprep.subr.bf16.mxu0 %v1022
      %2857 = vmatpush1.bf16.msra.mxu0 %v1021
      %2858 = vmatprep.subr.bf16.mxu0 %v1036
      %2859 = vmatpush1.bf16.msra.mxu0 %v1035
      %2860 = vmatprep.subr.bf16.mxu0 %v1050
      %2861 = vmatpush1.bf16.msra.mxu0 %v1049
      %2862 = vmatprep.subr.bf16.mxu0 %v1064
      %2863 = vmatpush1.bf16.msra.mxu0 %v1063
      %2864 = vmatprep.subr.bf16.mxu0 %v1078
      %2865 = vmatpush1.bf16.msra.mxu0 %v1077
      %2866 = vmatprep.subr.bf16.mxu0 0
      %2867 = vmatpush1.bf16.msra.mxu0 0
      %2868 = vmatprep.subr.bf16.mxu0 0
      %2869 = vmatpush1.bf16.msra.mxu0 0
      %2870 = vmatprep.subr.bf16.mxu0 0
      %2871 = vmatpush1.bf16.msra.mxu0 0
      %2872 = vmatprep.subr.bf16.mxu0 0
      %2873 = vmatpush1.bf16.msra.mxu0 0
      %2874 = vmatprep.subr.bf16.mxu0 0
      %2875 = vmatpush1.bf16.msra.mxu0 0
      %2876 = vmatprep.subr.bf16.mxu0 0
      %2877 = vmatpush1.bf16.msra.mxu0 0
      %2878 = vmatprep.subr.bf16.mxu0 0
      %2879 = vmatpush1.bf16.msra.mxu0 0
      %2880 = vmatprep.subr.bf16.mxu0 0
      %2881 = vmatpush1.bf16.msra.mxu0 0
      %2882 = vmatprep.mubr.bf16.mxu0 0
      %2883 = vmatmul.mubr.bf16.gmra.mrb[0].mxu0 %v2431
      %v2884 = vpop.f32.mrb[0].mxu0
      %v2885 = vadd.f32 %v2468, %v2884
      %v2886 = vpop.f32.mrb[0].mxu0
      %v2887 = vadd.f32 %v2472, %v2886
      %v2888 = vpop.f32.mrb[0].mxu0
      %v2889 = vadd.f32 %v2468, %v2888
      %v2890 = vpop.f32.mrb[0].mxu0
      %v2891 = vadd.f32 %v2472, %v2890
      %2892 = vmatprep.mubr.bf16.mxu0 0
      %2893 = vmatmul.mubr.bf16.gmra.mrb[0].mxu0 %v2432
      %v2894 = vpop.f32.mrb[0].mxu0
      %v2895 = vadd.f32 %v2468, %v2894
      %v2896 = vpop.f32.mrb[0].mxu0
      %v2897 = vadd.f32 %v2472, %v2896
      %v2898 = vpop.f32.mrb[0].mxu0
      %v2899 = vadd.f32 %v2468, %v2898
      %v2900 = vpop.f32.mrb[0].mxu0
      %v2901 = vadd.f32 %v2472, %v2900
      %2902 = vmatprep.mubr.bf16.mxu0 0
      %2903 = vmatmul.mubr.bf16.gmra.mrb[0].mxu0 %v2433
      %v2904 = vpop.f32.mrb[0].mxu0
      %v2905 = vadd.f32 %v2468, %v2904
      %v2906 = vpop.f32.mrb[0].mxu0
      %v2907 = vadd.f32 %v2472, %v2906
      %v2908 = vpop.f32.mrb[0].mxu0
      %v2909 = vadd.f32 %v2468, %v2908
      %v2910 = vpop.f32.mrb[0].mxu0
      %v2911 = vadd.f32 %v2472, %v2910
      %2912 = vmatprep.mubr.bf16.mxu0 0
      %2913 = vmatmul.mubr.bf16.gmra.mrb[0].mxu0 %v2434
      %v2914 = vpop.f32.mrb[0].mxu0
      %v2915 = vadd.f32 %v2468, %v2914
      %v2916 = vpop.f32.mrb[0].mxu0
      %v2917 = vadd.f32 %v2472, %v2916
      %v2918 = vpop.f32.mrb[0].mxu0
      %v2919 = vadd.f32 %v2468, %v2918
      %v2920 = vpop.f32.mrb[0].mxu0
      %v2921 = vadd.f32 %v2472, %v2920
      %2922 = vmatprep.mubr.bf16.mxu0 0
      %2923 = vmatmul.mubr.bf16.gmra.mrb[0].mxu0 %v2435
      %v2924 = vpop.f32.mrb[0].mxu0
      %v2925 = vadd.f32 %v2468, %v2924
      %v2926 = vpop.f32.mrb[0].mxu0
      %v2927 = vadd.f32 %v2472, %v2926
      %v2928 = vpop.f32.mrb[0].mxu0
      %v2929 = vadd.f32 %v2468, %v2928
      %v2930 = vpop.f32.mrb[0].mxu0
      %v2931 = vadd.f32 %v2472, %v2930
      %2932 = vmatprep.mubr.bf16.mxu0 0
      %2933 = vmatmul.mubr.bf16.gmra.mrb[0].mxu0 %v2436
      %v2934 = vpop.f32.mrb[0].mxu0
      %v2935 = vadd.f32 %v2468, %v2934
      %v2936 = vpop.f32.mrb[0].mxu0
      %v2937 = vadd.f32 %v2472, %v2936
      %v2938 = vpop.f32.mrb[0].mxu0
      %v2939 = vadd.f32 %v2468, %v2938
      %v2940 = vpop.f32.mrb[0].mxu0
      %v2941 = vadd.f32 %v2472, %v2940
      %2942 = vmatprep.mubr.bf16.mxu0 0
      %2943 = vmatmul.mubr.bf16.gmra.mrb[0].mxu0 %v2437
      %v2944 = vpop.f32.mrb[0].mxu0
      %v2945 = vadd.f32 %v2468, %v2944
      %v2946 = vpop.f32.mrb[0].mxu0
      %v2947 = vadd.f32 %v2472, %v2946
      %v2948 = vpop.f32.mrb[0].mxu0
      %v2949 = vadd.f32 %v2468, %v2948
      %v2950 = vpop.f32.mrb[0].mxu0
      %v2951 = vadd.f32 %v2472, %v2950
      %2952 = vmatprep.mubr.bf16.mxu0 0
      %2953 = vmatmul.mubr.bf16.gmra.mrb[0].mxu0 %v2438
      %v2954 = vpop.f32.mrb[0].mxu0
      %v2955 = vadd.f32 %v2468, %v2954
      %v2956 = vpop.f32.mrb[0].mxu0
      %v2957 = vadd.f32 %v2472, %v2956
      %v2958 = vpop.f32.mrb[0].mxu0
      %v2959 = vadd.f32 %v2468, %v2958
      %v2960 = vpop.f32.mrb[0].mxu0
      %v2961 = vadd.f32 %v2472, %v2960
      %2962 = vdwg.mxu0
      %2963 = vmatprep.subr.bf16.mxu0 %v982
      %2964 = vmatpush1.bf16.msra.mxu0 %v981
      %2965 = vmatprep.subr.bf16.mxu0 %v996
      %2966 = vmatpush1.bf16.msra.mxu0 %v995
      %2967 = vmatprep.subr.bf16.mxu0 %v1010
      %2968 = vmatpush1.bf16.msra.mxu0 %v1009
      %2969 = vmatprep.subr.bf16.mxu0 %v1024
      %2970 = vmatpush1.bf16.msra.mxu0 %v1023
      %2971 = vmatprep.subr.bf16.mxu0 %v1038
      %2972 = vmatpush1.bf16.msra.mxu0 %v1037
      %2973 = vmatprep.subr.bf16.mxu0 %v1052
      %2974 = vmatpush1.bf16.msra.mxu0 %v1051
      %2975 = vmatprep.subr.bf16.mxu0 %v1066
      %2976 = vmatpush1.bf16.msra.mxu0 %v1065
      %2977 = vmatprep.subr.bf16.mxu0 %v1080
      %2978 = vmatpush1.bf16.msra.mxu0 %v1079
      %2979 = vmatprep.subr.bf16.mxu0 0
      %2980 = vmatpush1.bf16.msra.mxu0 0
      %2981 = vmatprep.subr.bf16.mxu0 0
      %2982 = vmatpush1.bf16.msra.mxu0 0
      %2983 = vmatprep.subr.bf16.mxu0 0
      %2984 = vmatpush1.bf16.msra.mxu0 0
      %2985 = vmatprep.subr.bf16.mxu0 0
      %2986 = vmatpush1.bf16.msra.mxu0 0
      %2987 = vmatprep.subr.bf16.mxu0 0
      %2988 = vmatpush1.bf16.msra.mxu0 0
      %2989 = vmatprep.subr.bf16.mxu0 0
      %2990 = vmatpush1.bf16.msra.mxu0 0
      %2991 = vmatprep.subr.bf16.mxu0 0
      %2992 = vmatpush1.bf16.msra.mxu0 0
      %2993 = vmatprep.subr.bf16.mxu0 0
      %2994 = vmatpush1.bf16.msra.mxu0 0
      %2995 = vmatprep.mubr.bf16.mxu0 0
      %2996 = vmatmul.mubr.bf16.gmra.mrb[0].mxu0 %v2431
      %v2997 = vpop.f32.mrb[0].mxu0
      %v2998 = vadd.f32 %v2476, %v2997
      %v2999 = vpop.f32.mrb[0].mxu0
      %v3000 = vadd.f32 %v2480, %v2999
      %v3001 = vpop.f32.mrb[0].mxu0
      %v3002 = vadd.f32 %v2476, %v3001
      %v3003 = vpop.f32.mrb[0].mxu0
      %v3004 = vadd.f32 %v2480, %v3003
      %3005 = vmatprep.mubr.bf16.mxu0 0
      %3006 = vmatmul.mubr.bf16.gmra.mrb[0].mxu0 %v2432
      %v3007 = vpop.f32.mrb[0].mxu0
      %v3008 = vadd.f32 %v2476, %v3007
      %v3009 = vpop.f32.mrb[0].mxu0
      %v3010 = vadd.f32 %v2480, %v3009
      %v3011 = vpop.f32.mrb[0].mxu0
      %v3012 = vadd.f32 %v2476, %v3011
      %v3013 = vpop.f32.mrb[0].mxu0
      %v3014 = vadd.f32 %v2480, %v3013
      %3015 = vmatprep.mubr.bf16.mxu0 0
      %3016 = vmatmul.mubr.bf16.gmra.mrb[0].mxu0 %v2433
      %v3017 = vpop.f32.mrb[0].mxu0
      %v3018 = vadd.f32 %v2476, %v3017
      %v3019 = vpop.f32.mrb[0].mxu0
      %v3020 = vadd.f32 %v2480, %v3019
      %v3021 = vpop.f32.mrb[0].mxu0
      %v3022 = vadd.f32 %v2476, %v3021
      %v3023 = vpop.f32.mrb[0].mxu0
      %v3024 = vadd.f32 %v2480, %v3023
      %3025 = vmatprep.mubr.bf16.mxu0 0
      %3026 = vmatmul.mubr.bf16.gmra.mrb[0].mxu0 %v2434
      %v3027 = vpop.f32.mrb[0].mxu0
      %v3028 = vadd.f32 %v2476, %v3027
      %v3029 = vpop.f32.mrb[0].mxu0
      %v3030 = vadd.f32 %v2480, %v3029
      %v3031 = vpop.f32.mrb[0].mxu0
      %v3032 = vadd.f32 %v2476, %v3031
      %v3033 = vpop.f32.mrb[0].mxu0
      %v3034 = vadd.f32 %v2480, %v3033
      %3035 = vmatprep.mubr.bf16.mxu0 0
      %3036 = vmatmul.mubr.bf16.gmra.mrb[0].mxu0 %v2435
      %v3037 = vpop.f32.mrb[0].mxu0
      %v3038 = vadd.f32 %v2476, %v3037
      %v3039 = vpop.f32.mrb[0].mxu0
      %v3040 = vadd.f32 %v2480, %v3039
      %v3041 = vpop.f32.mrb[0].mxu0
      %v3042 = vadd.f32 %v2476, %v3041
      %v3043 = vpop.f32.mrb[0].mxu0
      %v3044 = vadd.f32 %v2480, %v3043
      %3045 = vmatprep.mubr.bf16.mxu0 0
      %3046 = vmatmul.mubr.bf16.gmra.mrb[0].mxu0 %v2436
      %v3047 = vpop.f32.mrb[0].mxu0
      %v3048 = vadd.f32 %v2476, %v3047
      %v3049 = vpop.f32.mrb[0].mxu0
      %v3050 = vadd.f32 %v2480, %v3049
      %v3051 = vpop.f32.mrb[0].mxu0
      %v3052 = vadd.f32 %v2476, %v3051
      %v3053 = vpop.f32.mrb[0].mxu0
      %v3054 = vadd.f32 %v2480, %v3053
      %3055 = vmatprep.mubr.bf16.mxu0 0
      %3056 = vmatmul.mubr.bf16.gmra.mrb[0].mxu0 %v2437
      %v3057 = vpop.f32.mrb[0].mxu0
      %v3058 = vadd.f32 %v2476, %v3057
      %v3059 = vpop.f32.mrb[0].mxu0
      %v3060 = vadd.f32 %v2480, %v3059
      %v3061 = vpop.f32.mrb[0].mxu0
      %v3062 = vadd.f32 %v2476, %v3061
      %v3063 = vpop.f32.mrb[0].mxu0
      %v3064 = vadd.f32 %v2480, %v3063
      %3065 = vmatprep.mubr.bf16.mxu0 0
      %3066 = vmatmul.mubr.bf16.gmra.mrb[0].mxu0 %v2438
      %v3067 = vpop.f32.mrb[0].mxu0
      %v3068 = vadd.f32 %v2476, %v3067
      %v3069 = vpop.f32.mrb[0].mxu0
      %v3070 = vadd.f32 %v2480, %v3069
      %v3071 = vpop.f32.mrb[0].mxu0
      %v3072 = vadd.f32 %v2476, %v3071
      %v3073 = vpop.f32.mrb[0].mxu0
      %v3074 = vadd.f32 %v2480, %v3073
      %3075 = vdwg.mxu0
      %3076 = vmatprep.subr.bf16.mxu0 %v984
      %3077 = vmatpush1.bf16.msra.mxu0 %v983
      %3078 = vmatprep.subr.bf16.mxu0 %v998
      %3079 = vmatpush1.bf16.msra.mxu0 %v997
      %3080 = vmatprep.subr.bf16.mxu0 %v1012
      %3081 = vmatpush1.bf16.msra.mxu0 %v1011
      %3082 = vmatprep.subr.bf16.mxu0 %v1026
      %3083 = vmatpush1.bf16.msra.mxu0 %v1025
      %3084 = vmatprep.subr.bf16.mxu0 %v1040
      %3085 = vmatpush1.bf16.msra.mxu0 %v1039
      %3086 = vmatprep.subr.bf16.mxu0 %v1054
      %3087 = vmatpush1.bf16.msra.mxu0 %v1053
      %3088 = vmatprep.subr.bf16.mxu0 %v1068
      %3089 = vmatpush1.bf16.msra.mxu0 %v1067
      %3090 = vmatprep.subr.bf16.mxu0 %v1082
      %3091 = vmatpush1.bf16.msra.mxu0 %v1081
      %3092 = vmatprep.subr.bf16.mxu0 0
      %3093 = vmatpush1.bf16.msra.mxu0 0
      %3094 = vmatprep.subr.bf16.mxu0 0
      %3095 = vmatpush1.bf16.msra.mxu0 0
      %3096 = vmatprep.subr.bf16.mxu0 0
      %3097 = vmatpush1.bf16.msra.mxu0 0
      %3098 = vmatprep.subr.bf16.mxu0 0
      %3099 = vmatpush1.bf16.msra.mxu0 0
      %3100 = vmatprep.subr.bf16.mxu0 0
      %3101 = vmatpush1.bf16.msra.mxu0 0
      %3102 = vmatprep.subr.bf16.mxu0 0
      %3103 = vmatpush1.bf16.msra.mxu0 0
      %3104 = vmatprep.subr.bf16.mxu0 0
      %3105 = vmatpush1.bf16.msra.mxu0 0
      %3106 = vmatprep.subr.bf16.mxu0 0
      %3107 = vmatpush1.bf16.msra.mxu0 0
      %3108 = vmatprep.mubr.bf16.mxu0 0
      %3109 = vmatmul.mubr.bf16.gmra.mrb[0].mxu0 %v2431
      %v3110 = vpop.f32.mrb[0].mxu0
      %v3111 = vadd.f32 %v2484, %v3110
      %v3112 = vpop.f32.mrb[0].mxu0
      %v3113 = vadd.f32 %v2488, %v3112
      %v3114 = vpop.f32.mrb[0].mxu0
      %v3115 = vadd.f32 %v2484, %v3114
      %v3116 = vpop.f32.mrb[0].mxu0
      %v3117 = vadd.f32 %v2488, %v3116
      %3118 = vmatprep.mubr.bf16.mxu0 0
      %3119 = vmatmul.mubr.bf16.gmra.mrb[0].mxu0 %v2432
      %v3120 = vpop.f32.mrb[0].mxu0
      %v3121 = vadd.f32 %v2484, %v3120
      %v3122 = vpop.f32.mrb[0].mxu0
      %v3123 = vadd.f32 %v2488, %v3122
      %v3124 = vpop.f32.mrb[0].mxu0
      %v3125 = vadd.f32 %v2484, %v3124
      %v3126 = vpop.f32.mrb[0].mxu0
      %v3127 = vadd.f32 %v2488, %v3126
      %3128 = vmatprep.mubr.bf16.mxu0 0
      %3129 = vmatmul.mubr.bf16.gmra.mrb[0].mxu0 %v2433
      %v3130 = vpop.f32.mrb[0].mxu0
      %v3131 = vadd.f32 %v2484, %v3130
      %v3132 = vpop.f32.mrb[0].mxu0
      %v3133 = vadd.f32 %v2488, %v3132
      %v3134 = vpop.f32.mrb[0].mxu0
      %v3135 = vadd.f32 %v2484, %v3134
      %v3136 = vpop.f32.mrb[0].mxu0
      %v3137 = vadd.f32 %v2488, %v3136
      %3138 = vmatprep.mubr.bf16.mxu0 0
      %3139 = vmatmul.mubr.bf16.gmra.mrb[0].mxu0 %v2434
      %v3140 = vpop.f32.mrb[0].mxu0
      %v3141 = vadd.f32 %v2484, %v3140
      %v3142 = vpop.f32.mrb[0].mxu0
      %v3143 = vadd.f32 %v2488, %v3142
      %v3144 = vpop.f32.mrb[0].mxu0
      %v3145 = vadd.f32 %v2484, %v3144
      %v3146 = vpop.f32.mrb[0].mxu0
      %v3147 = vadd.f32 %v2488, %v3146
      %3148 = vmatprep.mubr.bf16.mxu0 0
      %3149 = vmatmul.mubr.bf16.gmra.mrb[0].mxu0 %v2435
      %v3150 = vpop.f32.mrb[0].mxu0
      %v3151 = vadd.f32 %v2484, %v3150
      %v3152 = vpop.f32.mrb[0].mxu0
      %v3153 = vadd.f32 %v2488, %v3152
      %v3154 = vpop.f32.mrb[0].mxu0
      %v3155 = vadd.f32 %v2484, %v3154
      %v3156 = vpop.f32.mrb[0].mxu0
      %v3157 = vadd.f32 %v2488, %v3156
      %3158 = vmatprep.mubr.bf16.mxu0 0
      %3159 = vmatmul.mubr.bf16.gmra.mrb[0].mxu0 %v2436
      %v3160 = vpop.f32.mrb[0].mxu0
      %v3161 = vadd.f32 %v2484, %v3160
      %v3162 = vpop.f32.mrb[0].mxu0
      %v3163 = vadd.f32 %v2488, %v3162
      %v3164 = vpop.f32.mrb[0].mxu0
      %v3165 = vadd.f32 %v2484, %v3164
      %v3166 = vpop.f32.mrb[0].mxu0
      %v3167 = vadd.f32 %v2488, %v3166
      %3168 = vmatprep.mubr.bf16.mxu0 0
      %3169 = vmatmul.mubr.bf16.gmra.mrb[0].mxu0 %v2437
      %v3170 = vpop.f32.mrb[0].mxu0
      %v3171 = vadd.f32 %v2484, %v3170
      %v3172 = vpop.f32.mrb[0].mxu0
      %v3173 = vadd.f32 %v2488, %v3172
      %v3174 = vpop.f32.mrb[0].mxu0
      %v3175 = vadd.f32 %v2484, %v3174
      %v3176 = vpop.f32.mrb[0].mxu0
      %v3177 = vadd.f32 %v2488, %v3176
      %3178 = vmatprep.mubr.bf16.mxu0 0
      %3179 = vmatmul.mubr.bf16.gmra.mrb[0].mxu0 %v2438
      %v3180 = vpop.f32.mrb[0].mxu0
      %v3181 = vadd.f32 %v2484, %v3180
      %v3182 = vpop.f32.mrb[0].mxu0
      %v3183 = vadd.f32 %v2488, %v3182
      %v3184 = vpop.f32.mrb[0].mxu0
      %v3185 = vadd.f32 %v2484, %v3184
      %v3186 = vpop.f32.mrb[0].mxu0
      %v3187 = vadd.f32 %v2488, %v3186
      %3188 = vdwg.mxu0
      %3189 = vmatprep.subr.bf16.mxu0 %v986
      %3190 = vmatpush1.bf16.msra.mxu0 %v985
      %3191 = vmatprep.subr.bf16.mxu0 %v1000
      %3192 = vmatpush1.bf16.msra.mxu0 %v999
      %3193 = vmatprep.subr.bf16.mxu0 %v1014
      %3194 = vmatpush1.bf16.msra.mxu0 %v1013
      %3195 = vmatprep.subr.bf16.mxu0 %v1028
      %3196 = vmatpush1.bf16.msra.mxu0 %v1027
      %3197 = vmatprep.subr.bf16.mxu0 %v1042
      %3198 = vmatpush1.bf16.msra.mxu0 %v1041
      %3199 = vmatprep.subr.bf16.mxu0 %v1056
      %3200 = vmatpush1.bf16.msra.mxu0 %v1055
      %3201 = vmatprep.subr.bf16.mxu0 %v1070
      %3202 = vmatpush1.bf16.msra.mxu0 %v1069
      %3203 = vmatprep.subr.bf16.mxu0 %v1084
      %3204 = vmatpush1.bf16.msra.mxu0 %v1083
      %3205 = vmatprep.subr.bf16.mxu0 0
      %3206 = vmatpush1.bf16.msra.mxu0 0
      %3207 = vmatprep.subr.bf16.mxu0 0
      %3208 = vmatpush1.bf16.msra.mxu0 0
      %3209 = vmatprep.subr.bf16.mxu0 0
      %3210 = vmatpush1.bf16.msra.mxu0 0
      %3211 = vmatprep.subr.bf16.mxu0 0
      %3212 = vmatpush1.bf16.msra.mxu0 0
      %3213 = vmatprep.subr.bf16.mxu0 0
      %3214 = vmatpush1.bf16.msra.mxu0 0
      %3215 = vmatprep.subr.bf16.mxu0 0
      %3216 = vmatpush1.bf16.msra.mxu0 0
      %3217 = vmatprep.subr.bf16.mxu0 0
      %3218 = vmatpush1.bf16.msra.mxu0 0
      %3219 = vmatprep.subr.bf16.mxu0 0
      %3220 = vmatpush1.bf16.msra.mxu0 0
      %3221 = vmatprep.mubr.bf16.mxu0 0
      %3222 = vmatmul.mubr.bf16.gmra.mrb[0].mxu0 %v2431
      %v3223 = vpop.f32.mrb[0].mxu0
      %v3224 = vadd.f32 %v2492, %v3223
      %v3225 = vpop.f32.mrb[0].mxu0
      %v3226 = vadd.f32 %v2496, %v3225
      %v3227 = vpop.f32.mrb[0].mxu0
      %v3228 = vadd.f32 %v2492, %v3227
      %v3229 = vpop.f32.mrb[0].mxu0
      %v3230 = vadd.f32 %v2496, %v3229
      %3231 = vmatprep.mubr.bf16.mxu0 0
      %3232 = vmatmul.mubr.bf16.gmra.mrb[0].mxu0 %v2432
      %v3233 = vpop.f32.mrb[0].mxu0
      %v3234 = vadd.f32 %v2492, %v3233
      %v3235 = vpop.f32.mrb[0].mxu0
      %v3236 = vadd.f32 %v2496, %v3235
      %v3237 = vpop.f32.mrb[0].mxu0
      %v3238 = vadd.f32 %v2492, %v3237
      %v3239 = vpop.f32.mrb[0].mxu0
      %v3240 = vadd.f32 %v2496, %v3239
      %3241 = vmatprep.mubr.bf16.mxu0 0
      %3242 = vmatmul.mubr.bf16.gmra.mrb[0].mxu0 %v2433
      %v3243 = vpop.f32.mrb[0].mxu0
      %v3244 = vadd.f32 %v2492, %v3243
      %v3245 = vpop.f32.mrb[0].mxu0
      %v3246 = vadd.f32 %v2496, %v3245
      %v3247 = vpop.f32.mrb[0].mxu0
      %v3248 = vadd.f32 %v2492, %v3247
      %v3249 = vpop.f32.mrb[0].mxu0
      %v3250 = vadd.f32 %v2496, %v3249
      %3251 = vmatprep.mubr.bf16.mxu0 0
      %3252 = vmatmul.mubr.bf16.gmra.mrb[0].mxu0 %v2434
      %v3253 = vpop.f32.mrb[0].mxu0
      %v3254 = vadd.f32 %v2492, %v3253
      %v3255 = vpop.f32.mrb[0].mxu0
      %v3256 = vadd.f32 %v2496, %v3255
      %v3257 = vpop.f32.mrb[0].mxu0
      %v3258 = vadd.f32 %v2492, %v3257
      %v3259 = vpop.f32.mrb[0].mxu0
      %v3260 = vadd.f32 %v2496, %v3259
      %3261 = vmatprep.mubr.bf16.mxu0 0
      %3262 = vmatmul.mubr.bf16.gmra.mrb[0].mxu0 %v2435
      %v3263 = vpop.f32.mrb[0].mxu0
      %v3264 = vadd.f32 %v2492, %v3263
      %v3265 = vpop.f32.mrb[0].mxu0
      %v3266 = vadd.f32 %v2496, %v3265
      %v3267 = vpop.f32.mrb[0].mxu0
      %v3268 = vadd.f32 %v2492, %v3267
      %v3269 = vpop.f32.mrb[0].mxu0
      %v3270 = vadd.f32 %v2496, %v3269
      %3271 = vmatprep.mubr.bf16.mxu0 0
      %3272 = vmatmul.mubr.bf16.gmra.mrb[0].mxu0 %v2436
      %v3273 = vpop.f32.mrb[0].mxu0
      %v3274 = vadd.f32 %v2492, %v3273
      %v3275 = vpop.f32.mrb[0].mxu0
      %v3276 = vadd.f32 %v2496, %v3275
      %v3277 = vpop.f32.mrb[0].mxu0
      %v3278 = vadd.f32 %v2492, %v3277
      %v3279 = vpop.f32.mrb[0].mxu0
      %v3280 = vadd.f32 %v2496, %v3279
      %3281 = vmatprep.mubr.bf16.mxu0 0
      %3282 = vmatmul.mubr.bf16.gmra.mrb[0].mxu0 %v2437
      %v3283 = vpop.f32.mrb[0].mxu0
      %v3284 = vadd.f32 %v2492, %v3283
      %v3285 = vpop.f32.mrb[0].mxu0
      %v3286 = vadd.f32 %v2496, %v3285
      %v3287 = vpop.f32.mrb[0].mxu0
      %v3288 = vadd.f32 %v2492, %v3287
      %v3289 = vpop.f32.mrb[0].mxu0
      %v3290 = vadd.f32 %v2496, %v3289
      %3291 = vmatprep.mubr.bf16.mxu0 0
      %3292 = vmatmul.mubr.bf16.gmra.mrb[0].mxu0 %v2438
      %v3293 = vpop.f32.mrb[0].mxu0
      %v3294 = vadd.f32 %v2492, %v3293
      %v3295 = vpop.f32.mrb[0].mxu0
      %v3296 = vadd.f32 %v2496, %v3295
      %v3297 = vpop.f32.mrb[0].mxu0
      %v3298 = vadd.f32 %v2492, %v3297
      %v3299 = vpop.f32.mrb[0].mxu0
      %v3300 = vadd.f32 %v2496, %v3299
      %3301 = vdwg.mxu0
      %v3302 = vtanh.pop %v2546
      %v3303 = vtanh.pop %v2548
      %v3304 = vtanh.pop %v2659
      %v3305 = vtanh.pop %v2661
      %v3306 = vtanh.pop %v2772
      %v3307 = vtanh.pop %v2774
      %v3308 = vtanh.pop %v2885
      %v3309 = vtanh.pop %v2887
      %v3310 = vtanh.pop %v2998
      %v3311 = vtanh.pop %v3000
      %v3312 = vtanh.pop %v3111
      %v3313 = vtanh.pop %v3113
      %v3314 = vtanh.pop %v3224
      %v3315 = vtanh.pop %v3226
      %v3316 = vtanh.pop %v2550
      %v3317 = vtanh.pop %v2552
      %v3318 = vtanh.pop %v2663
      %v3319 = vtanh.pop %v2665
      %v3320 = vtanh.pop %v2776
      %v3321 = vtanh.pop %v2778
      %v3322 = vtanh.pop %v2889
      %v3323 = vtanh.pop %v2891
      %v3324 = vtanh.pop %v3002
      %v3325 = vtanh.pop %v3004
      %v3326 = vtanh.pop %v3115
      %v3327 = vtanh.pop %v3117
      %v3328 = vtanh.pop %v3228
      %v3329 = vtanh.pop %v3230
      %v3330 = vtanh.pop %v2556
      %v3331 = vtanh.pop %v2558
      %v3332 = vtanh.pop %v2669
      %v3333 = vtanh.pop %v2671
      %v3334 = vtanh.pop %v2782
      %v3335 = vtanh.pop %v2784
      %v3336 = vtanh.pop %v2895
      %v3337 = vtanh.pop %v2897
      %v3338 = vtanh.pop %v3008
      %v3339 = vtanh.pop %v3010
      %v3340 = vtanh.pop %v3121
      %v3341 = vtanh.pop %v3123
      %v3342 = vtanh.pop %v3234
      %v3343 = vtanh.pop %v3236
      %v3344 = vtanh.pop %v2560
      %v3345 = vtanh.pop %v2562
      %v3346 = vtanh.pop %v2673
      %v3347 = vtanh.pop %v2675
      %v3348 = vtanh.pop %v2786
      %v3349 = vtanh.pop %v2788
      %v3350 = vtanh.pop %v2899
      %v3351 = vtanh.pop %v2901
      %v3352 = vtanh.pop %v3012
      %v3353 = vtanh.pop %v3014
      %v3354 = vtanh.pop %v3125
      %v3355 = vtanh.pop %v3127
      %v3356 = vtanh.pop %v3238
      %v3357 = vtanh.pop %v3240
      %v3358 = vtanh.pop %v2566
      %v3359 = vtanh.pop %v2568
      %v3360 = vtanh.pop %v2679
      %v3361 = vtanh.pop %v2681
      %v3362 = vtanh.pop %v2792
      %v3363 = vtanh.pop %v2794
      %v3364 = vtanh.pop %v2905
      %v3365 = vtanh.pop %v2907
      %v3366 = vtanh.pop %v3018
      %v3367 = vtanh.pop %v3020
      %v3368 = vtanh.pop %v3131
      %v3369 = vtanh.pop %v3133
      %v3370 = vtanh.pop %v3244
      %v3371 = vtanh.pop %v3246
      %v3372 = vtanh.pop %v2570
      %v3373 = vtanh.pop %v2572
      %v3374 = vtanh.pop %v2683
      %v3375 = vtanh.pop %v2685
      %v3376 = vtanh.pop %v2796
      %v3377 = vtanh.pop %v2798
      %v3378 = vtanh.pop %v2909
      %v3379 = vtanh.pop %v2911
      %v3380 = vtanh.pop %v3022
      %v3381 = vtanh.pop %v3024
      %v3382 = vtanh.pop %v3135
      %v3383 = vtanh.pop %v3137
      %v3384 = vtanh.pop %v3248
      %v3385 = vtanh.pop %v3250
      %v3386 = vtanh.pop %v2576
      %v3387 = vtanh.pop %v2578
      %v3388 = vtanh.pop %v2689
      %v3389 = vtanh.pop %v2691
      %v3390 = vtanh.pop %v2802
      %v3391 = vtanh.pop %v2804
      %v3392 = vtanh.pop %v2915
      %v3393 = vtanh.pop %v2917
      %v3394 = vtanh.pop %v3028
      %v3395 = vtanh.pop %v3030
      %v3396 = vtanh.pop %v3141
      %v3397 = vtanh.pop %v3143
      %v3398 = vtanh.pop %v3254
      %v3399 = vtanh.pop %v3256
      %v3400 = vtanh.pop %v2580
      %v3401 = vtanh.pop %v2582
      %v3402 = vtanh.pop %v2693
      %v3403 = vtanh.pop %v2695
      %v3404 = vtanh.pop %v2806
      %v3405 = vtanh.pop %v2808
      %v3406 = vtanh.pop %v2919
      %v3407 = vtanh.pop %v2921
      %v3408 = vtanh.pop %v3032
      %v3409 = vtanh.pop %v3034
      %v3410 = vtanh.pop %v3145
      %v3411 = vtanh.pop %v3147
      %v3412 = vtanh.pop %v3258
      %v3413 = vtanh.pop %v3260
      %v3414 = vtanh.pop %v2586
      %v3415 = vtanh.pop %v2588
      %v3416 = vtanh.pop %v2699
      %v3417 = vtanh.pop %v2701
      %v3418 = vtanh.pop %v2812
      %v3419 = vtanh.pop %v2814
      %v3420 = vtanh.pop %v2925
      %v3421 = vtanh.pop %v2927
      %v3422 = vtanh.pop %v3038
      %v3423 = vtanh.pop %v3040
      %v3424 = vtanh.pop %v3151
      %v3425 = vtanh.pop %v3153
      %v3426 = vtanh.pop %v3264
      %v3427 = vtanh.pop %v3266
      %v3428 = vtanh.pop %v2590
      %v3429 = vtanh.pop %v2592
      %v3430 = vtanh.pop %v2703
      %v3431 = vtanh.pop %v2705
      %v3432 = vtanh.pop %v2816
      %v3433 = vtanh.pop %v2818
      %v3434 = vtanh.pop %v2929
      %v3435 = vtanh.pop %v2931
      %v3436 = vtanh.pop %v3042
      %v3437 = vtanh.pop %v3044
      %v3438 = vtanh.pop %v3155
      %v3439 = vtanh.pop %v3157
      %v3440 = vtanh.pop %v3268
      %v3441 = vtanh.pop %v3270
      %v3442 = vtanh.pop %v2596
      %v3443 = vtanh.pop %v2598
      %v3444 = vtanh.pop %v2709
      %v3445 = vtanh.pop %v2711
      %v3446 = vtanh.pop %v2822
      %v3447 = vtanh.pop %v2824
      %v3448 = vtanh.pop %v2935
      %v3449 = vtanh.pop %v2937
      %v3450 = vtanh.pop %v3048
      %v3451 = vtanh.pop %v3050
      %v3452 = vtanh.pop %v3161
      %v3453 = vtanh.pop %v3163
      %v3454 = vtanh.pop %v3274
      %v3455 = vtanh.pop %v3276
      %v3456 = vtanh.pop %v2600
      %v3457 = vtanh.pop %v2602
      %v3458 = vtanh.pop %v2713
      %v3459 = vtanh.pop %v2715
      %v3460 = vtanh.pop %v2826
      %v3461 = vtanh.pop %v2828
      %v3462 = vtanh.pop %v2939
      %v3463 = vtanh.pop %v2941
      %v3464 = vtanh.pop %v3052
      %v3465 = vtanh.pop %v3054
      %v3466 = vtanh.pop %v3165
      %v3467 = vtanh.pop %v3167
      %v3468 = vtanh.pop %v3278
      %v3469 = vtanh.pop %v3280
      %v3470 = vtanh.pop %v2606
      %v3471 = vtanh.pop %v2608
      %v3472 = vtanh.pop %v2719
      %v3473 = vtanh.pop %v2721
      %v3474 = vtanh.pop %v2832
      %v3475 = vtanh.pop %v2834
      %v3476 = vtanh.pop %v2945
      %v3477 = vtanh.pop %v2947
      %v3478 = vtanh.pop %v3058
      %v3479 = vtanh.pop %v3060
      %v3480 = vtanh.pop %v3171
      %v3481 = vtanh.pop %v3173
      %v3482 = vtanh.pop %v3284
      %v3483 = vtanh.pop %v3286
      %v3484 = vtanh.pop %v2610
      %v3485 = vtanh.pop %v2612
      %v3486 = vtanh.pop %v2723
      %v3487 = vtanh.pop %v2725
      %v3488 = vtanh.pop %v2836
      %v3489 = vtanh.pop %v2838
      %v3490 = vtanh.pop %v2949
      %v3491 = vtanh.pop %v2951
      %v3492 = vtanh.pop %v3062
      %v3493 = vtanh.pop %v3064
      %v3494 = vtanh.pop %v3175
      %v3495 = vtanh.pop %v3177
      %v3496 = vtanh.pop %v3288
      %v3497 = vtanh.pop %v3290
      %v3498 = vtanh.pop %v2616
      %v3499 = vtanh.pop %v2618
      %v3500 = vtanh.pop %v2729
      %v3501 = vtanh.pop %v2731
      %v3502 = vtanh.pop %v2842
      %v3503 = vtanh.pop %v2844
      %v3504 = vtanh.pop %v2955
      %v3505 = vtanh.pop %v2957
      %v3506 = vtanh.pop %v3068
      %v3507 = vtanh.pop %v3070
      %v3508 = vtanh.pop %v3181
      %v3509 = vtanh.pop %v3183
      %v3510 = vtanh.pop %v3294
      %v3511 = vtanh.pop %v3296
      %v3512 = vtanh.pop %v2620
      %v3513 = vtanh.pop %v2622
      %v3514 = vtanh.pop %v2733
      %v3515 = vtanh.pop %v2735
      %v3516 = vtanh.pop %v2846
      %v3517 = vtanh.pop %v2848
      %v3518 = vtanh.pop %v2959
      %v3519 = vtanh.pop %v2961
      %v3520 = vtanh.pop %v3072
      %v3521 = vtanh.pop %v3074
      %v3522 = vtanh.pop %v3185
      %v3523 = vtanh.pop %v3187
      %v3524 = vtanh.pop %v3298
      %v3525 = vtanh.pop %v3300
      %3526 = vst.msk [vmem:[%s373] sm:$0xff] %vm2293, %v2263
      %3527 = vst.msk [vmem:[%s373 + $0x8] sm:$0xff] %vm2293, %v2264
      %3528 = vst.msk [vmem:[%s373 + $0x10] sm:$0xff] %vm2293, %v2265
      %3529 = vst.msk [vmem:[%s373 + $0x18] sm:$0xff] %vm2293, %v2266
      %3530 = vst.msk [vmem:[%s373 + $0x20] sm:$0xff] %vm2293, %v2267
      %3531 = vst.msk [vmem:[%s373 + $0x28] sm:$0xff] %vm2293, %v2268
      %3532 = vst.msk [vmem:[%s373 + $0x30] sm:$0xff] %vm2293, %v2269
      %3533 = vst.msk [vmem:[%s373 + $0x38] sm:$0xff] %vm2293, %v2270
      %3534 = vst.msk [vmem:[%s373 + $0x40] sm:$0xff] %vm2293, %v2271
      %3535 = vst.msk [vmem:[%s373 + $0x48] sm:$0xff] %vm2293, %v2272
      %3536 = vst.msk [vmem:[%s373 + $0x50] sm:$0xff] %vm2293, %v2273
      %3537 = vst.msk [vmem:[%s373 + $0x58] sm:$0xff] %vm2293, %v2274
      %3538 = vst.msk [vmem:[%s373 + $0x60] sm:$0xff] %vm2293, %v2275
      %3539 = vst.msk [vmem:[%s373 + $0x68] sm:$0xff] %vm2293, %v2276
      %3540 = vst.msk [vmem:[%s373 + $0x70] sm:$0xff] %vm2293, %v2277
      %3541 = vst.msk [vmem:[%s373 + $0x78] sm:$0xff] %vm2293, %v2278
      %3542 = vst [vmem:[%s380] sm:$0xff] %v3302
      %3543 = vst [vmem:[%s380 + $0x8] sm:$0xff] %v3303
      %3544 = vst [vmem:[%s380 + $0x10] sm:$0xff] %v3304
      %3545 = vst [vmem:[%s380 + $0x18] sm:$0xff] %v3305
      %3546 = vst [vmem:[%s380 + $0x20] sm:$0xff] %v3306
      %3547 = vst [vmem:[%s380 + $0x28] sm:$0xff] %v3307
      %3548 = vst [vmem:[%s380 + $0x30] sm:$0xff] %v3308
      %3549 = vst [vmem:[%s380 + $0x38] sm:$0xff] %v3309
      %3550 = vst [vmem:[%s380 + $0x40] sm:$0xff] %v3310
      %3551 = vst [vmem:[%s380 + $0x48] sm:$0xff] %v3311
      %3552 = vst [vmem:[%s380 + $0x50] sm:$0xff] %v3312
      %3553 = vst [vmem:[%s380 + $0x58] sm:$0xff] %v3313
      %3554 = vst [vmem:[%s380 + $0x60] sm:$0xff] %v3314
      %3555 = vst.msk [vmem:[%s380 + $0x68] sm:$0xff] %vm1432, %v3315
      %3556 = vst [vmem:[%s380 + $0x70] sm:$0xff] %v3316
      %3557 = vst [vmem:[%s380 + $0x78] sm:$0xff] %v3317
      %3558 = vst [vmem:[%s380 + $0x80] sm:$0xff] %v3318
      %3559 = vst [vmem:[%s380 + $0x88] sm:$0xff] %v3319
      %3560 = vst [vmem:[%s380 + $0x90] sm:$0xff] %v3320
      %3561 = vst [vmem:[%s380 + $0x98] sm:$0xff] %v3321
      %3562 = vst [vmem:[%s380 + $0xa0] sm:$0xff] %v3322
      %3563 = vst [vmem:[%s380 + $0xa8] sm:$0xff] %v3323
      %3564 = vst [vmem:[%s380 + $0xb0] sm:$0xff] %v3324
      %3565 = vst [vmem:[%s380 + $0xb8] sm:$0xff] %v3325
      %3566 = vst [vmem:[%s380 + $0xc0] sm:$0xff] %v3326
      %3567 = vst [vmem:[%s380 + $0xc8] sm:$0xff] %v3327
      %3568 = vst [vmem:[%s380 + $0xd0] sm:$0xff] %v3328
      %3569 = vst.msk [vmem:[%s380 + $0xd8] sm:$0xff] %vm1432, %v3329
      %3570 = vst [vmem:[%s380 + $0xe0] sm:$0xff] %v3330
      %3571 = vst [vmem:[%s380 + $0xe8] sm:$0xff] %v3331
      %3572 = vst [vmem:[%s380 + $0xf0] sm:$0xff] %v3332
      %3573 = vst [vmem:[%s380 + $0xf8] sm:$0xff] %v3333
      %3574 = vst [vmem:[%s380 + $0x100] sm:$0xff] %v3334
      %3575 = vst [vmem:[%s380 + $0x108] sm:$0xff] %v3335
      %3576 = vst [vmem:[%s380 + $0x110] sm:$0xff] %v3336
      %3577 = vst [vmem:[%s380 + $0x118] sm:$0xff] %v3337
      %3578 = vst [vmem:[%s380 + $0x120] sm:$0xff] %v3338
      %3579 = vst [vmem:[%s380 + $0x128] sm:$0xff] %v3339
      %3580 = vst [vmem:[%s380 + $0x130] sm:$0xff] %v3340
      %3581 = vst [vmem:[%s380 + $0x138] sm:$0xff] %v3341
      %3582 = vst [vmem:[%s380 + $0x140] sm:$0xff] %v3342
      %3583 = vst.msk [vmem:[%s380 + $0x148] sm:$0xff] %vm1432, %v3343
      %3584 = vst [vmem:[%s380 + $0x150] sm:$0xff] %v3344
      %3585 = vst [vmem:[%s380 + $0x158] sm:$0xff] %v3345
      %3586 = vst [vmem:[%s380 + $0x160] sm:$0xff] %v3346
      %3587 = vst [vmem:[%s380 + $0x168] sm:$0xff] %v3347
      %3588 = vst [vmem:[%s380 + $0x170] sm:$0xff] %v3348
      %3589 = vst [vmem:[%s380 + $0x178] sm:$0xff] %v3349
      %3590 = vst [vmem:[%s380 + $0x180] sm:$0xff] %v3350
      %3591 = vst [vmem:[%s380 + $0x188] sm:$0xff] %v3351
      %3592 = vst [vmem:[%s380 + $0x190] sm:$0xff] %v3352
      %3593 = vst [vmem:[%s380 + $0x198] sm:$0xff] %v3353
      %3594 = vst [vmem:[%s380 + $0x1a0] sm:$0xff] %v3354
      %3595 = vst [vmem:[%s380 + $0x1a8] sm:$0xff] %v3355
      %3596 = vst [vmem:[%s380 + $0x1b0] sm:$0xff] %v3356
      %3597 = vst.msk [vmem:[%s380 + $0x1b8] sm:$0xff] %vm1432, %v3357
      %3598 = vst [vmem:[%s380 + $0x1c0] sm:$0xff] %v3358
      %3599 = vst [vmem:[%s380 + $0x1c8] sm:$0xff] %v3359
      %3600 = vst [vmem:[%s380 + $0x1d0] sm:$0xff] %v3360
      %3601 = vst [vmem:[%s380 + $0x1d8] sm:$0xff] %v3361
      %3602 = vst [vmem:[%s380 + $0x1e0] sm:$0xff] %v3362
      %3603 = vst [vmem:[%s380 + $0x1e8] sm:$0xff] %v3363
      %3604 = vst [vmem:[%s380 + $0x1f0] sm:$0xff] %v3364
      %3605 = vst [vmem:[%s380 + $0x1f8] sm:$0xff] %v3365
      %3606 = vst [vmem:[%s380 + $0x200] sm:$0xff] %v3366
      %3607 = vst [vmem:[%s380 + $0x208] sm:$0xff] %v3367
      %3608 = vst [vmem:[%s380 + $0x210] sm:$0xff] %v3368
      %3609 = vst [vmem:[%s380 + $0x218] sm:$0xff] %v3369
      %3610 = vst [vmem:[%s380 + $0x220] sm:$0xff] %v3370
      %3611 = vst.msk [vmem:[%s380 + $0x228] sm:$0xff] %vm1432, %v3371
      %3612 = vst [vmem:[%s380 + $0x230] sm:$0xff] %v3372
      %3613 = vst [vmem:[%s380 + $0x238] sm:$0xff] %v3373
      %3614 = vst [vmem:[%s380 + $0x240] sm:$0xff] %v3374
      %3615 = vst [vmem:[%s380 + $0x248] sm:$0xff] %v3375
      %3616 = vst [vmem:[%s380 + $0x250] sm:$0xff] %v3376
      %3617 = vst [vmem:[%s380 + $0x258] sm:$0xff] %v3377
      %3618 = vst [vmem:[%s380 + $0x260] sm:$0xff] %v3378
      %3619 = vst [vmem:[%s380 + $0x268] sm:$0xff] %v3379
      %3620 = vst [vmem:[%s380 + $0x270] sm:$0xff] %v3380
      %3621 = vst [vmem:[%s380 + $0x278] sm:$0xff] %v3381
      %3622 = vst [vmem:[%s380 + $0x280] sm:$0xff] %v3382
      %3623 = vst [vmem:[%s380 + $0x288] sm:$0xff] %v3383
      %3624 = vst [vmem:[%s380 + $0x290] sm:$0xff] %v3384
      %3625 = vst.msk [vmem:[%s380 + $0x298] sm:$0xff] %vm1432, %v3385
      %3626 = vst [vmem:[%s380 + $0x2a0] sm:$0xff] %v3386
      %3627 = vst [vmem:[%s380 + $0x2a8] sm:$0xff] %v3387
      %3628 = vst [vmem:[%s380 + $0x2b0] sm:$0xff] %v3388
      %3629 = vst [vmem:[%s380 + $0x2b8] sm:$0xff] %v3389
      %3630 = vst [vmem:[%s380 + $0x2c0] sm:$0xff] %v3390
      %3631 = vst [vmem:[%s380 + $0x2c8] sm:$0xff] %v3391
      %3632 = vst [vmem:[%s380 + $0x2d0] sm:$0xff] %v3392
      %3633 = vst [vmem:[%s380 + $0x2d8] sm:$0xff] %v3393
      %3634 = vst [vmem:[%s380 + $0x2e0] sm:$0xff] %v3394
      %3635 = vst [vmem:[%s380 + $0x2e8] sm:$0xff] %v3395
      %3636 = vst [vmem:[%s380 + $0x2f0] sm:$0xff] %v3396
      %3637 = vst [vmem:[%s380 + $0x2f8] sm:$0xff] %v3397
      %3638 = vst [vmem:[%s380 + $0x300] sm:$0xff] %v3398
      %3639 = vst.msk [vmem:[%s380 + $0x308] sm:$0xff] %vm1432, %v3399
      %3640 = vst [vmem:[%s380 + $0x310] sm:$0xff] %v3400
      %3641 = vst [vmem:[%s380 + $0x318] sm:$0xff] %v3401
      %3642 = vst [vmem:[%s380 + $0x320] sm:$0xff] %v3402
      %3643 = vst [vmem:[%s380 + $0x328] sm:$0xff] %v3403
      %3644 = vst [vmem:[%s380 + $0x330] sm:$0xff] %v3404
      %3645 = vst [vmem:[%s380 + $0x338] sm:$0xff] %v3405
      %3646 = vst [vmem:[%s380 + $0x340] sm:$0xff] %v3406
      %3647 = vst [vmem:[%s380 + $0x348] sm:$0xff] %v3407
      %3648 = vst [vmem:[%s380 + $0x350] sm:$0xff] %v3408
      %3649 = vst [vmem:[%s380 + $0x358] sm:$0xff] %v3409
      %3650 = vst [vmem:[%s380 + $0x360] sm:$0xff] %v3410
      %3651 = vst [vmem:[%s380 + $0x368] sm:$0xff] %v3411
      %3652 = vst [vmem:[%s380 + $0x370] sm:$0xff] %v3412
      %3653 = vst.msk [vmem:[%s380 + $0x378] sm:$0xff] %vm1432, %v3413
      %3654 = vst [vmem:[%s380 + $0x380] sm:$0xff] %v3414
      %3655 = vst [vmem:[%s380 + $0x388] sm:$0xff] %v3415
      %3656 = vst [vmem:[%s380 + $0x390] sm:$0xff] %v3416
      %3657 = vst [vmem:[%s380 + $0x398] sm:$0xff] %v3417
      %3658 = vst [vmem:[%s380 + $0x3a0] sm:$0xff] %v3418
      %3659 = vst [vmem:[%s380 + $0x3a8] sm:$0xff] %v3419
      %3660 = vst [vmem:[%s380 + $0x3b0] sm:$0xff] %v3420
      %3661 = vst [vmem:[%s380 + $0x3b8] sm:$0xff] %v3421
      %3662 = vst [vmem:[%s380 + $0x3c0] sm:$0xff] %v3422
      %3663 = vst [vmem:[%s380 + $0x3c8] sm:$0xff] %v3423
      %3664 = vst [vmem:[%s380 + $0x3d0] sm:$0xff] %v3424
      %3665 = vst [vmem:[%s380 + $0x3d8] sm:$0xff] %v3425
      %3666 = vst [vmem:[%s380 + $0x3e0] sm:$0xff] %v3426
      %3667 = vst.msk [vmem:[%s380 + $0x3e8] sm:$0xff] %vm1432, %v3427
      %3668 = vst [vmem:[%s380 + $0x3f0] sm:$0xff] %v3428
      %3669 = vst [vmem:[%s380 + $0x3f8] sm:$0xff] %v3429
      %3670 = vst [vmem:[%s380 + $0x400] sm:$0xff] %v3430
      %3671 = vst [vmem:[%s380 + $0x408] sm:$0xff] %v3431
      %3672 = vst [vmem:[%s380 + $0x410] sm:$0xff] %v3432
      %3673 = vst [vmem:[%s380 + $0x418] sm:$0xff] %v3433
      %3674 = vst [vmem:[%s380 + $0x420] sm:$0xff] %v3434
      %3675 = vst [vmem:[%s380 + $0x428] sm:$0xff] %v3435
      %3676 = vst [vmem:[%s380 + $0x430] sm:$0xff] %v3436
      %3677 = vst [vmem:[%s380 + $0x438] sm:$0xff] %v3437
      %3678 = vst [vmem:[%s380 + $0x440] sm:$0xff] %v3438
      %3679 = vst [vmem:[%s380 + $0x448] sm:$0xff] %v3439
      %3680 = vst [vmem:[%s380 + $0x450] sm:$0xff] %v3440
      %3681 = vst.msk [vmem:[%s380 + $0x458] sm:$0xff] %vm1432, %v3441
      %3682 = vst [vmem:[%s380 + $0x460] sm:$0xff] %v3442
      %3683 = vst [vmem:[%s380 + $0x468] sm:$0xff] %v3443
      %3684 = vst [vmem:[%s380 + $0x470] sm:$0xff] %v3444
      %3685 = vst [vmem:[%s380 + $0x478] sm:$0xff] %v3445
      %3686 = vst [vmem:[%s380 + $0x480] sm:$0xff] %v3446
      %3687 = vst [vmem:[%s380 + $0x488] sm:$0xff] %v3447
      %3688 = vst [vmem:[%s380 + $0x490] sm:$0xff] %v3448
      %3689 = vst [vmem:[%s380 + $0x498] sm:$0xff] %v3449
      %3690 = vst [vmem:[%s380 + $0x4a0] sm:$0xff] %v3450
      %3691 = vst [vmem:[%s380 + $0x4a8] sm:$0xff] %v3451
      %3692 = vst [vmem:[%s380 + $0x4b0] sm:$0xff] %v3452
      %3693 = vst [vmem:[%s380 + $0x4b8] sm:$0xff] %v3453
      %3694 = vst [vmem:[%s380 + $0x4c0] sm:$0xff] %v3454
      %3695 = vst.msk [vmem:[%s380 + $0x4c8] sm:$0xff] %vm1432, %v3455
      %3696 = vst [vmem:[%s380 + $0x4d0] sm:$0xff] %v3456
      %3697 = vst [vmem:[%s380 + $0x4d8] sm:$0xff] %v3457
      %3698 = vst [vmem:[%s380 + $0x4e0] sm:$0xff] %v3458
      %3699 = vst [vmem:[%s380 + $0x4e8] sm:$0xff] %v3459
      %3700 = vst [vmem:[%s380 + $0x4f0] sm:$0xff] %v3460
      %3701 = vst [vmem:[%s380 + $0x4f8] sm:$0xff] %v3461
      %3702 = vst [vmem:[%s380 + $0x500] sm:$0xff] %v3462
      %3703 = vst [vmem:[%s380 + $0x508] sm:$0xff] %v3463
      %3704 = vst [vmem:[%s380 + $0x510] sm:$0xff] %v3464
      %3705 = vst [vmem:[%s380 + $0x518] sm:$0xff] %v3465
      %3706 = vst [vmem:[%s380 + $0x520] sm:$0xff] %v3466
      %3707 = vst [vmem:[%s380 + $0x528] sm:$0xff] %v3467
      %3708 = vst [vmem:[%s380 + $0x530] sm:$0xff] %v3468
      %3709 = vst.msk [vmem:[%s380 + $0x538] sm:$0xff] %vm1432, %v3469
      %3710 = vst [vmem:[%s380 + $0x540] sm:$0xff] %v3470
      %3711 = vst [vmem:[%s380 + $0x548] sm:$0xff] %v3471
      %3712 = vst [vmem:[%s380 + $0x550] sm:$0xff] %v3472
      %3713 = vst [vmem:[%s380 + $0x558] sm:$0xff] %v3473
      %3714 = vst [vmem:[%s380 + $0x560] sm:$0xff] %v3474
      %3715 = vst [vmem:[%s380 + $0x568] sm:$0xff] %v3475
      %3716 = vst [vmem:[%s380 + $0x570] sm:$0xff] %v3476
      %3717 = vst [vmem:[%s380 + $0x578] sm:$0xff] %v3477
      %3718 = vst [vmem:[%s380 + $0x580] sm:$0xff] %v3478
      %3719 = vst [vmem:[%s380 + $0x588] sm:$0xff] %v3479
      %3720 = vst [vmem:[%s380 + $0x590] sm:$0xff] %v3480
      %3721 = vst [vmem:[%s380 + $0x598] sm:$0xff] %v3481
      %3722 = vst [vmem:[%s380 + $0x5a0] sm:$0xff] %v3482
      %3723 = vst.msk [vmem:[%s380 + $0x5a8] sm:$0xff] %vm1432, %v3483
      %3724 = vst [vmem:[%s380 + $0x5b0] sm:$0xff] %v3484
      %3725 = vst [vmem:[%s380 + $0x5b8] sm:$0xff] %v3485
      %3726 = vst [vmem:[%s380 + $0x5c0] sm:$0xff] %v3486
      %3727 = vst [vmem:[%s380 + $0x5c8] sm:$0xff] %v3487
      %3728 = vst [vmem:[%s380 + $0x5d0] sm:$0xff] %v3488
      %3729 = vst [vmem:[%s380 + $0x5d8] sm:$0xff] %v3489
      %3730 = vst [vmem:[%s380 + $0x5e0] sm:$0xff] %v3490
      %3731 = vst [vmem:[%s380 + $0x5e8] sm:$0xff] %v3491
      %3732 = vst [vmem:[%s380 + $0x5f0] sm:$0xff] %v3492
      %3733 = vst [vmem:[%s380 + $0x5f8] sm:$0xff] %v3493
      %3734 = vst [vmem:[%s380 + $0x600] sm:$0xff] %v3494
      %3735 = vst [vmem:[%s380 + $0x608] sm:$0xff] %v3495
      %3736 = vst [vmem:[%s380 + $0x610] sm:$0xff] %v3496
      %3737 = vst.msk [vmem:[%s380 + $0x618] sm:$0xff] %vm1432, %v3497
      %3738 = vst [vmem:[%s380 + $0x620] sm:$0xff] %v3498
      %3739 = vst [vmem:[%s380 + $0x628] sm:$0xff] %v3499
      %3740 = vst [vmem:[%s380 + $0x630] sm:$0xff] %v3500
      %3741 = vst [vmem:[%s380 + $0x638] sm:$0xff] %v3501
      %3742 = vst [vmem:[%s380 + $0x640] sm:$0xff] %v3502
      %3743 = vst [vmem:[%s380 + $0x648] sm:$0xff] %v3503
      %3744 = vst [vmem:[%s380 + $0x650] sm:$0xff] %v3504
      %3745 = vst [vmem:[%s380 + $0x658] sm:$0xff] %v3505
      %3746 = vst [vmem:[%s380 + $0x660] sm:$0xff] %v3506
      %3747 = vst [vmem:[%s380 + $0x668] sm:$0xff] %v3507
      %3748 = vst [vmem:[%s380 + $0x670] sm:$0xff] %v3508
      %3749 = vst [vmem:[%s380 + $0x678] sm:$0xff] %v3509
      %3750 = vst [vmem:[%s380 + $0x680] sm:$0xff] %v3510
      %3751 = vst.msk [vmem:[%s380 + $0x688] sm:$0xff] %vm1432, %v3511
      %3752 = vst [vmem:[%s380 + $0x690] sm:$0xff] %v3512
      %3753 = vst [vmem:[%s380 + $0x698] sm:$0xff] %v3513
      %3754 = vst [vmem:[%s380 + $0x6a0] sm:$0xff] %v3514
      %3755 = vst [vmem:[%s380 + $0x6a8] sm:$0xff] %v3515
      %3756 = vst [vmem:[%s380 + $0x6b0] sm:$0xff] %v3516
      %3757 = vst [vmem:[%s380 + $0x6b8] sm:$0xff] %v3517
      %3758 = vst [vmem:[%s380 + $0x6c0] sm:$0xff] %v3518
      %3759 = vst [vmem:[%s380 + $0x6c8] sm:$0xff] %v3519
      %3760 = vst [vmem:[%s380 + $0x6d0] sm:$0xff] %v3520
      %3761 = vst [vmem:[%s380 + $0x6d8] sm:$0xff] %v3521
      %3762 = vst [vmem:[%s380 + $0x6e0] sm:$0xff] %v3522
      %3763 = vst [vmem:[%s380 + $0x6e8] sm:$0xff] %v3523
      %3764 = vst [vmem:[%s380 + $0x6f0] sm:$0xff] %v3524
      %3765 = vst.msk [vmem:[%s380 + $0x6f8] sm:$0xff] %vm1432, %v3525
      %s3766 = smul.u32 16, %s22
      %p3767 = scmp.lt.s32.totalorder %s3766, 31
      %s3768 = scalar_select %p3767, %s3766, 31
      %s3769 = smul.addr %s3768, 8
      %s3770 = scalar_lea.vmem %s9, %s3769
      %s3771 = smul.u32 16, %s22
      %p3772 = scmp.lt.s32.totalorder %s3771, 31
      %s3773 = scalar_select %p3772, %s3771, 31
      %s3774 = smul.addr %s3773, 14
      %s3775 = smul.addr %s3774, 8
      %s3776 = scalar_lea.vmem %s10, %s3775
      // Predicated region
      $region57: #{tpu_custom_call.1} parent=55 // pred_check
        %p3777 = pneg %p234
      $region58: #{tpu_custom_call.1} parent=55 // pred_check_branch
        %3779 = sbr.rel (%p3777) target = $region60
      $region59: #{tpu_custom_call.1} parent=55 // pred_region
        %s3780 = smul.u32 16, %s22
      $region60: #{tpu_custom_call.1} parent=55 // pred_fallthru
        _
      // Predicated region
      $region61: #{tpu_custom_call.1} parent=55 // pred_check
        %p3781 = pneg %p260
      $region62: #{tpu_custom_call.1} parent=55 // pred_check_branch
        %3783 = sbr.rel (%p3781) target = $region64
      $region63: #{tpu_custom_call.1} parent=55 // pred_region
        %s3784 = smul.u32 16, %s22
      $region64: #{tpu_custom_call.1} parent=55 // pred_fallthru
        _
    $region56: #{tpu_custom_call.1} parent=5 // pred_fallthru
      _
    %p3785 = scmp.le.s32.totalorder 2, %s17
    // Predicated region
    $region65: #{tpu_custom_call.1} parent=5 // pred_check
      %p3786 = pneg %p3785
    $region66: #{tpu_custom_call.1} parent=5 // pred_check_branch
      %3788 = sbr.rel (%p3786) target = $region68
    $region67: #{tpu_custom_call.1} parent=5 // pred_region
      %s3789 = ssub.s32 %s17, 2
      // Predicated region
      $region69: #{tpu_custom_call.1} parent=67 // pred_check
        %p3790 = pneg %p240
      $region70: #{tpu_custom_call.1} parent=67 // pred_check_branch
        %3792 = sbr.rel (%p3790) target = $region72
      $region71: #{tpu_custom_call.1} parent=67 // pred_region
        %s3793 = smul.u32 16, %s23
        %p3794 = scmp.lt.s32.totalorder %s3793, 31
        %s3795 = scalar_select %p3794, %s3793, 31
        %s3796 = smul.addr %s3795, 8
        %s3797 = scalar_lea.vmem %s9, %s3796
      $region72: #{tpu_custom_call.1} parent=67 // pred_fallthru
        _
      // Predicated region
      $region73: #{tpu_custom_call.1} parent=67 // pred_check
        %p3798 = pneg %p266
      $region74: #{tpu_custom_call.1} parent=67 // pred_check_branch
        %3800 = sbr.rel (%p3798) target = $region76
      $region75: #{tpu_custom_call.1} parent=67 // pred_region
        %s3801 = smul.u32 16, %s23
        %p3802 = scmp.lt.s32.totalorder %s3801, 31
        %s3803 = scalar_select %p3802, %s3801, 31
        %s3804 = smul.addr %s3803, 14
        %s3805 = smul.addr %s3804, 8
        %s3806 = scalar_lea.vmem %s10, %s3805
      $region76: #{tpu_custom_call.1} parent=67 // pred_fallthru
        _
    $region68: #{tpu_custom_call.1} parent=5 // pred_fallthru
      _
  $region6: #{tpu_custom_call.1} parent=0 // loop_footer
    %s21 = sadd.s32 1, %s17
  $region7: #{tpu_custom_call.1} parent=0 // loop_footer_branch
    %16 = sbr.rel target = $region3
  $region8: #{tpu_custom_call.1} parent=0 // loop_exit
    _

</llo_original>
